<compile_context>
chip_gen: v7x
topology: tpu7x:2x2x1
jax: 0.10.0
libtpu: 0.0.40
codegen_flags: <defaults>
</compile_context>

<pallas_src>
import jax
import jax.numpy as jnp
from jax.experimental import pallas as pl
from jax.experimental.pallas import tpu as pltpu

IN_DIM = 256
HID_DIM = 1024
NUM_CLASSES = 2
PAD_CLASSES = 128   # lane-dense output width


def _round_up(n, m):
    return ((n + m - 1) // m) * m


def domain_regressor_kernel(x_ref, w1_ref, b1_ref, w2_ref, b2_ref,
                            w3_ref, b3_ref, o_ref):
    x = x_ref[...]                                                        # (TM, 256) bf16

    # fc1 + ReLU (f32 accumulate, bf16 activation)
    h1 = jnp.dot(x, w1_ref[...], preferred_element_type=jnp.float32)     # (TM, 1024) f32
    h1 = jnp.maximum(h1 + b1_ref[...], 0.0).astype(jnp.bfloat16)

    # fc2 + ReLU
    h2 = jnp.dot(h1, w2_ref[...], preferred_element_type=jnp.float32)    # (TM, 1024) f32
    h2 = jnp.maximum(h2 + b2_ref[...], 0.0).astype(jnp.bfloat16)

    # fc3 (padded to 128 lanes; padded columns of w3/b3 are zero)
    logits = jnp.dot(h2, w3_ref[...], preferred_element_type=jnp.float32)  # (TM, 128) f32
    logits = logits + b3_ref[...]

    # LogSoftmax over the 2 real classes only: mask padded lanes out of the
    # reduction, then subtract the lse from all lanes (padded lanes are sliced
    # away in the wrapper).
    col = jax.lax.broadcasted_iota(jnp.int32, logits.shape, 1)
    masked = jnp.where(col < NUM_CLASSES, logits, jnp.float32(-1e30))
    m = jnp.max(masked, axis=-1, keepdims=True)
    lse = m + jnp.log(jnp.sum(jnp.exp(masked - m), axis=-1, keepdims=True))
    o_ref[...] = (logits - lse).astype(o_ref.dtype)


def domain_regressor(x, w1, b1, w2, b2, w3, b3, *, tm=128):
    """x: (B, 256) f32. Weights (in, out) f32, biases (1, out) f32. Returns (B, 2) f32."""
    B = x.shape[0]
    tm = min(tm, _round_up(B, 8))          # small batches -> single small tile
    Bp = _round_up(B, tm)

    # bf16 activation path + weights; biases stay f32 (added after f32 accumulation).
    xb = x.astype(jnp.bfloat16)
    if Bp != B:
        xb = jnp.pad(xb, ((0, Bp - B), (0, 0)))
    w1b = w1.astype(jnp.bfloat16)
    w2b = w2.astype(jnp.bfloat16)
    w3p = jnp.pad(w3, ((0, 0), (0, PAD_CLASSES - NUM_CLASSES))).astype(jnp.bfloat16)
    b3p = jnp.pad(b3, ((0, 0), (0, PAD_CLASSES - NUM_CLASSES)))

    grid = (Bp // tm,)

    flops = 2 * Bp * (IN_DIM * HID_DIM + HID_DIM * HID_DIM + HID_DIM * PAD_CLASSES)
    bytes_accessed = (
        Bp * IN_DIM * 2                      # x (bf16)
        + (IN_DIM * HID_DIM + HID_DIM * HID_DIM + HID_DIM * PAD_CLASSES) * 2  # weights (bf16)
        + (HID_DIM + HID_DIM + PAD_CLASSES) * 4                               # biases (f32)
        + Bp * PAD_CLASSES * 4               # out (f32)
    )
    cost = pl.CostEstimate(flops=flops,
                           transcendentals=Bp * (PAD_CLASSES + 1),
                           bytes_accessed=bytes_accessed)

    out = pl.pallas_call(
        domain_regressor_kernel,
        out_shape=jax.ShapeDtypeStruct((Bp, PAD_CLASSES), jnp.float32),
        grid_spec=pltpu.PrefetchScalarGridSpec(
            num_scalar_prefetch=0,
            grid=grid,
            in_specs=[
                pl.BlockSpec((tm, IN_DIM), lambda i: (i, 0)),            # x tile (pipelined)
                pl.BlockSpec((IN_DIM, HID_DIM), lambda i: (0, 0)),       # w1 (resident)
                pl.BlockSpec((1, HID_DIM), lambda i: (0, 0)),            # b1
                pl.BlockSpec((HID_DIM, HID_DIM), lambda i: (0, 0)),      # w2 (resident)
                pl.BlockSpec((1, HID_DIM), lambda i: (0, 0)),            # b2
                pl.BlockSpec((HID_DIM, PAD_CLASSES), lambda i: (0, 0)),  # w3 padded (resident)
                pl.BlockSpec((1, PAD_CLASSES), lambda i: (0, 0)),        # b3 padded
            ],
            out_specs=pl.BlockSpec((tm, PAD_CLASSES), lambda i: (i, 0)),
        ),
        compiler_params=pltpu.CompilerParams(
            dimension_semantics=("parallel",),   # v7x: shard batch tiles over both TCs
        ),
        cost_estimate=cost,
    )(xb, w1b, b1, w2b, b2, w3p, b3p)

    return out[:B, :NUM_CLASSES]
    # TODO(synk): if this runs every step with fixed weights, fuse with the upstream
    # feature extractor or cross-call-prefetch the weights to avoid the per-call DMA.


def init_params(key):
    """Deterministic init mimicking PyTorch nn.Linear default (U(-1/sqrt(fan_in), ...))."""
    ks = jax.random.split(key, 6)

    def linear(kw, kb, fan_in, fan_out):
        bound = 1.0 / (fan_in ** 0.5)
        # stored as (in, out) == PyTorch weight (out, in) transposed
        w = jax.random.uniform(kw, (fan_in, fan_out), jnp.float32, -bound, bound)
        b = jax.random.uniform(kb, (1, fan_out), jnp.float32, -bound, bound)
        return w, b

    w1, b1 = linear(ks[0], ks[1], IN_DIM, HID_DIM)
    w2, b2 = linear(ks[2], ks[3], HID_DIM, HID_DIM)
    w3, b3 = linear(ks[4], ks[5], HID_DIM, NUM_CLASSES)
    return w1, b1, w2, b2, w3, b3


def reference_bf16(x, w1, b1, w2, b2, w3, b3):
    """Same math/numerics as the kernel (bf16 path, f32 accumulation)."""
    xb = x.astype(jnp.bfloat16)
    h1 = jnp.maximum(
        jnp.dot(xb, w1.astype(jnp.bfloat16), preferred_element_type=jnp.float32) + b1, 0.0
    ).astype(jnp.bfloat16)
    h2 = jnp.maximum(
        jnp.dot(h1, w2.astype(jnp.bfloat16), preferred_element_type=jnp.float32) + b2, 0.0
    ).astype(jnp.bfloat16)
    logits = jnp.dot(h2, w3.astype(jnp.bfloat16), preferred_element_type=jnp.float32) + b3
    return jax.nn.log_softmax(logits, axis=1)


def reference_f32(x, w1, b1, w2, b2, w3, b3):
    """Full-precision semantic reference (original module math)."""
    h1 = jnp.maximum(x @ w1 + b1, 0.0)
    h2 = jnp.maximum(h1 @ w2 + b2, 0.0)
    logits = h2 @ w3 + b3
    return jax.nn.log_softmax(logits, axis=1)


if __name__ == "__main__":
    key = jax.random.PRNGKey(0)
    k_x, k_p = jax.random.split(key)

    B = 8
    x = jax.random.normal(k_x, (B, IN_DIM), dtype=jnp.float32)
    params = init_params(k_p)

    out = domain_regressor(x, *params)
    out = jax.block_until_ready(out)
    assert out.shape == (B, NUM_CLASSES)

    ref_same_numerics = reference_bf16(x, *params)
    ref_full_precision = reference_f32(x, *params)
    assert jnp.allclose(out, ref_same_numerics, atol=2e-3, rtol=2e-3), "mismatch vs bf16 reference"
    assert jnp.allclose(out, ref_full_precision, atol=5e-2, rtol=5e-2), "mismatch vs f32 reference"

    print("KERNEL_OK")
</pallas_src>

<mosaic_0001>
module attributes {stable_mosaic.version = 11 : i64} {
  func.func @domain_regressor_kernel(%arg0: i32, %arg1: memref<8x256xbf16, #tpu.memory_space<vmem>>, %arg2: memref<256x1024xbf16, #tpu.memory_space<vmem>>, %arg3: memref<1x1024xf32, #tpu.memory_space<vmem>>, %arg4: memref<1024x1024xbf16, #tpu.memory_space<vmem>>, %arg5: memref<1x1024xf32, #tpu.memory_space<vmem>>, %arg6: memref<1024x128xbf16, #tpu.memory_space<vmem>>, %arg7: memref<1x128xf32, #tpu.memory_space<vmem>>, %arg8: memref<8x128xf32, #tpu.memory_space<vmem>>) attributes {dimension_semantics = [#tpu.dimension_semantics<parallel>], iteration_bounds = array<i64: 1>, scalar_prefetch = 0 : i64, scratch_operands = 0 : i64, tpu.core_type = #tpu.core_type<tc>, window_params = [{transform_indices = @transform_0, window_bounds = array<i64: 8, 256>}, {pipeline_mode = #tpu.pipeline_mode<synchronous>, transform_indices = @transform_1, window_bounds = array<i64: 256, 1024>}, {pipeline_mode = #tpu.pipeline_mode<synchronous>, transform_indices = @transform_2, window_bounds = array<i64: 1, 1024>}, {pipeline_mode = #tpu.pipeline_mode<synchronous>, transform_indices = @transform_3, window_bounds = array<i64: 1024, 1024>}, {pipeline_mode = #tpu.pipeline_mode<synchronous>, transform_indices = @transform_4, window_bounds = array<i64: 1, 1024>}, {pipeline_mode = #tpu.pipeline_mode<synchronous>, transform_indices = @transform_5, window_bounds = array<i64: 1024, 128>}, {pipeline_mode = #tpu.pipeline_mode<synchronous>, transform_indices = @transform_6, window_bounds = array<i64: 1, 128>}, {transform_indices = @transform_7, window_bounds = array<i64: 8, 128>}]} {
    %c0 = arith.constant 0 : index
    %c0_0 = arith.constant 0 : index
    %0 = vector.load %arg1[%c0, %c0_0] : memref<8x256xbf16, #tpu.memory_space<vmem>>, vector<8x256xbf16>
    %c0_1 = arith.constant 0 : index
    %c0_2 = arith.constant 0 : index
    %1 = vector.load %arg2[%c0_1, %c0_2] : memref<256x1024xbf16, #tpu.memory_space<vmem>>, vector<256x1024xbf16>
    %cst = arith.constant dense<0.000000e+00> : vector<8x1024xf32>
    %2 = tpu.matmul %0, %1, %cst {dimension_numbers = #tpu.dot_dimension_numbers<[1], [0], [0], [1], [0, 0, 1, 1], [], []>} : vector<8x256xbf16>, vector<256x1024xbf16>, vector<8x1024xf32> -> vector<8x1024xf32>
    %c0_3 = arith.constant 0 : index
    %c0_4 = arith.constant 0 : index
    %3 = vector.load %arg3[%c0_3, %c0_4] : memref<1x1024xf32, #tpu.memory_space<vmem>>, vector<1x1024xf32>
    %4 = vector.broadcast %3 : vector<1x1024xf32> to vector<8x1024xf32>
    %5 = arith.addf %2, %4 : vector<8x1024xf32>
    %cst_5 = arith.constant 0.000000e+00 : f32
    %6 = vector.broadcast %cst_5 : f32 to vector<8x1024xf32>
    %7 = arith.maximumf %5, %6 : vector<8x1024xf32>
    %8 = arith.truncf %7 : vector<8x1024xf32> to vector<8x1024xbf16>
    %c0_6 = arith.constant 0 : index
    %c0_7 = arith.constant 0 : index
    %9 = vector.load %arg4[%c0_6, %c0_7] : memref<1024x1024xbf16, #tpu.memory_space<vmem>>, vector<1024x1024xbf16>
    %cst_8 = arith.constant dense<0.000000e+00> : vector<8x1024xf32>
    %10 = tpu.matmul %8, %9, %cst_8 {dimension_numbers = #tpu.dot_dimension_numbers<[1], [0], [0], [1], [0, 0, 1, 1], [], []>} : vector<8x1024xbf16>, vector<1024x1024xbf16>, vector<8x1024xf32> -> vector<8x1024xf32>
    %c0_9 = arith.constant 0 : index
    %c0_10 = arith.constant 0 : index
    %11 = vector.load %arg5[%c0_9, %c0_10] : memref<1x1024xf32, #tpu.memory_space<vmem>>, vector<1x1024xf32>
    %12 = vector.broadcast %11 : vector<1x1024xf32> to vector<8x1024xf32>
    %13 = arith.addf %10, %12 : vector<8x1024xf32>
    %cst_11 = arith.constant 0.000000e+00 : f32
    %14 = vector.broadcast %cst_11 : f32 to vector<8x1024xf32>
    %15 = arith.maximumf %13, %14 : vector<8x1024xf32>
    %16 = arith.truncf %15 : vector<8x1024xf32> to vector<8x1024xbf16>
    %c0_12 = arith.constant 0 : index
    %c0_13 = arith.constant 0 : index
    %17 = vector.load %arg6[%c0_12, %c0_13] : memref<1024x128xbf16, #tpu.memory_space<vmem>>, vector<1024x128xbf16>
    %cst_14 = arith.constant dense<0.000000e+00> : vector<8x128xf32>
    %18 = tpu.matmul %16, %17, %cst_14 {dimension_numbers = #tpu.dot_dimension_numbers<[1], [0], [0], [1], [0, 0, 1, 1], [], []>} : vector<8x1024xbf16>, vector<1024x128xbf16>, vector<8x128xf32> -> vector<8x128xf32>
    %c0_15 = arith.constant 0 : index
    %c0_16 = arith.constant 0 : index
    %19 = vector.load %arg7[%c0_15, %c0_16] : memref<1x128xf32, #tpu.memory_space<vmem>>, vector<1x128xf32>
    %20 = vector.broadcast %19 : vector<1x128xf32> to vector<8x128xf32>
    %21 = arith.addf %18, %20 : vector<8x128xf32>
    %22 = tpu.iota {dimensions = array<i32: 1>} : vector<8x128xi32>
    %c2_i32 = arith.constant 2 : i32
    %23 = vector.broadcast %c2_i32 : i32 to vector<8x128xi32>
    %24 = arith.cmpi slt, %22, %23 : vector<8x128xi32>
    %cst_17 = arith.constant -1.000000e+30 : f32
    %25 = vector.broadcast %cst_17 : f32 to vector<8x128xf32>
    %26 = arith.select %24, %21, %25 : vector<8x128xi1>, vector<8x128xf32>
    %cst_18 = arith.constant dense<0xFF800000> : vector<8xf32>
    %27 = vector.multi_reduction <maximumf>, %26, %cst_18 [1] : vector<8x128xf32> to vector<8xf32>
    %28 = vector.shape_cast %27 : vector<8xf32> to vector<8x1xf32>
    %29 = vector.broadcast %28 : vector<8x1xf32> to vector<8x128xf32>
    %30 = arith.subf %26, %29 : vector<8x128xf32>
    %31 = math.exp %30 : vector<8x128xf32>
    %cst_19 = arith.constant dense<0.000000e+00> : vector<8xf32>
    %32 = vector.multi_reduction <add>, %31, %cst_19 [1] : vector<8x128xf32> to vector<8xf32>
    %33 = vector.shape_cast %32 : vector<8xf32> to vector<8x1xf32>
    %34 = math.log %33 : vector<8x1xf32>
    %35 = arith.addf %28, %34 : vector<8x1xf32>
    %36 = vector.broadcast %35 : vector<8x1xf32> to vector<8x128xf32>
    %37 = arith.subf %21, %36 : vector<8x128xf32>
    %c0_20 = arith.constant 0 : index
    %c0_21 = arith.constant 0 : index
    %38 = vector.load %arg8[%c0_20, %c0_21] : memref<8x128xf32, #tpu.memory_space<vmem>>, vector<8x128xf32>
    tpu.vector_store %arg8[%c0_20, %c0_21], %37 {strides = array<i32>} : memref<8x128xf32, #tpu.memory_space<vmem>>, vector<8x128xf32>,
    return
  }
  func.func @transform_0(%arg0: i32) -> (i32, i32) {
    %c0_i32 = arith.constant 0 : i32
    %c0_i32_0 = arith.constant 0 : i32
    return %arg0, %c0_i32 : i32, i32
  }
  func.func @transform_1(%arg0: i32) -> (i32, i32) {
    %c0_i32 = arith.constant 0 : i32
    %c0_i32_0 = arith.constant 0 : i32
    %c0_i32_1 = arith.constant 0 : i32
    return %c0_i32, %c0_i32_0 : i32, i32
  }
  func.func @transform_2(%arg0: i32) -> (i32, i32) {
    %c0_i32 = arith.constant 0 : i32
    %c0_i32_0 = arith.constant 0 : i32
    %c0_i32_1 = arith.constant 0 : i32
    return %c0_i32, %c0_i32_0 : i32, i32
  }
  func.func @transform_3(%arg0: i32) -> (i32, i32) {
    %c0_i32 = arith.constant 0 : i32
    %c0_i32_0 = arith.constant 0 : i32
    %c0_i32_1 = arith.constant 0 : i32
    return %c0_i32, %c0_i32_0 : i32, i32
  }
  func.func @transform_4(%arg0: i32) -> (i32, i32) {
    %c0_i32 = arith.constant 0 : i32
    %c0_i32_0 = arith.constant 0 : i32
    %c0_i32_1 = arith.constant 0 : i32
    return %c0_i32, %c0_i32_0 : i32, i32
  }
  func.func @transform_5(%arg0: i32) -> (i32, i32) {
    %c0_i32 = arith.constant 0 : i32
    %c0_i32_0 = arith.constant 0 : i32
    %c0_i32_1 = arith.constant 0 : i32
    return %c0_i32, %c0_i32_0 : i32, i32
  }
  func.func @transform_6(%arg0: i32) -> (i32, i32) {
    %c0_i32 = arith.constant 0 : i32
    %c0_i32_0 = arith.constant 0 : i32
    %c0_i32_1 = arith.constant 0 : i32
    return %c0_i32, %c0_i32_0 : i32, i32
  }
  func.func @transform_7(%arg0: i32) -> (i32, i32) {
    %c0_i32 = arith.constant 0 : i32
    %c0_i32_0 = arith.constant 0 : i32
    return %arg0, %c0_i32 : i32, i32
  }
}

</mosaic_0001>

<llo_original>
// kernel: tpu_custom_call.1
$region0: #{tpu_custom_call.1}
  #allocation0 [shape = 'u32[]', space=smem, size = 0x4, offset = 0x4, fixed_abs, tag = 'smem constant byte address 0x4 - core index']
  #allocation1 [shape = 'u32[144,128]{1,0:T(1,128)}', space=vmem, size = 0x12000, scoped, tag = 'internal scratch']
  %s0 = inlined_call_operand.hbm [shape: bf16[8,256], index: 0, kind: input, shape index: {}]
  %s1 = inlined_call_operand.hbm [shape: bf16[256,1024], index: 1, kind: input, shape index: {}]
  %s2 = inlined_call_operand.hbm [shape: f32[1,1024], index: 2, kind: input, shape index: {}]
  %s3 = inlined_call_operand.hbm [shape: bf16[1024,1024], index: 3, kind: input, shape index: {}]
  %s4 = inlined_call_operand.hbm [shape: f32[1,1024], index: 4, kind: input, shape index: {}]
  %s5 = inlined_call_operand.hbm [shape: bf16[1024,128], index: 5, kind: input, shape index: {}]
  %s6 = inlined_call_operand.hbm [shape: f32[1,128], index: 6, kind: input, shape index: {}]
  %s7 = inlined_call_operand.hbm [shape: f32[8,128], index: 7, kind: output, shape index: {}]
  %s8 = sld [smem:[#allocation0]]
  $region66: #{tpu_custom_call.1} parent=0
    _
  %s10 = ssub.s32 1, %s8
  %s11 = scalar_select 0, %s10, %s8
  $region1: #{tpu_custom_call.1} parent=0
    #allocation2 [shape = 'u8[4096]{0}', space=vmem, size = 0x1000, scoped, tag = 'input window, operand 0, single buffered']
    #allocation3 [shape = 's32[1]{0}', space=sflag, size = 0x4, scoped, tag = 'scoped memory for tpu_custom_call.1']
    #allocation4 [shape = 's32[1]{0}', space=sflag, size = 0x4, scoped, tag = 'scoped memory for tpu_custom_call.1']
    #allocation5 [shape = 'u8[524288]{0}', space=vmem, size = 0x80000, scoped, tag = 'input window, operand 1, single buffered']
    #allocation6 [shape = 's32[1]{0}', space=sflag, size = 0x4, scoped, tag = 'scoped memory for tpu_custom_call.1']
    #allocation7 [shape = 'u8[4096]{0}', space=vmem, size = 0x1000, scoped, tag = 'input window, operand 2, single buffered']
    #allocation8 [shape = 'u8[2097152]{0}', space=vmem, size = 0x200000, scoped, tag = 'input window, operand 3, single buffered']
    #allocation9 [shape = 's32[1]{0}', space=sflag, size = 0x4, scoped, tag = 'scoped memory for tpu_custom_call.1']
    #allocation10 [shape = 'u8[4096]{0}', space=vmem, size = 0x1000, scoped, tag = 'input window, operand 4, single buffered']
    #allocation11 [shape = 'u8[262144]{0}', space=vmem, size = 0x40000, scoped, tag = 'input window, operand 5, single buffered']
    #allocation12 [shape = 's32[1]{0}', space=sflag, size = 0x4, scoped, tag = 'scoped memory for tpu_custom_call.1']
    #allocation13 [shape = 'u8[512]{0}', space=vmem, size = 0x400, scoped, tag = 'input window, operand 6, single buffered']
    #allocation14 [shape = 'u8[4096]{0}', space=vmem, size = 0x1000, scoped, tag = 'output window, operand 0, single buffered']
    %12 = vsyncpa [#allocation3], 0
    %13 = vsyncpa [#allocation6], 0
    %14 = vsyncpa [#allocation9], 0
    %15 = vsyncpa [#allocation12], 0
    %16 = vsyncpa [#allocation4], 0
    // Predicated region
    $region2: #{tpu_custom_call.1} parent=1 // pred_check
      _
    $region3: #{tpu_custom_call.1} parent=1 // pred_check_branch
      %18 = sbr.rel (0) target = $region5
    $region4: #{tpu_custom_call.1} parent=1 // pred_region
      %s20 = ssub.s32 128, 128
      %21 = vsyncadd [#allocation3], %s20
      %s23 = sshll.u32 [#allocation2], 4
      %s24 = int_to_ptr.vmem [resolvable:$true] %s23
      %26 = dma.hbm_to_vmem [thread:$0]  %s0, 128, %s24, [#allocation3]
    $region5: #{tpu_custom_call.1} parent=1 // pred_fallthru
      _
    // Predicated region
    $region6: #{tpu_custom_call.1} parent=1 // pred_check
      _
    $region7: #{tpu_custom_call.1} parent=1 // pred_check_branch
      %28 = sbr.rel (0) target = $region9
    $region8: #{tpu_custom_call.1} parent=1 // pred_region
      %s30 = ssub.s32 16384, 16384
      %31 = vsyncadd [#allocation6], %s30
      %s32 = sshll.u32 [#allocation5], 4
      %s33 = int_to_ptr.vmem [resolvable:$true] %s32
      %38 = dma.hbm_to_vmem [thread:$0]  %s1, 16384, %s33, [#allocation6], 512, 512, 32
    $region9: #{tpu_custom_call.1} parent=1 // pred_fallthru
      _
    // Predicated region
    $region10: #{tpu_custom_call.1} parent=1 // pred_check
      _
    $region11: #{tpu_custom_call.1} parent=1 // pred_check_branch
      %40 = sbr.rel (0) target = $region13
    $region12: #{tpu_custom_call.1} parent=1 // pred_region
      %s42 = ssub.s32 128, 128
      %43 = vsyncadd [#allocation6], %s42
      %s45 = sshll.u32 [#allocation7], 4
      %s46 = int_to_ptr.vmem [resolvable:$true] %s45
      %48 = dma.hbm_to_vmem [thread:$0]  %s2, 128, %s46, [#allocation6]
    $region13: #{tpu_custom_call.1} parent=1 // pred_fallthru
      _
    // Predicated region
    $region14: #{tpu_custom_call.1} parent=1 // pred_check
      _
    $region15: #{tpu_custom_call.1} parent=1 // pred_check_branch
      %50 = sbr.rel (0) target = $region17
    $region16: #{tpu_custom_call.1} parent=1 // pred_region
      %s52 = ssub.s32 65536, 65536
      %53 = vsyncadd [#allocation9], %s52
      %s54 = sshll.u32 [#allocation8], 4
      %s55 = int_to_ptr.vmem [resolvable:$true] %s54
      %60 = dma.hbm_to_vmem [thread:$0]  %s3, 65536, %s55, [#allocation9], 512, 512, 32
    $region17: #{tpu_custom_call.1} parent=1 // pred_fallthru
      _
    // Predicated region
    $region18: #{tpu_custom_call.1} parent=1 // pred_check
      _
    $region19: #{tpu_custom_call.1} parent=1 // pred_check_branch
      %62 = sbr.rel (0) target = $region21
    $region20: #{tpu_custom_call.1} parent=1 // pred_region
      %s64 = ssub.s32 128, 128
      %65 = vsyncadd [#allocation9], %s64
      %s67 = sshll.u32 [#allocation10], 4
      %s68 = int_to_ptr.vmem [resolvable:$true] %s67
      %70 = dma.hbm_to_vmem [thread:$0]  %s4, 128, %s68, [#allocation9]
    $region21: #{tpu_custom_call.1} parent=1 // pred_fallthru
      _
    // Predicated region
    $region22: #{tpu_custom_call.1} parent=1 // pred_check
      _
    $region23: #{tpu_custom_call.1} parent=1 // pred_check_branch
      %72 = sbr.rel (0) target = $region25
    $region24: #{tpu_custom_call.1} parent=1 // pred_region
      %s74 = ssub.s32 8192, 8192
      %75 = vsyncadd [#allocation12], %s74
      %s76 = sshll.u32 [#allocation11], 4
      %s77 = int_to_ptr.vmem [resolvable:$true] %s76
      %82 = dma.hbm_to_vmem [thread:$0]  %s5, 8192, %s77, [#allocation12], 64, 64, 4
    $region25: #{tpu_custom_call.1} parent=1 // pred_fallthru
      _
    // Predicated region
    $region26: #{tpu_custom_call.1} parent=1 // pred_check
      _
    $region27: #{tpu_custom_call.1} parent=1 // pred_check_branch
      %84 = sbr.rel (0) target = $region29
    $region28: #{tpu_custom_call.1} parent=1 // pred_region
      %s86 = ssub.s32 16, 16
      %87 = vsyncadd [#allocation12], %s86
      %s89 = sshll.u32 [#allocation13], 4
      %s90 = int_to_ptr.vmem [resolvable:$true] %s89
      %92 = dma.hbm_to_vmem [thread:$0]  %s6, 16, %s90, [#allocation12]
    $region29: #{tpu_custom_call.1} parent=1 // pred_fallthru
      _
    // Predicated region
    $region30: #{tpu_custom_call.1} parent=1 // pred_check
      _
    $region31: #{tpu_custom_call.1} parent=1 // pred_check_branch
      %94 = sbr.rel (0) target = $region33
    $region32: #{tpu_custom_call.1} parent=1 // pred_region
      %95 = dma.done [#allocation3], 128
    $region33: #{tpu_custom_call.1} parent=1 // pred_fallthru
      _
    // Predicated region
    $region34: #{tpu_custom_call.1} parent=1 // pred_check
      _
    $region35: #{tpu_custom_call.1} parent=1 // pred_check_branch
      %97 = sbr.rel (0) target = $region37
    $region36: #{tpu_custom_call.1} parent=1 // pred_region
      %98 = dma.done [#allocation6], 16384
    $region37: #{tpu_custom_call.1} parent=1 // pred_fallthru
      _
    // Predicated region
    $region38: #{tpu_custom_call.1} parent=1 // pred_check
      _
    $region39: #{tpu_custom_call.1} parent=1 // pred_check_branch
      %100 = sbr.rel (0) target = $region41
    $region40: #{tpu_custom_call.1} parent=1 // pred_region
      %101 = dma.done [#allocation6], 128
    $region41: #{tpu_custom_call.1} parent=1 // pred_fallthru
      _
    // Predicated region
    $region42: #{tpu_custom_call.1} parent=1 // pred_check
      _
    $region43: #{tpu_custom_call.1} parent=1 // pred_check_branch
      %103 = sbr.rel (0) target = $region45
    $region44: #{tpu_custom_call.1} parent=1 // pred_region
      %104 = dma.done [#allocation9], 65536
    $region45: #{tpu_custom_call.1} parent=1 // pred_fallthru
      _
    // Predicated region
    $region46: #{tpu_custom_call.1} parent=1 // pred_check
      _
    $region47: #{tpu_custom_call.1} parent=1 // pred_check_branch
      %106 = sbr.rel (0) target = $region49
    $region48: #{tpu_custom_call.1} parent=1 // pred_region
      %107 = dma.done [#allocation9], 128
    $region49: #{tpu_custom_call.1} parent=1 // pred_fallthru
      _
    // Predicated region
    $region50: #{tpu_custom_call.1} parent=1 // pred_check
      _
    $region51: #{tpu_custom_call.1} parent=1 // pred_check_branch
      %109 = sbr.rel (0) target = $region53
    $region52: #{tpu_custom_call.1} parent=1 // pred_region
      %110 = dma.done [#allocation12], 8192
    $region53: #{tpu_custom_call.1} parent=1 // pred_fallthru
      _
    // Predicated region
    $region54: #{tpu_custom_call.1} parent=1 // pred_check
      _
    $region55: #{tpu_custom_call.1} parent=1 // pred_check_branch
      %112 = sbr.rel (0) target = $region57
    $region56: #{tpu_custom_call.1} parent=1 // pred_region
      %113 = dma.done [#allocation12], 16
    $region57: #{tpu_custom_call.1} parent=1 // pred_fallthru
      _
    %v115 = vld [vmem:[#allocation2] sm:$0xff]
    %v116 = vld [vmem:[#allocation5] sm:$0xff]
    %v117 = vld [vmem:[#allocation5 + $0x8] sm:$0xff]
    %v118 = vld [vmem:[#allocation5 + $0x10] sm:$0xff]
    %v119 = vld [vmem:[#allocation5 + $0x18] sm:$0xff]
    %v120 = vld [vmem:[#allocation5 + $0x20] sm:$0xff]
    %v121 = vld [vmem:[#allocation5 + $0x28] sm:$0xff]
    %v122 = vld [vmem:[#allocation5 + $0x30] sm:$0xff]
    %v123 = vld [vmem:[#allocation5 + $0x38] sm:$0xff]
    %v124 = vld [vmem:[#allocation5 + $0x40] sm:$0xff]
    %v125 = vld [vmem:[#allocation5 + $0x48] sm:$0xff]
    %v126 = vld [vmem:[#allocation5 + $0x50] sm:$0xff]
    %v127 = vld [vmem:[#allocation5 + $0x58] sm:$0xff]
    %v128 = vld [vmem:[#allocation5 + $0x60] sm:$0xff]
    %v129 = vld [vmem:[#allocation5 + $0x68] sm:$0xff]
    %v130 = vld [vmem:[#allocation5 + $0x70] sm:$0xff]
    %v131 = vld [vmem:[#allocation5 + $0x78] sm:$0xff]
    %v132 = vld [vmem:[#allocation5 + $0x80] sm:$0xff]
    %v133 = vld [vmem:[#allocation5 + $0x88] sm:$0xff]
    %v134 = vld [vmem:[#allocation5 + $0x90] sm:$0xff]
    %v135 = vld [vmem:[#allocation5 + $0x98] sm:$0xff]
    %v136 = vld [vmem:[#allocation5 + $0xa0] sm:$0xff]
    %v137 = vld [vmem:[#allocation5 + $0xa8] sm:$0xff]
    %v138 = vld [vmem:[#allocation5 + $0xb0] sm:$0xff]
    %v139 = vld [vmem:[#allocation5 + $0xb8] sm:$0xff]
    %v140 = vld [vmem:[#allocation5 + $0xc0] sm:$0xff]
    %v141 = vld [vmem:[#allocation5 + $0xc8] sm:$0xff]
    %v142 = vld [vmem:[#allocation5 + $0xd0] sm:$0xff]
    %v143 = vld [vmem:[#allocation5 + $0xd8] sm:$0xff]
    %v144 = vld [vmem:[#allocation5 + $0xe0] sm:$0xff]
    %v145 = vld [vmem:[#allocation5 + $0xe8] sm:$0xff]
    %v146 = vld [vmem:[#allocation5 + $0xf0] sm:$0xff]
    %v147 = vld [vmem:[#allocation5 + $0xf8] sm:$0xff]
    %v148 = vld [vmem:[#allocation5 + $0x100] sm:$0xff]
    %v149 = vld [vmem:[#allocation5 + $0x108] sm:$0xff]
    %v150 = vld [vmem:[#allocation5 + $0x110] sm:$0xff]
    %v151 = vld [vmem:[#allocation5 + $0x118] sm:$0xff]
    %v152 = vld [vmem:[#allocation5 + $0x120] sm:$0xff]
    %v153 = vld [vmem:[#allocation5 + $0x128] sm:$0xff]
    %v154 = vld [vmem:[#allocation5 + $0x130] sm:$0xff]
    %v155 = vld [vmem:[#allocation5 + $0x138] sm:$0xff]
    %v156 = vld [vmem:[#allocation5 + $0x140] sm:$0xff]
    %v157 = vld [vmem:[#allocation5 + $0x148] sm:$0xff]
    %v158 = vld [vmem:[#allocation5 + $0x150] sm:$0xff]
    %v159 = vld [vmem:[#allocation5 + $0x158] sm:$0xff]
    %v160 = vld [vmem:[#allocation5 + $0x160] sm:$0xff]
    %v161 = vld [vmem:[#allocation5 + $0x168] sm:$0xff]
    %v162 = vld [vmem:[#allocation5 + $0x170] sm:$0xff]
    %v163 = vld [vmem:[#allocation5 + $0x178] sm:$0xff]
    %v164 = vld [vmem:[#allocation5 + $0x180] sm:$0xff]
    %v165 = vld [vmem:[#allocation5 + $0x188] sm:$0xff]
    %v166 = vld [vmem:[#allocation5 + $0x190] sm:$0xff]
    %v167 = vld [vmem:[#allocation5 + $0x198] sm:$0xff]
    %v168 = vld [vmem:[#allocation5 + $0x1a0] sm:$0xff]
    %v169 = vld [vmem:[#allocation5 + $0x1a8] sm:$0xff]
    %v170 = vld [vmem:[#allocation5 + $0x1b0] sm:$0xff]
    %v171 = vld [vmem:[#allocation5 + $0x1b8] sm:$0xff]
    %v172 = vld [vmem:[#allocation5 + $0x1c0] sm:$0xff]
    %v173 = vld [vmem:[#allocation5 + $0x1c8] sm:$0xff]
    %v174 = vld [vmem:[#allocation5 + $0x1d0] sm:$0xff]
    %v175 = vld [vmem:[#allocation5 + $0x1d8] sm:$0xff]
    %v176 = vld [vmem:[#allocation5 + $0x1e0] sm:$0xff]
    %v177 = vld [vmem:[#allocation5 + $0x1e8] sm:$0xff]
    %v178 = vld [vmem:[#allocation5 + $0x1f0] sm:$0xff]
    %v179 = vld [vmem:[#allocation5 + $0x1f8] sm:$0xff]
    %v180 = vld [vmem:[#allocation5 + $0x200] sm:$0xff]
    %v181 = vld [vmem:[#allocation5 + $0x208] sm:$0xff]
    %v182 = vld [vmem:[#allocation5 + $0x210] sm:$0xff]
    %v183 = vld [vmem:[#allocation5 + $0x218] sm:$0xff]
    %v184 = vld [vmem:[#allocation5 + $0x220] sm:$0xff]
    %v185 = vld [vmem:[#allocation5 + $0x228] sm:$0xff]
    %v186 = vld [vmem:[#allocation5 + $0x230] sm:$0xff]
    %v187 = vld [vmem:[#allocation5 + $0x238] sm:$0xff]
    %v188 = vld [vmem:[#allocation5 + $0x240] sm:$0xff]
    %v189 = vld [vmem:[#allocation5 + $0x248] sm:$0xff]
    %v190 = vld [vmem:[#allocation5 + $0x250] sm:$0xff]
    %v191 = vld [vmem:[#allocation5 + $0x258] sm:$0xff]
    %v192 = vld [vmem:[#allocation5 + $0x260] sm:$0xff]
    %v193 = vld [vmem:[#allocation5 + $0x268] sm:$0xff]
    %v194 = vld [vmem:[#allocation5 + $0x270] sm:$0xff]
    %v195 = vld [vmem:[#allocation5 + $0x278] sm:$0xff]
    %v196 = vld [vmem:[#allocation5 + $0x280] sm:$0xff]
    %v197 = vld [vmem:[#allocation5 + $0x288] sm:$0xff]
    %v198 = vld [vmem:[#allocation5 + $0x290] sm:$0xff]
    %v199 = vld [vmem:[#allocation5 + $0x298] sm:$0xff]
    %v200 = vld [vmem:[#allocation5 + $0x2a0] sm:$0xff]
    %v201 = vld [vmem:[#allocation5 + $0x2a8] sm:$0xff]
    %v202 = vld [vmem:[#allocation5 + $0x2b0] sm:$0xff]
    %v203 = vld [vmem:[#allocation5 + $0x2b8] sm:$0xff]
    %v204 = vld [vmem:[#allocation5 + $0x2c0] sm:$0xff]
    %v205 = vld [vmem:[#allocation5 + $0x2c8] sm:$0xff]
    %v206 = vld [vmem:[#allocation5 + $0x2d0] sm:$0xff]
    %v207 = vld [vmem:[#allocation5 + $0x2d8] sm:$0xff]
    %v208 = vld [vmem:[#allocation5 + $0x2e0] sm:$0xff]
    %v209 = vld [vmem:[#allocation5 + $0x2e8] sm:$0xff]
    %v210 = vld [vmem:[#allocation5 + $0x2f0] sm:$0xff]
    %v211 = vld [vmem:[#allocation5 + $0x2f8] sm:$0xff]
    %v212 = vld [vmem:[#allocation5 + $0x300] sm:$0xff]
    %v213 = vld [vmem:[#allocation5 + $0x308] sm:$0xff]
    %v214 = vld [vmem:[#allocation5 + $0x310] sm:$0xff]
    %v215 = vld [vmem:[#allocation5 + $0x318] sm:$0xff]
    %v216 = vld [vmem:[#allocation5 + $0x320] sm:$0xff]
    %v217 = vld [vmem:[#allocation5 + $0x328] sm:$0xff]
    %v218 = vld [vmem:[#allocation5 + $0x330] sm:$0xff]
    %v219 = vld [vmem:[#allocation5 + $0x338] sm:$0xff]
    %v220 = vld [vmem:[#allocation5 + $0x340] sm:$0xff]
    %v221 = vld [vmem:[#allocation5 + $0x348] sm:$0xff]
    %v222 = vld [vmem:[#allocation5 + $0x350] sm:$0xff]
    %v223 = vld [vmem:[#allocation5 + $0x358] sm:$0xff]
    %v224 = vld [vmem:[#allocation5 + $0x360] sm:$0xff]
    %v225 = vld [vmem:[#allocation5 + $0x368] sm:$0xff]
    %v226 = vld [vmem:[#allocation5 + $0x370] sm:$0xff]
    %v227 = vld [vmem:[#allocation5 + $0x378] sm:$0xff]
    %v228 = vld [vmem:[#allocation5 + $0x380] sm:$0xff]
    %v229 = vld [vmem:[#allocation5 + $0x388] sm:$0xff]
    %v230 = vld [vmem:[#allocation5 + $0x390] sm:$0xff]
    %v231 = vld [vmem:[#allocation5 + $0x398] sm:$0xff]
    %v232 = vld [vmem:[#allocation5 + $0x3a0] sm:$0xff]
    %v233 = vld [vmem:[#allocation5 + $0x3a8] sm:$0xff]
    %v234 = vld [vmem:[#allocation5 + $0x3b0] sm:$0xff]
    %v235 = vld [vmem:[#allocation5 + $0x3b8] sm:$0xff]
    %v236 = vld [vmem:[#allocation5 + $0x3c0] sm:$0xff]
    %v237 = vld [vmem:[#allocation5 + $0x3c8] sm:$0xff]
    %v238 = vld [vmem:[#allocation5 + $0x3d0] sm:$0xff]
    %v239 = vld [vmem:[#allocation5 + $0x3d8] sm:$0xff]
    %v240 = vld [vmem:[#allocation5 + $0x3e0] sm:$0xff]
    %v241 = vld [vmem:[#allocation5 + $0x3e8] sm:$0xff]
    %v242 = vld [vmem:[#allocation5 + $0x3f0] sm:$0xff]
    %v243 = vld [vmem:[#allocation5 + $0x3f8] sm:$0xff]
    %v244 = vld [vmem:[#allocation7] sm:$0xff]
    %v246 = vlaneseq
    %v247 = vshrl.u32 %v246, 7
    %v248 = vsub.s32 0, %v247
    %v249 = vrot.slane %v244, %v248
    %v250 = vlaneseq
    %v251 = vshrl.u32 %v250, 7
    %v252 = vsub.s32 1, %v251
    %v253 = vrot.slane %v244, %v252
    %v254 = vlaneseq
    %v255 = vshrl.u32 %v254, 7
    %v256 = vsub.s32 2, %v255
    %v257 = vrot.slane %v244, %v256
    %v258 = vlaneseq
    %v259 = vshrl.u32 %v258, 7
    %v260 = vsub.s32 3, %v259
    %v261 = vrot.slane %v244, %v260
    %v262 = vlaneseq
    %v263 = vshrl.u32 %v262, 7
    %v264 = vsub.s32 4, %v263
    %v265 = vrot.slane %v244, %v264
    %v266 = vlaneseq
    %v267 = vshrl.u32 %v266, 7
    %v268 = vsub.s32 5, %v267
    %v269 = vrot.slane %v244, %v268
    %v270 = vlaneseq
    %v271 = vshrl.u32 %v270, 7
    %v272 = vsub.s32 6, %v271
    %v273 = vrot.slane %v244, %v272
    %v274 = vlaneseq
    %v275 = vshrl.u32 %v274, 7
    %v276 = vsub.s32 7, %v275
    %v277 = vrot.slane %v244, %v276
    %v287 = vunpack.c.l.b16 %v115
    %v288 = vunpack.c.h.b16 %v115
    %v289 = vpack.c.b16 %v287, %v287
    %v290 = vpack.c.b16 %v288, %v288
    %v421 = vunpack.c.l.b16 %v116
    %v422 = vunpack.c.h.b16 %v116
    %v423 = vunpack.c.l.b16 %v117
    %v424 = vunpack.c.h.b16 %v117
    %v425 = vunpack.c.l.b16 %v118
    %v426 = vunpack.c.h.b16 %v118
    %v427 = vunpack.c.l.b16 %v119
    %v428 = vunpack.c.h.b16 %v119
    %v429 = vunpack.c.l.b16 %v120
    %v430 = vunpack.c.h.b16 %v120
    %v431 = vunpack.c.l.b16 %v121
    %v432 = vunpack.c.h.b16 %v121
    %v433 = vunpack.c.l.b16 %v122
    %v434 = vunpack.c.h.b16 %v122
    %v435 = vunpack.c.l.b16 %v123
    %v436 = vunpack.c.h.b16 %v123
    %v437 = vunpack.c.l.b16 %v124
    %v438 = vunpack.c.h.b16 %v124
    %v439 = vunpack.c.l.b16 %v125
    %v440 = vunpack.c.h.b16 %v125
    %v441 = vunpack.c.l.b16 %v126
    %v442 = vunpack.c.h.b16 %v126
    %v443 = vunpack.c.l.b16 %v127
    %v444 = vunpack.c.h.b16 %v127
    %v445 = vunpack.c.l.b16 %v128
    %v446 = vunpack.c.h.b16 %v128
    %v447 = vunpack.c.l.b16 %v129
    %v448 = vunpack.c.h.b16 %v129
    %v449 = vunpack.c.l.b16 %v130
    %v450 = vunpack.c.h.b16 %v130
    %v451 = vunpack.c.l.b16 %v131
    %v452 = vunpack.c.h.b16 %v131
    %v453 = vunpack.c.l.b16 %v132
    %v454 = vunpack.c.h.b16 %v132
    %v455 = vunpack.c.l.b16 %v133
    %v456 = vunpack.c.h.b16 %v133
    %v457 = vunpack.c.l.b16 %v134
    %v458 = vunpack.c.h.b16 %v134
    %v459 = vunpack.c.l.b16 %v135
    %v460 = vunpack.c.h.b16 %v135
    %v461 = vunpack.c.l.b16 %v136
    %v462 = vunpack.c.h.b16 %v136
    %v463 = vunpack.c.l.b16 %v137
    %v464 = vunpack.c.h.b16 %v137
    %v465 = vunpack.c.l.b16 %v138
    %v466 = vunpack.c.h.b16 %v138
    %v467 = vunpack.c.l.b16 %v139
    %v468 = vunpack.c.h.b16 %v139
    %v469 = vunpack.c.l.b16 %v140
    %v470 = vunpack.c.h.b16 %v140
    %v471 = vunpack.c.l.b16 %v141
    %v472 = vunpack.c.h.b16 %v141
    %v473 = vunpack.c.l.b16 %v142
    %v474 = vunpack.c.h.b16 %v142
    %v475 = vunpack.c.l.b16 %v143
    %v476 = vunpack.c.h.b16 %v143
    %v477 = vunpack.c.l.b16 %v144
    %v478 = vunpack.c.h.b16 %v144
    %v479 = vunpack.c.l.b16 %v145
    %v480 = vunpack.c.h.b16 %v145
    %v481 = vunpack.c.l.b16 %v146
    %v482 = vunpack.c.h.b16 %v146
    %v483 = vunpack.c.l.b16 %v147
    %v484 = vunpack.c.h.b16 %v147
    %v485 = vunpack.c.l.b16 %v148
    %v486 = vunpack.c.h.b16 %v148
    %v487 = vunpack.c.l.b16 %v149
    %v488 = vunpack.c.h.b16 %v149
    %v489 = vunpack.c.l.b16 %v150
    %v490 = vunpack.c.h.b16 %v150
    %v491 = vunpack.c.l.b16 %v151
    %v492 = vunpack.c.h.b16 %v151
    %v493 = vunpack.c.l.b16 %v152
    %v494 = vunpack.c.h.b16 %v152
    %v495 = vunpack.c.l.b16 %v153
    %v496 = vunpack.c.h.b16 %v153
    %v497 = vunpack.c.l.b16 %v154
    %v498 = vunpack.c.h.b16 %v154
    %v499 = vunpack.c.l.b16 %v155
    %v500 = vunpack.c.h.b16 %v155
    %v501 = vunpack.c.l.b16 %v156
    %v502 = vunpack.c.h.b16 %v156
    %v503 = vunpack.c.l.b16 %v157
    %v504 = vunpack.c.h.b16 %v157
    %v505 = vunpack.c.l.b16 %v158
    %v506 = vunpack.c.h.b16 %v158
    %v507 = vunpack.c.l.b16 %v159
    %v508 = vunpack.c.h.b16 %v159
    %v509 = vunpack.c.l.b16 %v160
    %v510 = vunpack.c.h.b16 %v160
    %v511 = vunpack.c.l.b16 %v161
    %v512 = vunpack.c.h.b16 %v161
    %v513 = vunpack.c.l.b16 %v162
    %v514 = vunpack.c.h.b16 %v162
    %v515 = vunpack.c.l.b16 %v163
    %v516 = vunpack.c.h.b16 %v163
    %v517 = vunpack.c.l.b16 %v164
    %v518 = vunpack.c.h.b16 %v164
    %v519 = vunpack.c.l.b16 %v165
    %v520 = vunpack.c.h.b16 %v165
    %v521 = vunpack.c.l.b16 %v166
    %v522 = vunpack.c.h.b16 %v166
    %v523 = vunpack.c.l.b16 %v167
    %v524 = vunpack.c.h.b16 %v167
    %v525 = vunpack.c.l.b16 %v168
    %v526 = vunpack.c.h.b16 %v168
    %v527 = vunpack.c.l.b16 %v169
    %v528 = vunpack.c.h.b16 %v169
    %v529 = vunpack.c.l.b16 %v170
    %v530 = vunpack.c.h.b16 %v170
    %v531 = vunpack.c.l.b16 %v171
    %v532 = vunpack.c.h.b16 %v171
    %v533 = vunpack.c.l.b16 %v172
    %v534 = vunpack.c.h.b16 %v172
    %v535 = vunpack.c.l.b16 %v173
    %v536 = vunpack.c.h.b16 %v173
    %v537 = vunpack.c.l.b16 %v174
    %v538 = vunpack.c.h.b16 %v174
    %v539 = vunpack.c.l.b16 %v175
    %v540 = vunpack.c.h.b16 %v175
    %v541 = vunpack.c.l.b16 %v176
    %v542 = vunpack.c.h.b16 %v176
    %v543 = vunpack.c.l.b16 %v177
    %v544 = vunpack.c.h.b16 %v177
    %v545 = vunpack.c.l.b16 %v178
    %v546 = vunpack.c.h.b16 %v178
    %v547 = vunpack.c.l.b16 %v179
    %v548 = vunpack.c.h.b16 %v179
    %v549 = vunpack.c.l.b16 %v180
    %v550 = vunpack.c.h.b16 %v180
    %v551 = vunpack.c.l.b16 %v181
    %v552 = vunpack.c.h.b16 %v181
    %v553 = vunpack.c.l.b16 %v182
    %v554 = vunpack.c.h.b16 %v182
    %v555 = vunpack.c.l.b16 %v183
    %v556 = vunpack.c.h.b16 %v183
    %v557 = vunpack.c.l.b16 %v184
    %v558 = vunpack.c.h.b16 %v184
    %v559 = vunpack.c.l.b16 %v185
    %v560 = vunpack.c.h.b16 %v185
    %v561 = vunpack.c.l.b16 %v186
    %v562 = vunpack.c.h.b16 %v186
    %v563 = vunpack.c.l.b16 %v187
    %v564 = vunpack.c.h.b16 %v187
    %v565 = vunpack.c.l.b16 %v188
    %v566 = vunpack.c.h.b16 %v188
    %v567 = vunpack.c.l.b16 %v189
    %v568 = vunpack.c.h.b16 %v189
    %v569 = vunpack.c.l.b16 %v190
    %v570 = vunpack.c.h.b16 %v190
    %v571 = vunpack.c.l.b16 %v191
    %v572 = vunpack.c.h.b16 %v191
    %v573 = vunpack.c.l.b16 %v192
    %v574 = vunpack.c.h.b16 %v192
    %v575 = vunpack.c.l.b16 %v193
    %v576 = vunpack.c.h.b16 %v193
    %v577 = vunpack.c.l.b16 %v194
    %v578 = vunpack.c.h.b16 %v194
    %v579 = vunpack.c.l.b16 %v195
    %v580 = vunpack.c.h.b16 %v195
    %v581 = vunpack.c.l.b16 %v196
    %v582 = vunpack.c.h.b16 %v196
    %v583 = vunpack.c.l.b16 %v197
    %v584 = vunpack.c.h.b16 %v197
    %v585 = vunpack.c.l.b16 %v198
    %v586 = vunpack.c.h.b16 %v198
    %v587 = vunpack.c.l.b16 %v199
    %v588 = vunpack.c.h.b16 %v199
    %v589 = vunpack.c.l.b16 %v200
    %v590 = vunpack.c.h.b16 %v200
    %v591 = vunpack.c.l.b16 %v201
    %v592 = vunpack.c.h.b16 %v201
    %v593 = vunpack.c.l.b16 %v202
    %v594 = vunpack.c.h.b16 %v202
    %v595 = vunpack.c.l.b16 %v203
    %v596 = vunpack.c.h.b16 %v203
    %v597 = vunpack.c.l.b16 %v204
    %v598 = vunpack.c.h.b16 %v204
    %v599 = vunpack.c.l.b16 %v205
    %v600 = vunpack.c.h.b16 %v205
    %v601 = vunpack.c.l.b16 %v206
    %v602 = vunpack.c.h.b16 %v206
    %v603 = vunpack.c.l.b16 %v207
    %v604 = vunpack.c.h.b16 %v207
    %v605 = vunpack.c.l.b16 %v208
    %v606 = vunpack.c.h.b16 %v208
    %v607 = vunpack.c.l.b16 %v209
    %v608 = vunpack.c.h.b16 %v209
    %v609 = vunpack.c.l.b16 %v210
    %v610 = vunpack.c.h.b16 %v210
    %v611 = vunpack.c.l.b16 %v211
    %v612 = vunpack.c.h.b16 %v211
    %v613 = vunpack.c.l.b16 %v212
    %v614 = vunpack.c.h.b16 %v212
    %v615 = vunpack.c.l.b16 %v213
    %v616 = vunpack.c.h.b16 %v213
    %v617 = vunpack.c.l.b16 %v214
    %v618 = vunpack.c.h.b16 %v214
    %v619 = vunpack.c.l.b16 %v215
    %v620 = vunpack.c.h.b16 %v215
    %v621 = vunpack.c.l.b16 %v216
    %v622 = vunpack.c.h.b16 %v216
    %v623 = vunpack.c.l.b16 %v217
    %v624 = vunpack.c.h.b16 %v217
    %v625 = vunpack.c.l.b16 %v218
    %v626 = vunpack.c.h.b16 %v218
    %v627 = vunpack.c.l.b16 %v219
    %v628 = vunpack.c.h.b16 %v219
    %v629 = vunpack.c.l.b16 %v220
    %v630 = vunpack.c.h.b16 %v220
    %v631 = vunpack.c.l.b16 %v221
    %v632 = vunpack.c.h.b16 %v221
    %v633 = vunpack.c.l.b16 %v222
    %v634 = vunpack.c.h.b16 %v222
    %v635 = vunpack.c.l.b16 %v223
    %v636 = vunpack.c.h.b16 %v223
    %v637 = vunpack.c.l.b16 %v224
    %v638 = vunpack.c.h.b16 %v224
    %v639 = vunpack.c.l.b16 %v225
    %v640 = vunpack.c.h.b16 %v225
    %v641 = vunpack.c.l.b16 %v226
    %v642 = vunpack.c.h.b16 %v226
    %v643 = vunpack.c.l.b16 %v227
    %v644 = vunpack.c.h.b16 %v227
    %v645 = vunpack.c.l.b16 %v228
    %v646 = vunpack.c.h.b16 %v228
    %v647 = vunpack.c.l.b16 %v229
    %v648 = vunpack.c.h.b16 %v229
    %v649 = vunpack.c.l.b16 %v230
    %v650 = vunpack.c.h.b16 %v230
    %v651 = vunpack.c.l.b16 %v231
    %v652 = vunpack.c.h.b16 %v231
    %v653 = vunpack.c.l.b16 %v232
    %v654 = vunpack.c.h.b16 %v232
    %v655 = vunpack.c.l.b16 %v233
    %v656 = vunpack.c.h.b16 %v233
    %v657 = vunpack.c.l.b16 %v234
    %v658 = vunpack.c.h.b16 %v234
    %v659 = vunpack.c.l.b16 %v235
    %v660 = vunpack.c.h.b16 %v235
    %v661 = vunpack.c.l.b16 %v236
    %v662 = vunpack.c.h.b16 %v236
    %v663 = vunpack.c.l.b16 %v237
    %v664 = vunpack.c.h.b16 %v237
    %v665 = vunpack.c.l.b16 %v238
    %v666 = vunpack.c.h.b16 %v238
    %v667 = vunpack.c.l.b16 %v239
    %v668 = vunpack.c.h.b16 %v239
    %v669 = vunpack.c.l.b16 %v240
    %v670 = vunpack.c.h.b16 %v240
    %v671 = vunpack.c.l.b16 %v241
    %v672 = vunpack.c.h.b16 %v241
    %v673 = vunpack.c.l.b16 %v242
    %v674 = vunpack.c.h.b16 %v242
    %v675 = vunpack.c.l.b16 %v243
    %v676 = vunpack.c.h.b16 %v243
    %v677 = vpack.c.b16 %v429, %v421
    %v678 = vpack.c.b16 %v430, %v422
    %v679 = vpack.c.b16 %v431, %v423
    %v680 = vpack.c.b16 %v432, %v424
    %v681 = vpack.c.b16 %v433, %v425
    %v682 = vpack.c.b16 %v434, %v426
    %v683 = vpack.c.b16 %v435, %v427
    %v684 = vpack.c.b16 %v436, %v428
    %v685 = vpack.c.b16 %v445, %v437
    %v686 = vpack.c.b16 %v446, %v438
    %v687 = vpack.c.b16 %v447, %v439
    %v688 = vpack.c.b16 %v448, %v440
    %v689 = vpack.c.b16 %v449, %v441
    %v690 = vpack.c.b16 %v450, %v442
    %v691 = vpack.c.b16 %v451, %v443
    %v692 = vpack.c.b16 %v452, %v444
    %v693 = vpack.c.b16 %v461, %v453
    %v694 = vpack.c.b16 %v462, %v454
    %v695 = vpack.c.b16 %v463, %v455
    %v696 = vpack.c.b16 %v464, %v456
    %v697 = vpack.c.b16 %v465, %v457
    %v698 = vpack.c.b16 %v466, %v458
    %v699 = vpack.c.b16 %v467, %v459
    %v700 = vpack.c.b16 %v468, %v460
    %v701 = vpack.c.b16 %v477, %v469
    %v702 = vpack.c.b16 %v478, %v470
    %v703 = vpack.c.b16 %v479, %v471
    %v704 = vpack.c.b16 %v480, %v472
    %v705 = vpack.c.b16 %v481, %v473
    %v706 = vpack.c.b16 %v482, %v474
    %v707 = vpack.c.b16 %v483, %v475
    %v708 = vpack.c.b16 %v484, %v476
    %v709 = vpack.c.b16 %v493, %v485
    %v710 = vpack.c.b16 %v494, %v486
    %v711 = vpack.c.b16 %v495, %v487
    %v712 = vpack.c.b16 %v496, %v488
    %v713 = vpack.c.b16 %v497, %v489
    %v714 = vpack.c.b16 %v498, %v490
    %v715 = vpack.c.b16 %v499, %v491
    %v716 = vpack.c.b16 %v500, %v492
    %v717 = vpack.c.b16 %v509, %v501
    %v718 = vpack.c.b16 %v510, %v502
    %v719 = vpack.c.b16 %v511, %v503
    %v720 = vpack.c.b16 %v512, %v504
    %v721 = vpack.c.b16 %v513, %v505
    %v722 = vpack.c.b16 %v514, %v506
    %v723 = vpack.c.b16 %v515, %v507
    %v724 = vpack.c.b16 %v516, %v508
    %v725 = vpack.c.b16 %v525, %v517
    %v726 = vpack.c.b16 %v526, %v518
    %v727 = vpack.c.b16 %v527, %v519
    %v728 = vpack.c.b16 %v528, %v520
    %v729 = vpack.c.b16 %v529, %v521
    %v730 = vpack.c.b16 %v530, %v522
    %v731 = vpack.c.b16 %v531, %v523
    %v732 = vpack.c.b16 %v532, %v524
    %v733 = vpack.c.b16 %v541, %v533
    %v734 = vpack.c.b16 %v542, %v534
    %v735 = vpack.c.b16 %v543, %v535
    %v736 = vpack.c.b16 %v544, %v536
    %v737 = vpack.c.b16 %v545, %v537
    %v738 = vpack.c.b16 %v546, %v538
    %v739 = vpack.c.b16 %v547, %v539
    %v740 = vpack.c.b16 %v548, %v540
    %v741 = vpack.c.b16 %v557, %v549
    %v742 = vpack.c.b16 %v558, %v550
    %v743 = vpack.c.b16 %v559, %v551
    %v744 = vpack.c.b16 %v560, %v552
    %v745 = vpack.c.b16 %v561, %v553
    %v746 = vpack.c.b16 %v562, %v554
    %v747 = vpack.c.b16 %v563, %v555
    %v748 = vpack.c.b16 %v564, %v556
    %v749 = vpack.c.b16 %v573, %v565
    %v750 = vpack.c.b16 %v574, %v566
    %v751 = vpack.c.b16 %v575, %v567
    %v752 = vpack.c.b16 %v576, %v568
    %v753 = vpack.c.b16 %v577, %v569
    %v754 = vpack.c.b16 %v578, %v570
    %v755 = vpack.c.b16 %v579, %v571
    %v756 = vpack.c.b16 %v580, %v572
    %v757 = vpack.c.b16 %v589, %v581
    %v758 = vpack.c.b16 %v590, %v582
    %v759 = vpack.c.b16 %v591, %v583
    %v760 = vpack.c.b16 %v592, %v584
    %v761 = vpack.c.b16 %v593, %v585
    %v762 = vpack.c.b16 %v594, %v586
    %v763 = vpack.c.b16 %v595, %v587
    %v764 = vpack.c.b16 %v596, %v588
    %v765 = vpack.c.b16 %v605, %v597
    %v766 = vpack.c.b16 %v606, %v598
    %v767 = vpack.c.b16 %v607, %v599
    %v768 = vpack.c.b16 %v608, %v600
    %v769 = vpack.c.b16 %v609, %v601
    %v770 = vpack.c.b16 %v610, %v602
    %v771 = vpack.c.b16 %v611, %v603
    %v772 = vpack.c.b16 %v612, %v604
    %v773 = vpack.c.b16 %v621, %v613
    %v774 = vpack.c.b16 %v622, %v614
    %v775 = vpack.c.b16 %v623, %v615
    %v776 = vpack.c.b16 %v624, %v616
    %v777 = vpack.c.b16 %v625, %v617
    %v778 = vpack.c.b16 %v626, %v618
    %v779 = vpack.c.b16 %v627, %v619
    %v780 = vpack.c.b16 %v628, %v620
    %v781 = vpack.c.b16 %v637, %v629
    %v782 = vpack.c.b16 %v638, %v630
    %v783 = vpack.c.b16 %v639, %v631
    %v784 = vpack.c.b16 %v640, %v632
    %v785 = vpack.c.b16 %v641, %v633
    %v786 = vpack.c.b16 %v642, %v634
    %v787 = vpack.c.b16 %v643, %v635
    %v788 = vpack.c.b16 %v644, %v636
    %v789 = vpack.c.b16 %v653, %v645
    %v790 = vpack.c.b16 %v654, %v646
    %v791 = vpack.c.b16 %v655, %v647
    %v792 = vpack.c.b16 %v656, %v648
    %v793 = vpack.c.b16 %v657, %v649
    %v794 = vpack.c.b16 %v658, %v650
    %v795 = vpack.c.b16 %v659, %v651
    %v796 = vpack.c.b16 %v660, %v652
    %v797 = vpack.c.b16 %v669, %v661
    %v798 = vpack.c.b16 %v670, %v662
    %v799 = vpack.c.b16 %v671, %v663
    %v800 = vpack.c.b16 %v672, %v664
    %v801 = vpack.c.b16 %v673, %v665
    %v802 = vpack.c.b16 %v674, %v666
    %v803 = vpack.c.b16 %v675, %v667
    %v804 = vpack.c.b16 %v676, %v668
    %933 = vmatprep.subr.bf16.mxu0 %v678
    %934 = vmatpush1.bf16.msra.mxu0 %v677
    %935 = vmatprep.subr.bf16.mxu0 %v686
    %936 = vmatpush1.bf16.msra.mxu0 %v685
    %937 = vmatprep.subr.bf16.mxu0 %v694
    %938 = vmatpush1.bf16.msra.mxu0 %v693
    %939 = vmatprep.subr.bf16.mxu0 %v702
    %940 = vmatpush1.bf16.msra.mxu0 %v701
    %941 = vmatprep.subr.bf16.mxu0 %v710
    %942 = vmatpush1.bf16.msra.mxu0 %v709
    %943 = vmatprep.subr.bf16.mxu0 %v718
    %944 = vmatpush1.bf16.msra.mxu0 %v717
    %945 = vmatprep.subr.bf16.mxu0 %v726
    %946 = vmatpush1.bf16.msra.mxu0 %v725
    %947 = vmatprep.subr.bf16.mxu0 %v734
    %948 = vmatpush1.bf16.msra.mxu0 %v733
    %949 = vmatprep.subr.bf16.mxu0 %v742
    %950 = vmatpush1.bf16.msra.mxu0 %v741
    %951 = vmatprep.subr.bf16.mxu0 %v750
    %952 = vmatpush1.bf16.msra.mxu0 %v749
    %953 = vmatprep.subr.bf16.mxu0 %v758
    %954 = vmatpush1.bf16.msra.mxu0 %v757
    %955 = vmatprep.subr.bf16.mxu0 %v766
    %956 = vmatpush1.bf16.msra.mxu0 %v765
    %957 = vmatprep.subr.bf16.mxu0 %v774
    %958 = vmatpush1.bf16.msra.mxu0 %v773
    %959 = vmatprep.subr.bf16.mxu0 %v782
    %960 = vmatpush1.bf16.msra.mxu0 %v781
    %961 = vmatprep.subr.bf16.mxu0 %v790
    %962 = vmatpush1.bf16.msra.mxu0 %v789
    %963 = vmatprep.subr.bf16.mxu0 %v798
    %964 = vmatpush1.bf16.msra.mxu0 %v797
    %965 = vmatprep.mubr.bf16.mxu0 %v290
    %966 = vmatmul.mubr.bf16.gmra.mrb[0].mxu0 %v289
    %v967 = vpop.f32.mrb[0].mxu0
    %v968 = vadd.f32 %v249, %v967
    %v969 = vpop.f32.mrb[0].mxu0
    %v970 = vadd.f32 %v253, %v969
    %v971 = vpop.f32.mrb[0].mxu0
    %v972 = vpop.f32.mrb[0].mxu0
    %973 = vdwg.mxu0
    %974 = vmatprep.subr.bf16.mxu0 %v680
    %975 = vmatpush1.bf16.msra.mxu0 %v679
    %976 = vmatprep.subr.bf16.mxu0 %v688
    %977 = vmatpush1.bf16.msra.mxu0 %v687
    %978 = vmatprep.subr.bf16.mxu0 %v696
    %979 = vmatpush1.bf16.msra.mxu0 %v695
    %980 = vmatprep.subr.bf16.mxu0 %v704
    %981 = vmatpush1.bf16.msra.mxu0 %v703
    %982 = vmatprep.subr.bf16.mxu0 %v712
    %983 = vmatpush1.bf16.msra.mxu0 %v711
    %984 = vmatprep.subr.bf16.mxu0 %v720
    %985 = vmatpush1.bf16.msra.mxu0 %v719
    %986 = vmatprep.subr.bf16.mxu0 %v728
    %987 = vmatpush1.bf16.msra.mxu0 %v727
    %988 = vmatprep.subr.bf16.mxu0 %v736
    %989 = vmatpush1.bf16.msra.mxu0 %v735
    %990 = vmatprep.subr.bf16.mxu0 %v744
    %991 = vmatpush1.bf16.msra.mxu0 %v743
    %992 = vmatprep.subr.bf16.mxu0 %v752
    %993 = vmatpush1.bf16.msra.mxu0 %v751
    %994 = vmatprep.subr.bf16.mxu0 %v760
    %995 = vmatpush1.bf16.msra.mxu0 %v759
    %996 = vmatprep.subr.bf16.mxu0 %v768
    %997 = vmatpush1.bf16.msra.mxu0 %v767
    %998 = vmatprep.subr.bf16.mxu0 %v776
    %999 = vmatpush1.bf16.msra.mxu0 %v775
    %1000 = vmatprep.subr.bf16.mxu0 %v784
    %1001 = vmatpush1.bf16.msra.mxu0 %v783
    %1002 = vmatprep.subr.bf16.mxu0 %v792
    %1003 = vmatpush1.bf16.msra.mxu0 %v791
    %1004 = vmatprep.subr.bf16.mxu0 %v800
    %1005 = vmatpush1.bf16.msra.mxu0 %v799
    %1006 = vmatprep.mubr.bf16.mxu0 %v290
    %1007 = vmatmul.mubr.bf16.gmra.mrb[0].mxu0 %v289
    %v1008 = vpop.f32.mrb[0].mxu0
    %v1009 = vadd.f32 %v257, %v1008
    %v1010 = vpop.f32.mrb[0].mxu0
    %v1011 = vadd.f32 %v261, %v1010
    %v1012 = vpop.f32.mrb[0].mxu0
    %v1013 = vpop.f32.mrb[0].mxu0
    %1014 = vdwg.mxu0
    %1015 = vmatprep.subr.bf16.mxu0 %v682
    %1016 = vmatpush1.bf16.msra.mxu0 %v681
    %1017 = vmatprep.subr.bf16.mxu0 %v690
    %1018 = vmatpush1.bf16.msra.mxu0 %v689
    %1019 = vmatprep.subr.bf16.mxu0 %v698
    %1020 = vmatpush1.bf16.msra.mxu0 %v697
    %1021 = vmatprep.subr.bf16.mxu0 %v706
    %1022 = vmatpush1.bf16.msra.mxu0 %v705
    %1023 = vmatprep.subr.bf16.mxu0 %v714
    %1024 = vmatpush1.bf16.msra.mxu0 %v713
    %1025 = vmatprep.subr.bf16.mxu0 %v722
    %1026 = vmatpush1.bf16.msra.mxu0 %v721
    %1027 = vmatprep.subr.bf16.mxu0 %v730
    %1028 = vmatpush1.bf16.msra.mxu0 %v729
    %1029 = vmatprep.subr.bf16.mxu0 %v738
    %1030 = vmatpush1.bf16.msra.mxu0 %v737
    %1031 = vmatprep.subr.bf16.mxu0 %v746
    %1032 = vmatpush1.bf16.msra.mxu0 %v745
    %1033 = vmatprep.subr.bf16.mxu0 %v754
    %1034 = vmatpush1.bf16.msra.mxu0 %v753
    %1035 = vmatprep.subr.bf16.mxu0 %v762
    %1036 = vmatpush1.bf16.msra.mxu0 %v761
    %1037 = vmatprep.subr.bf16.mxu0 %v770
    %1038 = vmatpush1.bf16.msra.mxu0 %v769
    %1039 = vmatprep.subr.bf16.mxu0 %v778
    %1040 = vmatpush1.bf16.msra.mxu0 %v777
    %1041 = vmatprep.subr.bf16.mxu0 %v786
    %1042 = vmatpush1.bf16.msra.mxu0 %v785
    %1043 = vmatprep.subr.bf16.mxu0 %v794
    %1044 = vmatpush1.bf16.msra.mxu0 %v793
    %1045 = vmatprep.subr.bf16.mxu0 %v802
    %1046 = vmatpush1.bf16.msra.mxu0 %v801
    %1047 = vmatprep.mubr.bf16.mxu0 %v290
    %1048 = vmatmul.mubr.bf16.gmra.mrb[0].mxu0 %v289
    %v1049 = vpop.f32.mrb[0].mxu0
    %v1050 = vadd.f32 %v265, %v1049
    %v1051 = vpop.f32.mrb[0].mxu0
    %v1052 = vadd.f32 %v269, %v1051
    %v1053 = vpop.f32.mrb[0].mxu0
    %v1054 = vpop.f32.mrb[0].mxu0
    %1055 = vdwg.mxu0
    %1056 = vmatprep.subr.bf16.mxu0 %v684
    %1057 = vmatpush1.bf16.msra.mxu0 %v683
    %1058 = vmatprep.subr.bf16.mxu0 %v692
    %1059 = vmatpush1.bf16.msra.mxu0 %v691
    %1060 = vmatprep.subr.bf16.mxu0 %v700
    %1061 = vmatpush1.bf16.msra.mxu0 %v699
    %1062 = vmatprep.subr.bf16.mxu0 %v708
    %1063 = vmatpush1.bf16.msra.mxu0 %v707
    %1064 = vmatprep.subr.bf16.mxu0 %v716
    %1065 = vmatpush1.bf16.msra.mxu0 %v715
    %1066 = vmatprep.subr.bf16.mxu0 %v724
    %1067 = vmatpush1.bf16.msra.mxu0 %v723
    %1068 = vmatprep.subr.bf16.mxu0 %v732
    %1069 = vmatpush1.bf16.msra.mxu0 %v731
    %1070 = vmatprep.subr.bf16.mxu0 %v740
    %1071 = vmatpush1.bf16.msra.mxu0 %v739
    %1072 = vmatprep.subr.bf16.mxu0 %v748
    %1073 = vmatpush1.bf16.msra.mxu0 %v747
    %1074 = vmatprep.subr.bf16.mxu0 %v756
    %1075 = vmatpush1.bf16.msra.mxu0 %v755
    %1076 = vmatprep.subr.bf16.mxu0 %v764
    %1077 = vmatpush1.bf16.msra.mxu0 %v763
    %1078 = vmatprep.subr.bf16.mxu0 %v772
    %1079 = vmatpush1.bf16.msra.mxu0 %v771
    %1080 = vmatprep.subr.bf16.mxu0 %v780
    %1081 = vmatpush1.bf16.msra.mxu0 %v779
    %1082 = vmatprep.subr.bf16.mxu0 %v788
    %1083 = vmatpush1.bf16.msra.mxu0 %v787
    %1084 = vmatprep.subr.bf16.mxu0 %v796
    %1085 = vmatpush1.bf16.msra.mxu0 %v795
    %1086 = vmatprep.subr.bf16.mxu0 %v804
    %1087 = vmatpush1.bf16.msra.mxu0 %v803
    %1088 = vmatprep.mubr.bf16.mxu0 %v290
    %1089 = vmatmul.mubr.bf16.gmra.mrb[0].mxu0 %v289
    %v1090 = vpop.f32.mrb[0].mxu0
    %v1091 = vadd.f32 %v273, %v1090
    %v1092 = vpop.f32.mrb[0].mxu0
    %v1093 = vadd.f32 %v277, %v1092
    %v1094 = vpop.f32.mrb[0].mxu0
    %v1095 = vpop.f32.mrb[0].mxu0
    %1096 = vdwg.mxu0
    %v1097 = vmax.f32 %v968, 0.0
    %v1098 = vmax.f32 %v970, 0.0
    %v1099 = vmax.f32 %v1009, 0.0
    %v1100 = vmax.f32 %v1011, 0.0
    %v1101 = vmax.f32 %v1050, 0.0
    %v1102 = vmax.f32 %v1052, 0.0
    %v1103 = vmax.f32 %v1091, 0.0
    %v1104 = vmax.f32 %v1093, 0.0
    %v1105 = vpack.c.bf16 %v1097, %v1097
    %v1106 = vpack.c.bf16 %v1098, %v1098
    %v1107 = vpack.c.bf16 %v1099, %v1099
    %v1108 = vpack.c.bf16 %v1100, %v1100
    %v1109 = vpack.c.bf16 %v1101, %v1101
    %v1110 = vpack.c.bf16 %v1102, %v1102
    %v1111 = vpack.c.bf16 %v1103, %v1103
    %v1112 = vpack.c.bf16 %v1104, %v1104
    %v1113 = vld [vmem:[#allocation8] sm:$0xff]
    %v1114 = vld [vmem:[#allocation8 + $0x8] sm:$0xff]
    %v1115 = vld [vmem:[#allocation8 + $0x10] sm:$0xff]
    %v1116 = vld [vmem:[#allocation8 + $0x18] sm:$0xff]
    %v1117 = vld [vmem:[#allocation8 + $0x20] sm:$0xff]
    %v1118 = vld [vmem:[#allocation8 + $0x28] sm:$0xff]
    %v1119 = vld [vmem:[#allocation8 + $0x30] sm:$0xff]
    %v1120 = vld [vmem:[#allocation8 + $0x38] sm:$0xff]
    %v1121 = vld [vmem:[#allocation8 + $0x40] sm:$0xff]
    %v1122 = vld [vmem:[#allocation8 + $0x48] sm:$0xff]
    %v1123 = vld [vmem:[#allocation8 + $0x50] sm:$0xff]
    %v1124 = vld [vmem:[#allocation8 + $0x58] sm:$0xff]
    %v1125 = vld [vmem:[#allocation8 + $0x60] sm:$0xff]
    %v1126 = vld [vmem:[#allocation8 + $0x68] sm:$0xff]
    %v1127 = vld [vmem:[#allocation8 + $0x70] sm:$0xff]
    %v1128 = vld [vmem:[#allocation8 + $0x78] sm:$0xff]
    %v1129 = vld [vmem:[#allocation8 + $0x80] sm:$0xff]
    %v1130 = vld [vmem:[#allocation8 + $0x88] sm:$0xff]
    %v1131 = vld [vmem:[#allocation8 + $0x90] sm:$0xff]
    %v1132 = vld [vmem:[#allocation8 + $0x98] sm:$0xff]
    %v1133 = vld [vmem:[#allocation8 + $0xa0] sm:$0xff]
    %v1134 = vld [vmem:[#allocation8 + $0xa8] sm:$0xff]
    %v1135 = vld [vmem:[#allocation8 + $0xb0] sm:$0xff]
    %v1136 = vld [vmem:[#allocation8 + $0xb8] sm:$0xff]
    %v1137 = vld [vmem:[#allocation8 + $0xc0] sm:$0xff]
    %v1138 = vld [vmem:[#allocation8 + $0xc8] sm:$0xff]
    %v1139 = vld [vmem:[#allocation8 + $0xd0] sm:$0xff]
    %v1140 = vld [vmem:[#allocation8 + $0xd8] sm:$0xff]
    %v1141 = vld [vmem:[#allocation8 + $0xe0] sm:$0xff]
    %v1142 = vld [vmem:[#allocation8 + $0xe8] sm:$0xff]
    %v1143 = vld [vmem:[#allocation8 + $0xf0] sm:$0xff]
    %v1144 = vld [vmem:[#allocation8 + $0xf8] sm:$0xff]
    %v1145 = vld [vmem:[#allocation8 + $0x100] sm:$0xff]
    %v1146 = vld [vmem:[#allocation8 + $0x108] sm:$0xff]
    %v1147 = vld [vmem:[#allocation8 + $0x110] sm:$0xff]
    %v1148 = vld [vmem:[#allocation8 + $0x118] sm:$0xff]
    %v1149 = vld [vmem:[#allocation8 + $0x120] sm:$0xff]
    %v1150 = vld [vmem:[#allocation8 + $0x128] sm:$0xff]
    %v1151 = vld [vmem:[#allocation8 + $0x130] sm:$0xff]
    %v1152 = vld [vmem:[#allocation8 + $0x138] sm:$0xff]
    %v1153 = vld [vmem:[#allocation8 + $0x140] sm:$0xff]
    %v1154 = vld [vmem:[#allocation8 + $0x148] sm:$0xff]
    %v1155 = vld [vmem:[#allocation8 + $0x150] sm:$0xff]
    %v1156 = vld [vmem:[#allocation8 + $0x158] sm:$0xff]
    %v1157 = vld [vmem:[#allocation8 + $0x160] sm:$0xff]
    %v1158 = vld [vmem:[#allocation8 + $0x168] sm:$0xff]
    %v1159 = vld [vmem:[#allocation8 + $0x170] sm:$0xff]
    %v1160 = vld [vmem:[#allocation8 + $0x178] sm:$0xff]
    %v1161 = vld [vmem:[#allocation8 + $0x180] sm:$0xff]
    %v1162 = vld [vmem:[#allocation8 + $0x188] sm:$0xff]
    %v1163 = vld [vmem:[#allocation8 + $0x190] sm:$0xff]
    %v1164 = vld [vmem:[#allocation8 + $0x198] sm:$0xff]
    %v1165 = vld [vmem:[#allocation8 + $0x1a0] sm:$0xff]
    %v1166 = vld [vmem:[#allocation8 + $0x1a8] sm:$0xff]
    %v1167 = vld [vmem:[#allocation8 + $0x1b0] sm:$0xff]
    %v1168 = vld [vmem:[#allocation8 + $0x1b8] sm:$0xff]
    %v1169 = vld [vmem:[#allocation8 + $0x1c0] sm:$0xff]
    %v1170 = vld [vmem:[#allocation8 + $0x1c8] sm:$0xff]
    %v1171 = vld [vmem:[#allocation8 + $0x1d0] sm:$0xff]
    %v1172 = vld [vmem:[#allocation8 + $0x1d8] sm:$0xff]
    %v1173 = vld [vmem:[#allocation8 + $0x1e0] sm:$0xff]
    %v1174 = vld [vmem:[#allocation8 + $0x1e8] sm:$0xff]
    %v1175 = vld [vmem:[#allocation8 + $0x1f0] sm:$0xff]
    %v1176 = vld [vmem:[#allocation8 + $0x1f8] sm:$0xff]
    %v1177 = vld [vmem:[#allocation8 + $0x200] sm:$0xff]
    %v1178 = vld [vmem:[#allocation8 + $0x208] sm:$0xff]
    %v1179 = vld [vmem:[#allocation8 + $0x210] sm:$0xff]
    %v1180 = vld [vmem:[#allocation8 + $0x218] sm:$0xff]
    %v1181 = vld [vmem:[#allocation8 + $0x220] sm:$0xff]
    %v1182 = vld [vmem:[#allocation8 + $0x228] sm:$0xff]
    %v1183 = vld [vmem:[#allocation8 + $0x230] sm:$0xff]
    %v1184 = vld [vmem:[#allocation8 + $0x238] sm:$0xff]
    %v1185 = vld [vmem:[#allocation8 + $0x240] sm:$0xff]
    %v1186 = vld [vmem:[#allocation8 + $0x248] sm:$0xff]
    %v1187 = vld [vmem:[#allocation8 + $0x250] sm:$0xff]
    %v1188 = vld [vmem:[#allocation8 + $0x258] sm:$0xff]
    %v1189 = vld [vmem:[#allocation8 + $0x260] sm:$0xff]
    %v1190 = vld [vmem:[#allocation8 + $0x268] sm:$0xff]
    %v1191 = vld [vmem:[#allocation8 + $0x270] sm:$0xff]
    %v1192 = vld [vmem:[#allocation8 + $0x278] sm:$0xff]
    %v1193 = vld [vmem:[#allocation8 + $0x280] sm:$0xff]
    %v1194 = vld [vmem:[#allocation8 + $0x288] sm:$0xff]
    %v1195 = vld [vmem:[#allocation8 + $0x290] sm:$0xff]
    %v1196 = vld [vmem:[#allocation8 + $0x298] sm:$0xff]
    %v1197 = vld [vmem:[#allocation8 + $0x2a0] sm:$0xff]
    %v1198 = vld [vmem:[#allocation8 + $0x2a8] sm:$0xff]
    %v1199 = vld [vmem:[#allocation8 + $0x2b0] sm:$0xff]
    %v1200 = vld [vmem:[#allocation8 + $0x2b8] sm:$0xff]
    %v1201 = vld [vmem:[#allocation8 + $0x2c0] sm:$0xff]
    %v1202 = vld [vmem:[#allocation8 + $0x2c8] sm:$0xff]
    %v1203 = vld [vmem:[#allocation8 + $0x2d0] sm:$0xff]
    %v1204 = vld [vmem:[#allocation8 + $0x2d8] sm:$0xff]
    %v1205 = vld [vmem:[#allocation8 + $0x2e0] sm:$0xff]
    %v1206 = vld [vmem:[#allocation8 + $0x2e8] sm:$0xff]
    %v1207 = vld [vmem:[#allocation8 + $0x2f0] sm:$0xff]
    %v1208 = vld [vmem:[#allocation8 + $0x2f8] sm:$0xff]
    %v1209 = vld [vmem:[#allocation8 + $0x300] sm:$0xff]
    %v1210 = vld [vmem:[#allocation8 + $0x308] sm:$0xff]
    %v1211 = vld [vmem:[#allocation8 + $0x310] sm:$0xff]
    %v1212 = vld [vmem:[#allocation8 + $0x318] sm:$0xff]
    %v1213 = vld [vmem:[#allocation8 + $0x320] sm:$0xff]
    %v1214 = vld [vmem:[#allocation8 + $0x328] sm:$0xff]
    %v1215 = vld [vmem:[#allocation8 + $0x330] sm:$0xff]
    %v1216 = vld [vmem:[#allocation8 + $0x338] sm:$0xff]
    %v1217 = vld [vmem:[#allocation8 + $0x340] sm:$0xff]
    %v1218 = vld [vmem:[#allocation8 + $0x348] sm:$0xff]
    %v1219 = vld [vmem:[#allocation8 + $0x350] sm:$0xff]
    %v1220 = vld [vmem:[#allocation8 + $0x358] sm:$0xff]
    %v1221 = vld [vmem:[#allocation8 + $0x360] sm:$0xff]
    %v1222 = vld [vmem:[#allocation8 + $0x368] sm:$0xff]
    %v1223 = vld [vmem:[#allocation8 + $0x370] sm:$0xff]
    %v1224 = vld [vmem:[#allocation8 + $0x378] sm:$0xff]
    %v1225 = vld [vmem:[#allocation8 + $0x380] sm:$0xff]
    %v1226 = vld [vmem:[#allocation8 + $0x388] sm:$0xff]
    %v1227 = vld [vmem:[#allocation8 + $0x390] sm:$0xff]
    %v1228 = vld [vmem:[#allocation8 + $0x398] sm:$0xff]
    %v1229 = vld [vmem:[#allocation8 + $0x3a0] sm:$0xff]
    %v1230 = vld [vmem:[#allocation8 + $0x3a8] sm:$0xff]
    %v1231 = vld [vmem:[#allocation8 + $0x3b0] sm:$0xff]
    %v1232 = vld [vmem:[#allocation8 + $0x3b8] sm:$0xff]
    %v1233 = vld [vmem:[#allocation8 + $0x3c0] sm:$0xff]
    %v1234 = vld [vmem:[#allocation8 + $0x3c8] sm:$0xff]
    %v1235 = vld [vmem:[#allocation8 + $0x3d0] sm:$0xff]
    %v1236 = vld [vmem:[#allocation8 + $0x3d8] sm:$0xff]
    %v1237 = vld [vmem:[#allocation8 + $0x3e0] sm:$0xff]
    %v1238 = vld [vmem:[#allocation8 + $0x3e8] sm:$0xff]
    %v1239 = vld [vmem:[#allocation8 + $0x3f0] sm:$0xff]
    %v1240 = vld [vmem:[#allocation8 + $0x3f8] sm:$0xff]
    %v1241 = vld [vmem:[#allocation8 + $0x400] sm:$0xff]
    %v1242 = vld [vmem:[#allocation8 + $0x408] sm:$0xff]
    %v1243 = vld [vmem:[#allocation8 + $0x410] sm:$0xff]
    %v1244 = vld [vmem:[#allocation8 + $0x418] sm:$0xff]
    %v1245 = vld [vmem:[#allocation8 + $0x420] sm:$0xff]
    %v1246 = vld [vmem:[#allocation8 + $0x428] sm:$0xff]
    %v1247 = vld [vmem:[#allocation8 + $0x430] sm:$0xff]
    %v1248 = vld [vmem:[#allocation8 + $0x438] sm:$0xff]
    %v1249 = vld [vmem:[#allocation8 + $0x440] sm:$0xff]
    %v1250 = vld [vmem:[#allocation8 + $0x448] sm:$0xff]
    %v1251 = vld [vmem:[#allocation8 + $0x450] sm:$0xff]
    %v1252 = vld [vmem:[#allocation8 + $0x458] sm:$0xff]
    %v1253 = vld [vmem:[#allocation8 + $0x460] sm:$0xff]
    %v1254 = vld [vmem:[#allocation8 + $0x468] sm:$0xff]
    %v1255 = vld [vmem:[#allocation8 + $0x470] sm:$0xff]
    %v1256 = vld [vmem:[#allocation8 + $0x478] sm:$0xff]
    %v1257 = vld [vmem:[#allocation8 + $0x480] sm:$0xff]
    %v1258 = vld [vmem:[#allocation8 + $0x488] sm:$0xff]
    %v1259 = vld [vmem:[#allocation8 + $0x490] sm:$0xff]
    %v1260 = vld [vmem:[#allocation8 + $0x498] sm:$0xff]
    %v1261 = vld [vmem:[#allocation8 + $0x4a0] sm:$0xff]
    %v1262 = vld [vmem:[#allocation8 + $0x4a8] sm:$0xff]
    %v1263 = vld [vmem:[#allocation8 + $0x4b0] sm:$0xff]
    %v1264 = vld [vmem:[#allocation8 + $0x4b8] sm:$0xff]
    %v1265 = vld [vmem:[#allocation8 + $0x4c0] sm:$0xff]
    %v1266 = vld [vmem:[#allocation8 + $0x4c8] sm:$0xff]
    %v1267 = vld [vmem:[#allocation8 + $0x4d0] sm:$0xff]
    %v1268 = vld [vmem:[#allocation8 + $0x4d8] sm:$0xff]
    %v1269 = vld [vmem:[#allocation8 + $0x4e0] sm:$0xff]
    %v1270 = vld [vmem:[#allocation8 + $0x4e8] sm:$0xff]
    %v1271 = vld [vmem:[#allocation8 + $0x4f0] sm:$0xff]
    %v1272 = vld [vmem:[#allocation8 + $0x4f8] sm:$0xff]
    %v1273 = vld [vmem:[#allocation8 + $0x500] sm:$0xff]
    %v1274 = vld [vmem:[#allocation8 + $0x508] sm:$0xff]
    %v1275 = vld [vmem:[#allocation8 + $0x510] sm:$0xff]
    %v1276 = vld [vmem:[#allocation8 + $0x518] sm:$0xff]
    %v1277 = vld [vmem:[#allocation8 + $0x520] sm:$0xff]
    %v1278 = vld [vmem:[#allocation8 + $0x528] sm:$0xff]
    %v1279 = vld [vmem:[#allocation8 + $0x530] sm:$0xff]
    %v1280 = vld [vmem:[#allocation8 + $0x538] sm:$0xff]
    %v1281 = vld [vmem:[#allocation8 + $0x540] sm:$0xff]
    %v1282 = vld [vmem:[#allocation8 + $0x548] sm:$0xff]
    %v1283 = vld [vmem:[#allocation8 + $0x550] sm:$0xff]
    %v1284 = vld [vmem:[#allocation8 + $0x558] sm:$0xff]
    %v1285 = vld [vmem:[#allocation8 + $0x560] sm:$0xff]
    %v1286 = vld [vmem:[#allocation8 + $0x568] sm:$0xff]
    %v1287 = vld [vmem:[#allocation8 + $0x570] sm:$0xff]
    %v1288 = vld [vmem:[#allocation8 + $0x578] sm:$0xff]
    %v1289 = vld [vmem:[#allocation8 + $0x580] sm:$0xff]
    %v1290 = vld [vmem:[#allocation8 + $0x588] sm:$0xff]
    %v1291 = vld [vmem:[#allocation8 + $0x590] sm:$0xff]
    %v1292 = vld [vmem:[#allocation8 + $0x598] sm:$0xff]
    %v1293 = vld [vmem:[#allocation8 + $0x5a0] sm:$0xff]
    %v1294 = vld [vmem:[#allocation8 + $0x5a8] sm:$0xff]
    %v1295 = vld [vmem:[#allocation8 + $0x5b0] sm:$0xff]
    %v1296 = vld [vmem:[#allocation8 + $0x5b8] sm:$0xff]
    %v1297 = vld [vmem:[#allocation8 + $0x5c0] sm:$0xff]
    %v1298 = vld [vmem:[#allocation8 + $0x5c8] sm:$0xff]
    %v1299 = vld [vmem:[#allocation8 + $0x5d0] sm:$0xff]
    %v1300 = vld [vmem:[#allocation8 + $0x5d8] sm:$0xff]
    %v1301 = vld [vmem:[#allocation8 + $0x5e0] sm:$0xff]
    %v1302 = vld [vmem:[#allocation8 + $0x5e8] sm:$0xff]
    %v1303 = vld [vmem:[#allocation8 + $0x5f0] sm:$0xff]
    %v1304 = vld [vmem:[#allocation8 + $0x5f8] sm:$0xff]
    %v1305 = vld [vmem:[#allocation8 + $0x600] sm:$0xff]
    %v1306 = vld [vmem:[#allocation8 + $0x608] sm:$0xff]
    %v1307 = vld [vmem:[#allocation8 + $0x610] sm:$0xff]
    %v1308 = vld [vmem:[#allocation8 + $0x618] sm:$0xff]
    %v1309 = vld [vmem:[#allocation8 + $0x620] sm:$0xff]
    %v1310 = vld [vmem:[#allocation8 + $0x628] sm:$0xff]
    %v1311 = vld [vmem:[#allocation8 + $0x630] sm:$0xff]
    %v1312 = vld [vmem:[#allocation8 + $0x638] sm:$0xff]
    %v1313 = vld [vmem:[#allocation8 + $0x640] sm:$0xff]
    %v1314 = vld [vmem:[#allocation8 + $0x648] sm:$0xff]
    %v1315 = vld [vmem:[#allocation8 + $0x650] sm:$0xff]
    %v1316 = vld [vmem:[#allocation8 + $0x658] sm:$0xff]
    %v1317 = vld [vmem:[#allocation8 + $0x660] sm:$0xff]
    %v1318 = vld [vmem:[#allocation8 + $0x668] sm:$0xff]
    %v1319 = vld [vmem:[#allocation8 + $0x670] sm:$0xff]
    %v1320 = vld [vmem:[#allocation8 + $0x678] sm:$0xff]
    %v1321 = vld [vmem:[#allocation8 + $0x680] sm:$0xff]
    %v1322 = vld [vmem:[#allocation8 + $0x688] sm:$0xff]
    %v1323 = vld [vmem:[#allocation8 + $0x690] sm:$0xff]
    %v1324 = vld [vmem:[#allocation8 + $0x698] sm:$0xff]
    %v1325 = vld [vmem:[#allocation8 + $0x6a0] sm:$0xff]
    %v1326 = vld [vmem:[#allocation8 + $0x6a8] sm:$0xff]
    %v1327 = vld [vmem:[#allocation8 + $0x6b0] sm:$0xff]
    %v1328 = vld [vmem:[#allocation8 + $0x6b8] sm:$0xff]
    %v1329 = vld [vmem:[#allocation8 + $0x6c0] sm:$0xff]
    %v1330 = vld [vmem:[#allocation8 + $0x6c8] sm:$0xff]
    %v1331 = vld [vmem:[#allocation8 + $0x6d0] sm:$0xff]
    %v1332 = vld [vmem:[#allocation8 + $0x6d8] sm:$0xff]
    %v1333 = vld [vmem:[#allocation8 + $0x6e0] sm:$0xff]
    %v1334 = vld [vmem:[#allocation8 + $0x6e8] sm:$0xff]
    %v1335 = vld [vmem:[#allocation8 + $0x6f0] sm:$0xff]
    %v1336 = vld [vmem:[#allocation8 + $0x6f8] sm:$0xff]
    %v1337 = vld [vmem:[#allocation8 + $0x700] sm:$0xff]
    %v1338 = vld [vmem:[#allocation8 + $0x708] sm:$0xff]
    %v1339 = vld [vmem:[#allocation8 + $0x710] sm:$0xff]
    %v1340 = vld [vmem:[#allocation8 + $0x718] sm:$0xff]
    %v1341 = vld [vmem:[#allocation8 + $0x720] sm:$0xff]
    %v1342 = vld [vmem:[#allocation8 + $0x728] sm:$0xff]
    %v1343 = vld [vmem:[#allocation8 + $0x730] sm:$0xff]
    %v1344 = vld [vmem:[#allocation8 + $0x738] sm:$0xff]
    %v1345 = vld [vmem:[#allocation8 + $0x740] sm:$0xff]
    %v1346 = vld [vmem:[#allocation8 + $0x748] sm:$0xff]
    %v1347 = vld [vmem:[#allocation8 + $0x750] sm:$0xff]
    %v1348 = vld [vmem:[#allocation8 + $0x758] sm:$0xff]
    %v1349 = vld [vmem:[#allocation8 + $0x760] sm:$0xff]
    %v1350 = vld [vmem:[#allocation8 + $0x768] sm:$0xff]
    %v1351 = vld [vmem:[#allocation8 + $0x770] sm:$0xff]
    %v1352 = vld [vmem:[#allocation8 + $0x778] sm:$0xff]
    %v1353 = vld [vmem:[#allocation8 + $0x780] sm:$0xff]
    %v1354 = vld [vmem:[#allocation8 + $0x788] sm:$0xff]
    %v1355 = vld [vmem:[#allocation8 + $0x790] sm:$0xff]
    %v1356 = vld [vmem:[#allocation8 + $0x798] sm:$0xff]
    %v1357 = vld [vmem:[#allocation8 + $0x7a0] sm:$0xff]
    %v1358 = vld [vmem:[#allocation8 + $0x7a8] sm:$0xff]
    %v1359 = vld [vmem:[#allocation8 + $0x7b0] sm:$0xff]
    %v1360 = vld [vmem:[#allocation8 + $0x7b8] sm:$0xff]
    %v1361 = vld [vmem:[#allocation8 + $0x7c0] sm:$0xff]
    %v1362 = vld [vmem:[#allocation8 + $0x7c8] sm:$0xff]
    %v1363 = vld [vmem:[#allocation8 + $0x7d0] sm:$0xff]
    %v1364 = vld [vmem:[#allocation8 + $0x7d8] sm:$0xff]
    %v1365 = vld [vmem:[#allocation8 + $0x7e0] sm:$0xff]
    %v1366 = vld [vmem:[#allocation8 + $0x7e8] sm:$0xff]
    %v1367 = vld [vmem:[#allocation8 + $0x7f0] sm:$0xff]
    %v1368 = vld [vmem:[#allocation8 + $0x7f8] sm:$0xff]
    %v1369 = vld [vmem:[#allocation8 + $0x800] sm:$0xff]
    %v1370 = vld [vmem:[#allocation8 + $0x808] sm:$0xff]
    %v1371 = vld [vmem:[#allocation8 + $0x810] sm:$0xff]
    %v1372 = vld [vmem:[#allocation8 + $0x818] sm:$0xff]
    %v1373 = vld [vmem:[#allocation8 + $0x820] sm:$0xff]
    %v1374 = vld [vmem:[#allocation8 + $0x828] sm:$0xff]
    %v1375 = vld [vmem:[#allocation8 + $0x830] sm:$0xff]
    %v1376 = vld [vmem:[#allocation8 + $0x838] sm:$0xff]
    %v1377 = vld [vmem:[#allocation8 + $0x840] sm:$0xff]
    %v1378 = vld [vmem:[#allocation8 + $0x848] sm:$0xff]
    %v1379 = vld [vmem:[#allocation8 + $0x850] sm:$0xff]
    %v1380 = vld [vmem:[#allocation8 + $0x858] sm:$0xff]
    %v1381 = vld [vmem:[#allocation8 + $0x860] sm:$0xff]
    %v1382 = vld [vmem:[#allocation8 + $0x868] sm:$0xff]
    %v1383 = vld [vmem:[#allocation8 + $0x870] sm:$0xff]
    %v1384 = vld [vmem:[#allocation8 + $0x878] sm:$0xff]
    %v1385 = vld [vmem:[#allocation8 + $0x880] sm:$0xff]
    %v1386 = vld [vmem:[#allocation8 + $0x888] sm:$0xff]
    %v1387 = vld [vmem:[#allocation8 + $0x890] sm:$0xff]
    %v1388 = vld [vmem:[#allocation8 + $0x898] sm:$0xff]
    %v1389 = vld [vmem:[#allocation8 + $0x8a0] sm:$0xff]
    %v1390 = vld [vmem:[#allocation8 + $0x8a8] sm:$0xff]
    %v1391 = vld [vmem:[#allocation8 + $0x8b0] sm:$0xff]
    %v1392 = vld [vmem:[#allocation8 + $0x8b8] sm:$0xff]
    %v1393 = vld [vmem:[#allocation8 + $0x8c0] sm:$0xff]
    %v1394 = vld [vmem:[#allocation8 + $0x8c8] sm:$0xff]
    %v1395 = vld [vmem:[#allocation8 + $0x8d0] sm:$0xff]
    %v1396 = vld [vmem:[#allocation8 + $0x8d8] sm:$0xff]
    %v1397 = vld [vmem:[#allocation8 + $0x8e0] sm:$0xff]
    %v1398 = vld [vmem:[#allocation8 + $0x8e8] sm:$0xff]
    %v1399 = vld [vmem:[#allocation8 + $0x8f0] sm:$0xff]
    %v1400 = vld [vmem:[#allocation8 + $0x8f8] sm:$0xff]
    %v1401 = vld [vmem:[#allocation8 + $0x900] sm:$0xff]
    %v1402 = vld [vmem:[#allocation8 + $0x908] sm:$0xff]
    %v1403 = vld [vmem:[#allocation8 + $0x910] sm:$0xff]
    %v1404 = vld [vmem:[#allocation8 + $0x918] sm:$0xff]
    %v1405 = vld [vmem:[#allocation8 + $0x920] sm:$0xff]
    %v1406 = vld [vmem:[#allocation8 + $0x928] sm:$0xff]
    %v1407 = vld [vmem:[#allocation8 + $0x930] sm:$0xff]
    %v1408 = vld [vmem:[#allocation8 + $0x938] sm:$0xff]
    %v1409 = vld [vmem:[#allocation8 + $0x940] sm:$0xff]
    %v1410 = vld [vmem:[#allocation8 + $0x948] sm:$0xff]
    %v1411 = vld [vmem:[#allocation8 + $0x950] sm:$0xff]
    %v1412 = vld [vmem:[#allocation8 + $0x958] sm:$0xff]
    %v1413 = vld [vmem:[#allocation8 + $0x960] sm:$0xff]
    %v1414 = vld [vmem:[#allocation8 + $0x968] sm:$0xff]
    %v1415 = vld [vmem:[#allocation8 + $0x970] sm:$0xff]
    %v1416 = vld [vmem:[#allocation8 + $0x978] sm:$0xff]
    %v1417 = vld [vmem:[#allocation8 + $0x980] sm:$0xff]
    %v1418 = vld [vmem:[#allocation8 + $0x988] sm:$0xff]
    %v1419 = vld [vmem:[#allocation8 + $0x990] sm:$0xff]
    %v1420 = vld [vmem:[#allocation8 + $0x998] sm:$0xff]
    %v1421 = vld [vmem:[#allocation8 + $0x9a0] sm:$0xff]
    %v1422 = vld [vmem:[#allocation8 + $0x9a8] sm:$0xff]
    %v1423 = vld [vmem:[#allocation8 + $0x9b0] sm:$0xff]
    %v1424 = vld [vmem:[#allocation8 + $0x9b8] sm:$0xff]
    %v1425 = vld [vmem:[#allocation8 + $0x9c0] sm:$0xff]
    %v1426 = vld [vmem:[#allocation8 + $0x9c8] sm:$0xff]
    %v1427 = vld [vmem:[#allocation8 + $0x9d0] sm:$0xff]
    %v1428 = vld [vmem:[#allocation8 + $0x9d8] sm:$0xff]
    %v1429 = vld [vmem:[#allocation8 + $0x9e0] sm:$0xff]
    %v1430 = vld [vmem:[#allocation8 + $0x9e8] sm:$0xff]
    %v1431 = vld [vmem:[#allocation8 + $0x9f0] sm:$0xff]
    %v1432 = vld [vmem:[#allocation8 + $0x9f8] sm:$0xff]
    %v1433 = vld [vmem:[#allocation8 + $0xa00] sm:$0xff]
    %v1434 = vld [vmem:[#allocation8 + $0xa08] sm:$0xff]
    %v1435 = vld [vmem:[#allocation8 + $0xa10] sm:$0xff]
    %v1436 = vld [vmem:[#allocation8 + $0xa18] sm:$0xff]
    %v1437 = vld [vmem:[#allocation8 + $0xa20] sm:$0xff]
    %v1438 = vld [vmem:[#allocation8 + $0xa28] sm:$0xff]
    %v1439 = vld [vmem:[#allocation8 + $0xa30] sm:$0xff]
    %v1440 = vld [vmem:[#allocation8 + $0xa38] sm:$0xff]
    %v1441 = vld [vmem:[#allocation8 + $0xa40] sm:$0xff]
    %v1442 = vld [vmem:[#allocation8 + $0xa48] sm:$0xff]
    %v1443 = vld [vmem:[#allocation8 + $0xa50] sm:$0xff]
    %v1444 = vld [vmem:[#allocation8 + $0xa58] sm:$0xff]
    %v1445 = vld [vmem:[#allocation8 + $0xa60] sm:$0xff]
    %v1446 = vld [vmem:[#allocation8 + $0xa68] sm:$0xff]
    %v1447 = vld [vmem:[#allocation8 + $0xa70] sm:$0xff]
    %v1448 = vld [vmem:[#allocation8 + $0xa78] sm:$0xff]
    %v1449 = vld [vmem:[#allocation8 + $0xa80] sm:$0xff]
    %v1450 = vld [vmem:[#allocation8 + $0xa88] sm:$0xff]
    %v1451 = vld [vmem:[#allocation8 + $0xa90] sm:$0xff]
    %v1452 = vld [vmem:[#allocation8 + $0xa98] sm:$0xff]
    %v1453 = vld [vmem:[#allocation8 + $0xaa0] sm:$0xff]
    %v1454 = vld [vmem:[#allocation8 + $0xaa8] sm:$0xff]
    %v1455 = vld [vmem:[#allocation8 + $0xab0] sm:$0xff]
    %v1456 = vld [vmem:[#allocation8 + $0xab8] sm:$0xff]
    %v1457 = vld [vmem:[#allocation8 + $0xac0] sm:$0xff]
    %v1458 = vld [vmem:[#allocation8 + $0xac8] sm:$0xff]
    %v1459 = vld [vmem:[#allocation8 + $0xad0] sm:$0xff]
    %v1460 = vld [vmem:[#allocation8 + $0xad8] sm:$0xff]
    %v1461 = vld [vmem:[#allocation8 + $0xae0] sm:$0xff]
    %v1462 = vld [vmem:[#allocation8 + $0xae8] sm:$0xff]
    %v1463 = vld [vmem:[#allocation8 + $0xaf0] sm:$0xff]
    %v1464 = vld [vmem:[#allocation8 + $0xaf8] sm:$0xff]
    %v1465 = vld [vmem:[#allocation8 + $0xb00] sm:$0xff]
    %v1466 = vld [vmem:[#allocation8 + $0xb08] sm:$0xff]
    %v1467 = vld [vmem:[#allocation8 + $0xb10] sm:$0xff]
    %v1468 = vld [vmem:[#allocation8 + $0xb18] sm:$0xff]
    %v1469 = vld [vmem:[#allocation8 + $0xb20] sm:$0xff]
    %v1470 = vld [vmem:[#allocation8 + $0xb28] sm:$0xff]
    %v1471 = vld [vmem:[#allocation8 + $0xb30] sm:$0xff]
    %v1472 = vld [vmem:[#allocation8 + $0xb38] sm:$0xff]
    %v1473 = vld [vmem:[#allocation8 + $0xb40] sm:$0xff]
    %v1474 = vld [vmem:[#allocation8 + $0xb48] sm:$0xff]
    %v1475 = vld [vmem:[#allocation8 + $0xb50] sm:$0xff]
    %v1476 = vld [vmem:[#allocation8 + $0xb58] sm:$0xff]
    %v1477 = vld [vmem:[#allocation8 + $0xb60] sm:$0xff]
    %v1478 = vld [vmem:[#allocation8 + $0xb68] sm:$0xff]
    %v1479 = vld [vmem:[#allocation8 + $0xb70] sm:$0xff]
    %v1480 = vld [vmem:[#allocation8 + $0xb78] sm:$0xff]
    %v1481 = vld [vmem:[#allocation8 + $0xb80] sm:$0xff]
    %v1482 = vld [vmem:[#allocation8 + $0xb88] sm:$0xff]
    %v1483 = vld [vmem:[#allocation8 + $0xb90] sm:$0xff]
    %v1484 = vld [vmem:[#allocation8 + $0xb98] sm:$0xff]
    %v1485 = vld [vmem:[#allocation8 + $0xba0] sm:$0xff]
    %v1486 = vld [vmem:[#allocation8 + $0xba8] sm:$0xff]
    %v1487 = vld [vmem:[#allocation8 + $0xbb0] sm:$0xff]
    %v1488 = vld [vmem:[#allocation8 + $0xbb8] sm:$0xff]
    %v1489 = vld [vmem:[#allocation8 + $0xbc0] sm:$0xff]
    %v1490 = vld [vmem:[#allocation8 + $0xbc8] sm:$0xff]
    %v1491 = vld [vmem:[#allocation8 + $0xbd0] sm:$0xff]
    %v1492 = vld [vmem:[#allocation8 + $0xbd8] sm:$0xff]
    %v1493 = vld [vmem:[#allocation8 + $0xbe0] sm:$0xff]
    %v1494 = vld [vmem:[#allocation8 + $0xbe8] sm:$0xff]
    %v1495 = vld [vmem:[#allocation8 + $0xbf0] sm:$0xff]
    %v1496 = vld [vmem:[#allocation8 + $0xbf8] sm:$0xff]
    %v1497 = vld [vmem:[#allocation8 + $0xc00] sm:$0xff]
    %v1498 = vld [vmem:[#allocation8 + $0xc08] sm:$0xff]
    %v1499 = vld [vmem:[#allocation8 + $0xc10] sm:$0xff]
    %v1500 = vld [vmem:[#allocation8 + $0xc18] sm:$0xff]
    %v1501 = vld [vmem:[#allocation8 + $0xc20] sm:$0xff]
    %v1502 = vld [vmem:[#allocation8 + $0xc28] sm:$0xff]
    %v1503 = vld [vmem:[#allocation8 + $0xc30] sm:$0xff]
    %v1504 = vld [vmem:[#allocation8 + $0xc38] sm:$0xff]
    %v1505 = vld [vmem:[#allocation8 + $0xc40] sm:$0xff]
    %v1506 = vld [vmem:[#allocation8 + $0xc48] sm:$0xff]
    %v1507 = vld [vmem:[#allocation8 + $0xc50] sm:$0xff]
    %v1508 = vld [vmem:[#allocation8 + $0xc58] sm:$0xff]
    %v1509 = vld [vmem:[#allocation8 + $0xc60] sm:$0xff]
    %v1510 = vld [vmem:[#allocation8 + $0xc68] sm:$0xff]
    %v1511 = vld [vmem:[#allocation8 + $0xc70] sm:$0xff]
    %v1512 = vld [vmem:[#allocation8 + $0xc78] sm:$0xff]
    %v1513 = vld [vmem:[#allocation8 + $0xc80] sm:$0xff]
    %v1514 = vld [vmem:[#allocation8 + $0xc88] sm:$0xff]
    %v1515 = vld [vmem:[#allocation8 + $0xc90] sm:$0xff]
    %v1516 = vld [vmem:[#allocation8 + $0xc98] sm:$0xff]
    %v1517 = vld [vmem:[#allocation8 + $0xca0] sm:$0xff]
    %v1518 = vld [vmem:[#allocation8 + $0xca8] sm:$0xff]
    %v1519 = vld [vmem:[#allocation8 + $0xcb0] sm:$0xff]
    %v1520 = vld [vmem:[#allocation8 + $0xcb8] sm:$0xff]
    %v1521 = vld [vmem:[#allocation8 + $0xcc0] sm:$0xff]
    %v1522 = vld [vmem:[#allocation8 + $0xcc8] sm:$0xff]
    %v1523 = vld [vmem:[#allocation8 + $0xcd0] sm:$0xff]
    %v1524 = vld [vmem:[#allocation8 + $0xcd8] sm:$0xff]
    %v1525 = vld [vmem:[#allocation8 + $0xce0] sm:$0xff]
    %v1526 = vld [vmem:[#allocation8 + $0xce8] sm:$0xff]
    %v1527 = vld [vmem:[#allocation8 + $0xcf0] sm:$0xff]
    %v1528 = vld [vmem:[#allocation8 + $0xcf8] sm:$0xff]
    %v1529 = vld [vmem:[#allocation8 + $0xd00] sm:$0xff]
    %v1530 = vld [vmem:[#allocation8 + $0xd08] sm:$0xff]
    %v1531 = vld [vmem:[#allocation8 + $0xd10] sm:$0xff]
    %v1532 = vld [vmem:[#allocation8 + $0xd18] sm:$0xff]
    %v1533 = vld [vmem:[#allocation8 + $0xd20] sm:$0xff]
    %v1534 = vld [vmem:[#allocation8 + $0xd28] sm:$0xff]
    %v1535 = vld [vmem:[#allocation8 + $0xd30] sm:$0xff]
    %v1536 = vld [vmem:[#allocation8 + $0xd38] sm:$0xff]
    %v1537 = vld [vmem:[#allocation8 + $0xd40] sm:$0xff]
    %v1538 = vld [vmem:[#allocation8 + $0xd48] sm:$0xff]
    %v1539 = vld [vmem:[#allocation8 + $0xd50] sm:$0xff]
    %v1540 = vld [vmem:[#allocation8 + $0xd58] sm:$0xff]
    %v1541 = vld [vmem:[#allocation8 + $0xd60] sm:$0xff]
    %v1542 = vld [vmem:[#allocation8 + $0xd68] sm:$0xff]
    %v1543 = vld [vmem:[#allocation8 + $0xd70] sm:$0xff]
    %v1544 = vld [vmem:[#allocation8 + $0xd78] sm:$0xff]
    %v1545 = vld [vmem:[#allocation8 + $0xd80] sm:$0xff]
    %v1546 = vld [vmem:[#allocation8 + $0xd88] sm:$0xff]
    %v1547 = vld [vmem:[#allocation8 + $0xd90] sm:$0xff]
    %v1548 = vld [vmem:[#allocation8 + $0xd98] sm:$0xff]
    %v1549 = vld [vmem:[#allocation8 + $0xda0] sm:$0xff]
    %v1550 = vld [vmem:[#allocation8 + $0xda8] sm:$0xff]
    %v1551 = vld [vmem:[#allocation8 + $0xdb0] sm:$0xff]
    %v1552 = vld [vmem:[#allocation8 + $0xdb8] sm:$0xff]
    %v1553 = vld [vmem:[#allocation8 + $0xdc0] sm:$0xff]
    %v1554 = vld [vmem:[#allocation8 + $0xdc8] sm:$0xff]
    %v1555 = vld [vmem:[#allocation8 + $0xdd0] sm:$0xff]
    %v1556 = vld [vmem:[#allocation8 + $0xdd8] sm:$0xff]
    %v1557 = vld [vmem:[#allocation8 + $0xde0] sm:$0xff]
    %v1558 = vld [vmem:[#allocation8 + $0xde8] sm:$0xff]
    %v1559 = vld [vmem:[#allocation8 + $0xdf0] sm:$0xff]
    %v1560 = vld [vmem:[#allocation8 + $0xdf8] sm:$0xff]
    %v1561 = vld [vmem:[#allocation8 + $0xe00] sm:$0xff]
    %v1562 = vld [vmem:[#allocation8 + $0xe08] sm:$0xff]
    %v1563 = vld [vmem:[#allocation8 + $0xe10] sm:$0xff]
    %v1564 = vld [vmem:[#allocation8 + $0xe18] sm:$0xff]
    %v1565 = vld [vmem:[#allocation8 + $0xe20] sm:$0xff]
    %v1566 = vld [vmem:[#allocation8 + $0xe28] sm:$0xff]
    %v1567 = vld [vmem:[#allocation8 + $0xe30] sm:$0xff]
    %v1568 = vld [vmem:[#allocation8 + $0xe38] sm:$0xff]
    %v1569 = vld [vmem:[#allocation8 + $0xe40] sm:$0xff]
    %v1570 = vld [vmem:[#allocation8 + $0xe48] sm:$0xff]
    %v1571 = vld [vmem:[#allocation8 + $0xe50] sm:$0xff]
    %v1572 = vld [vmem:[#allocation8 + $0xe58] sm:$0xff]
    %v1573 = vld [vmem:[#allocation8 + $0xe60] sm:$0xff]
    %v1574 = vld [vmem:[#allocation8 + $0xe68] sm:$0xff]
    %v1575 = vld [vmem:[#allocation8 + $0xe70] sm:$0xff]
    %v1576 = vld [vmem:[#allocation8 + $0xe78] sm:$0xff]
    %v1577 = vld [vmem:[#allocation8 + $0xe80] sm:$0xff]
    %v1578 = vld [vmem:[#allocation8 + $0xe88] sm:$0xff]
    %v1579 = vld [vmem:[#allocation8 + $0xe90] sm:$0xff]
    %v1580 = vld [vmem:[#allocation8 + $0xe98] sm:$0xff]
    %v1581 = vld [vmem:[#allocation8 + $0xea0] sm:$0xff]
    %v1582 = vld [vmem:[#allocation8 + $0xea8] sm:$0xff]
    %v1583 = vld [vmem:[#allocation8 + $0xeb0] sm:$0xff]
    %v1584 = vld [vmem:[#allocation8 + $0xeb8] sm:$0xff]
    %v1585 = vld [vmem:[#allocation8 + $0xec0] sm:$0xff]
    %v1586 = vld [vmem:[#allocation8 + $0xec8] sm:$0xff]
    %v1587 = vld [vmem:[#allocation8 + $0xed0] sm:$0xff]
    %v1588 = vld [vmem:[#allocation8 + $0xed8] sm:$0xff]
    %v1589 = vld [vmem:[#allocation8 + $0xee0] sm:$0xff]
    %v1590 = vld [vmem:[#allocation8 + $0xee8] sm:$0xff]
    %v1591 = vld [vmem:[#allocation8 + $0xef0] sm:$0xff]
    %v1592 = vld [vmem:[#allocation8 + $0xef8] sm:$0xff]
    %v1593 = vld [vmem:[#allocation8 + $0xf00] sm:$0xff]
    %v1594 = vld [vmem:[#allocation8 + $0xf08] sm:$0xff]
    %v1595 = vld [vmem:[#allocation8 + $0xf10] sm:$0xff]
    %v1596 = vld [vmem:[#allocation8 + $0xf18] sm:$0xff]
    %v1597 = vld [vmem:[#allocation8 + $0xf20] sm:$0xff]
    %v1598 = vld [vmem:[#allocation8 + $0xf28] sm:$0xff]
    %v1599 = vld [vmem:[#allocation8 + $0xf30] sm:$0xff]
    %v1600 = vld [vmem:[#allocation8 + $0xf38] sm:$0xff]
    %v1601 = vld [vmem:[#allocation8 + $0xf40] sm:$0xff]
    %v1602 = vld [vmem:[#allocation8 + $0xf48] sm:$0xff]
    %v1603 = vld [vmem:[#allocation8 + $0xf50] sm:$0xff]
    %v1604 = vld [vmem:[#allocation8 + $0xf58] sm:$0xff]
    %v1605 = vld [vmem:[#allocation8 + $0xf60] sm:$0xff]
    %v1606 = vld [vmem:[#allocation8 + $0xf68] sm:$0xff]
    %v1607 = vld [vmem:[#allocation8 + $0xf70] sm:$0xff]
    %v1608 = vld [vmem:[#allocation8 + $0xf78] sm:$0xff]
    %v1609 = vld [vmem:[#allocation8 + $0xf80] sm:$0xff]
    %v1610 = vld [vmem:[#allocation8 + $0xf88] sm:$0xff]
    %v1611 = vld [vmem:[#allocation8 + $0xf90] sm:$0xff]
    %v1612 = vld [vmem:[#allocation8 + $0xf98] sm:$0xff]
    %v1613 = vld [vmem:[#allocation8 + $0xfa0] sm:$0xff]
    %v1614 = vld [vmem:[#allocation8 + $0xfa8] sm:$0xff]
    %v1615 = vld [vmem:[#allocation8 + $0xfb0] sm:$0xff]
    %v1616 = vld [vmem:[#allocation8 + $0xfb8] sm:$0xff]
    %v1617 = vld [vmem:[#allocation8 + $0xfc0] sm:$0xff]
    %v1618 = vld [vmem:[#allocation8 + $0xfc8] sm:$0xff]
    %v1619 = vld [vmem:[#allocation8 + $0xfd0] sm:$0xff]
    %v1620 = vld [vmem:[#allocation8 + $0xfd8] sm:$0xff]
    %v1621 = vld [vmem:[#allocation8 + $0xfe0] sm:$0xff]
    %v1622 = vld [vmem:[#allocation8 + $0xfe8] sm:$0xff]
    %v1623 = vld [vmem:[#allocation8 + $0xff0] sm:$0xff]
    %v1624 = vld [vmem:[#allocation8 + $0xff8] sm:$0xff]
    %v1625 = vld [vmem:[#allocation10] sm:$0xff]
    %v1627 = vlaneseq
    %v1628 = vshrl.u32 %v1627, 7
    %v1629 = vsub.s32 0, %v1628
    %v1630 = vrot.slane %v1625, %v1629
    %v1631 = vlaneseq
    %v1632 = vshrl.u32 %v1631, 7
    %v1633 = vsub.s32 1, %v1632
    %v1634 = vrot.slane %v1625, %v1633
    %v1635 = vlaneseq
    %v1636 = vshrl.u32 %v1635, 7
    %v1637 = vsub.s32 2, %v1636
    %v1638 = vrot.slane %v1625, %v1637
    %v1639 = vlaneseq
    %v1640 = vshrl.u32 %v1639, 7
    %v1641 = vsub.s32 3, %v1640
    %v1642 = vrot.slane %v1625, %v1641
    %v1643 = vlaneseq
    %v1644 = vshrl.u32 %v1643, 7
    %v1645 = vsub.s32 4, %v1644
    %v1646 = vrot.slane %v1625, %v1645
    %v1647 = vlaneseq
    %v1648 = vshrl.u32 %v1647, 7
    %v1649 = vsub.s32 5, %v1648
    %v1650 = vrot.slane %v1625, %v1649
    %v1651 = vlaneseq
    %v1652 = vshrl.u32 %v1651, 7
    %v1653 = vsub.s32 6, %v1652
    %v1654 = vrot.slane %v1625, %v1653
    %v1655 = vlaneseq
    %v1656 = vshrl.u32 %v1655, 7
    %v1657 = vsub.s32 7, %v1656
    %v1658 = vrot.slane %v1625, %v1657
    %v2179 = vunpack.c.l.b16 %v1113
    %v2180 = vunpack.c.h.b16 %v1113
    %v2181 = vunpack.c.l.b16 %v1114
    %v2182 = vunpack.c.h.b16 %v1114
    %v2183 = vunpack.c.l.b16 %v1115
    %v2184 = vunpack.c.h.b16 %v1115
    %v2185 = vunpack.c.l.b16 %v1116
    %v2186 = vunpack.c.h.b16 %v1116
    %v2187 = vunpack.c.l.b16 %v1117
    %v2188 = vunpack.c.h.b16 %v1117
    %v2189 = vunpack.c.l.b16 %v1118
    %v2190 = vunpack.c.h.b16 %v1118
    %v2191 = vunpack.c.l.b16 %v1119
    %v2192 = vunpack.c.h.b16 %v1119
    %v2193 = vunpack.c.l.b16 %v1120
    %v2194 = vunpack.c.h.b16 %v1120
    %v2195 = vunpack.c.l.b16 %v1121
    %v2196 = vunpack.c.h.b16 %v1121
    %v2197 = vunpack.c.l.b16 %v1122
    %v2198 = vunpack.c.h.b16 %v1122
    %v2199 = vunpack.c.l.b16 %v1123
    %v2200 = vunpack.c.h.b16 %v1123
    %v2201 = vunpack.c.l.b16 %v1124
    %v2202 = vunpack.c.h.b16 %v1124
    %v2203 = vunpack.c.l.b16 %v1125
    %v2204 = vunpack.c.h.b16 %v1125
    %v2205 = vunpack.c.l.b16 %v1126
    %v2206 = vunpack.c.h.b16 %v1126
    %v2207 = vunpack.c.l.b16 %v1127
    %v2208 = vunpack.c.h.b16 %v1127
    %v2209 = vunpack.c.l.b16 %v1128
    %v2210 = vunpack.c.h.b16 %v1128
    %v2211 = vunpack.c.l.b16 %v1129
    %v2212 = vunpack.c.h.b16 %v1129
    %v2213 = vunpack.c.l.b16 %v1130
    %v2214 = vunpack.c.h.b16 %v1130
    %v2215 = vunpack.c.l.b16 %v1131
    %v2216 = vunpack.c.h.b16 %v1131
    %v2217 = vunpack.c.l.b16 %v1132
    %v2218 = vunpack.c.h.b16 %v1132
    %v2219 = vunpack.c.l.b16 %v1133
    %v2220 = vunpack.c.h.b16 %v1133
    %v2221 = vunpack.c.l.b16 %v1134
    %v2222 = vunpack.c.h.b16 %v1134
    %v2223 = vunpack.c.l.b16 %v1135
    %v2224 = vunpack.c.h.b16 %v1135
    %v2225 = vunpack.c.l.b16 %v1136
    %v2226 = vunpack.c.h.b16 %v1136
    %v2227 = vunpack.c.l.b16 %v1137
    %v2228 = vunpack.c.h.b16 %v1137
    %v2229 = vunpack.c.l.b16 %v1138
    %v2230 = vunpack.c.h.b16 %v1138
    %v2231 = vunpack.c.l.b16 %v1139
    %v2232 = vunpack.c.h.b16 %v1139
    %v2233 = vunpack.c.l.b16 %v1140
    %v2234 = vunpack.c.h.b16 %v1140
    %v2235 = vunpack.c.l.b16 %v1141
    %v2236 = vunpack.c.h.b16 %v1141
    %v2237 = vunpack.c.l.b16 %v1142
    %v2238 = vunpack.c.h.b16 %v1142
    %v2239 = vunpack.c.l.b16 %v1143
    %v2240 = vunpack.c.h.b16 %v1143
    %v2241 = vunpack.c.l.b16 %v1144
    %v2242 = vunpack.c.h.b16 %v1144
    %v2243 = vunpack.c.l.b16 %v1145
    %v2244 = vunpack.c.h.b16 %v1145
    %v2245 = vunpack.c.l.b16 %v1146
    %v2246 = vunpack.c.h.b16 %v1146
    %v2247 = vunpack.c.l.b16 %v1147
    %v2248 = vunpack.c.h.b16 %v1147
    %v2249 = vunpack.c.l.b16 %v1148
    %v2250 = vunpack.c.h.b16 %v1148
    %v2251 = vunpack.c.l.b16 %v1149
    %v2252 = vunpack.c.h.b16 %v1149
    %v2253 = vunpack.c.l.b16 %v1150
    %v2254 = vunpack.c.h.b16 %v1150
    %v2255 = vunpack.c.l.b16 %v1151
    %v2256 = vunpack.c.h.b16 %v1151
    %v2257 = vunpack.c.l.b16 %v1152
    %v2258 = vunpack.c.h.b16 %v1152
    %v2259 = vunpack.c.l.b16 %v1153
    %v2260 = vunpack.c.h.b16 %v1153
    %v2261 = vunpack.c.l.b16 %v1154
    %v2262 = vunpack.c.h.b16 %v1154
    %v2263 = vunpack.c.l.b16 %v1155
    %v2264 = vunpack.c.h.b16 %v1155
    %v2265 = vunpack.c.l.b16 %v1156
    %v2266 = vunpack.c.h.b16 %v1156
    %v2267 = vunpack.c.l.b16 %v1157
    %v2268 = vunpack.c.h.b16 %v1157
    %v2269 = vunpack.c.l.b16 %v1158
    %v2270 = vunpack.c.h.b16 %v1158
    %v2271 = vunpack.c.l.b16 %v1159
    %v2272 = vunpack.c.h.b16 %v1159
    %v2273 = vunpack.c.l.b16 %v1160
    %v2274 = vunpack.c.h.b16 %v1160
    %v2275 = vunpack.c.l.b16 %v1161
    %v2276 = vunpack.c.h.b16 %v1161
    %v2277 = vunpack.c.l.b16 %v1162
    %v2278 = vunpack.c.h.b16 %v1162
    %v2279 = vunpack.c.l.b16 %v1163
    %v2280 = vunpack.c.h.b16 %v1163
    %v2281 = vunpack.c.l.b16 %v1164
    %v2282 = vunpack.c.h.b16 %v1164
    %v2283 = vunpack.c.l.b16 %v1165
    %v2284 = vunpack.c.h.b16 %v1165
    %v2285 = vunpack.c.l.b16 %v1166
    %v2286 = vunpack.c.h.b16 %v1166
    %v2287 = vunpack.c.l.b16 %v1167
    %v2288 = vunpack.c.h.b16 %v1167
    %v2289 = vunpack.c.l.b16 %v1168
    %v2290 = vunpack.c.h.b16 %v1168
    %v2291 = vunpack.c.l.b16 %v1169
    %v2292 = vunpack.c.h.b16 %v1169
    %v2293 = vunpack.c.l.b16 %v1170
    %v2294 = vunpack.c.h.b16 %v1170
    %v2295 = vunpack.c.l.b16 %v1171
    %v2296 = vunpack.c.h.b16 %v1171
    %v2297 = vunpack.c.l.b16 %v1172
    %v2298 = vunpack.c.h.b16 %v1172
    %v2299 = vunpack.c.l.b16 %v1173
    %v2300 = vunpack.c.h.b16 %v1173
    %v2301 = vunpack.c.l.b16 %v1174
    %v2302 = vunpack.c.h.b16 %v1174
    %v2303 = vunpack.c.l.b16 %v1175
    %v2304 = vunpack.c.h.b16 %v1175
    %v2305 = vunpack.c.l.b16 %v1176
    %v2306 = vunpack.c.h.b16 %v1176
    %v2307 = vunpack.c.l.b16 %v1177
    %v2308 = vunpack.c.h.b16 %v1177
    %v2309 = vunpack.c.l.b16 %v1178
    %v2310 = vunpack.c.h.b16 %v1178
    %v2311 = vunpack.c.l.b16 %v1179
    %v2312 = vunpack.c.h.b16 %v1179
    %v2313 = vunpack.c.l.b16 %v1180
    %v2314 = vunpack.c.h.b16 %v1180
    %v2315 = vunpack.c.l.b16 %v1181
    %v2316 = vunpack.c.h.b16 %v1181
    %v2317 = vunpack.c.l.b16 %v1182
    %v2318 = vunpack.c.h.b16 %v1182
    %v2319 = vunpack.c.l.b16 %v1183
    %v2320 = vunpack.c.h.b16 %v1183
    %v2321 = vunpack.c.l.b16 %v1184
    %v2322 = vunpack.c.h.b16 %v1184
    %v2323 = vunpack.c.l.b16 %v1185
    %v2324 = vunpack.c.h.b16 %v1185
    %v2325 = vunpack.c.l.b16 %v1186
    %v2326 = vunpack.c.h.b16 %v1186
    %v2327 = vunpack.c.l.b16 %v1187
    %v2328 = vunpack.c.h.b16 %v1187
    %v2329 = vunpack.c.l.b16 %v1188
    %v2330 = vunpack.c.h.b16 %v1188
    %v2331 = vunpack.c.l.b16 %v1189
    %v2332 = vunpack.c.h.b16 %v1189
    %v2333 = vunpack.c.l.b16 %v1190
    %v2334 = vunpack.c.h.b16 %v1190
    %v2335 = vunpack.c.l.b16 %v1191
    %v2336 = vunpack.c.h.b16 %v1191
    %v2337 = vunpack.c.l.b16 %v1192
    %v2338 = vunpack.c.h.b16 %v1192
    %v2339 = vunpack.c.l.b16 %v1193
    %v2340 = vunpack.c.h.b16 %v1193
    %v2341 = vunpack.c.l.b16 %v1194
    %v2342 = vunpack.c.h.b16 %v1194
    %v2343 = vunpack.c.l.b16 %v1195
    %v2344 = vunpack.c.h.b16 %v1195
    %v2345 = vunpack.c.l.b16 %v1196
    %v2346 = vunpack.c.h.b16 %v1196
    %v2347 = vunpack.c.l.b16 %v1197
    %v2348 = vunpack.c.h.b16 %v1197
    %v2349 = vunpack.c.l.b16 %v1198
    %v2350 = vunpack.c.h.b16 %v1198
    %v2351 = vunpack.c.l.b16 %v1199
    %v2352 = vunpack.c.h.b16 %v1199
    %v2353 = vunpack.c.l.b16 %v1200
    %v2354 = vunpack.c.h.b16 %v1200
    %v2355 = vunpack.c.l.b16 %v1201
    %v2356 = vunpack.c.h.b16 %v1201
    %v2357 = vunpack.c.l.b16 %v1202
    %v2358 = vunpack.c.h.b16 %v1202
    %v2359 = vunpack.c.l.b16 %v1203
    %v2360 = vunpack.c.h.b16 %v1203
    %v2361 = vunpack.c.l.b16 %v1204
    %v2362 = vunpack.c.h.b16 %v1204
    %v2363 = vunpack.c.l.b16 %v1205
    %v2364 = vunpack.c.h.b16 %v1205
    %v2365 = vunpack.c.l.b16 %v1206
    %v2366 = vunpack.c.h.b16 %v1206
    %v2367 = vunpack.c.l.b16 %v1207
    %v2368 = vunpack.c.h.b16 %v1207
    %v2369 = vunpack.c.l.b16 %v1208
    %v2370 = vunpack.c.h.b16 %v1208
    %v2371 = vunpack.c.l.b16 %v1209
    %v2372 = vunpack.c.h.b16 %v1209
    %v2373 = vunpack.c.l.b16 %v1210
    %v2374 = vunpack.c.h.b16 %v1210
    %v2375 = vunpack.c.l.b16 %v1211
    %v2376 = vunpack.c.h.b16 %v1211
    %v2377 = vunpack.c.l.b16 %v1212
    %v2378 = vunpack.c.h.b16 %v1212
    %v2379 = vunpack.c.l.b16 %v1213
    %v2380 = vunpack.c.h.b16 %v1213
    %v2381 = vunpack.c.l.b16 %v1214
    %v2382 = vunpack.c.h.b16 %v1214
    %v2383 = vunpack.c.l.b16 %v1215
    %v2384 = vunpack.c.h.b16 %v1215
    %v2385 = vunpack.c.l.b16 %v1216
    %v2386 = vunpack.c.h.b16 %v1216
    %v2387 = vunpack.c.l.b16 %v1217
    %v2388 = vunpack.c.h.b16 %v1217
    %v2389 = vunpack.c.l.b16 %v1218
    %v2390 = vunpack.c.h.b16 %v1218
    %v2391 = vunpack.c.l.b16 %v1219
    %v2392 = vunpack.c.h.b16 %v1219
    %v2393 = vunpack.c.l.b16 %v1220
    %v2394 = vunpack.c.h.b16 %v1220
    %v2395 = vunpack.c.l.b16 %v1221
    %v2396 = vunpack.c.h.b16 %v1221
    %v2397 = vunpack.c.l.b16 %v1222
    %v2398 = vunpack.c.h.b16 %v1222
    %v2399 = vunpack.c.l.b16 %v1223
    %v2400 = vunpack.c.h.b16 %v1223
    %v2401 = vunpack.c.l.b16 %v1224
    %v2402 = vunpack.c.h.b16 %v1224
    %v2403 = vunpack.c.l.b16 %v1225
    %v2404 = vunpack.c.h.b16 %v1225
    %v2405 = vunpack.c.l.b16 %v1226
    %v2406 = vunpack.c.h.b16 %v1226
    %v2407 = vunpack.c.l.b16 %v1227
    %v2408 = vunpack.c.h.b16 %v1227
    %v2409 = vunpack.c.l.b16 %v1228
    %v2410 = vunpack.c.h.b16 %v1228
    %v2411 = vunpack.c.l.b16 %v1229
    %v2412 = vunpack.c.h.b16 %v1229
    %v2413 = vunpack.c.l.b16 %v1230
    %v2414 = vunpack.c.h.b16 %v1230
    %v2415 = vunpack.c.l.b16 %v1231
    %v2416 = vunpack.c.h.b16 %v1231
    %v2417 = vunpack.c.l.b16 %v1232
    %v2418 = vunpack.c.h.b16 %v1232
    %v2419 = vunpack.c.l.b16 %v1233
    %v2420 = vunpack.c.h.b16 %v1233
    %v2421 = vunpack.c.l.b16 %v1234
    %v2422 = vunpack.c.h.b16 %v1234
    %v2423 = vunpack.c.l.b16 %v1235
    %v2424 = vunpack.c.h.b16 %v1235
    %v2425 = vunpack.c.l.b16 %v1236
    %v2426 = vunpack.c.h.b16 %v1236
    %v2427 = vunpack.c.l.b16 %v1237
    %v2428 = vunpack.c.h.b16 %v1237
    %v2429 = vunpack.c.l.b16 %v1238
    %v2430 = vunpack.c.h.b16 %v1238
    %v2431 = vunpack.c.l.b16 %v1239
    %v2432 = vunpack.c.h.b16 %v1239
    %v2433 = vunpack.c.l.b16 %v1240
    %v2434 = vunpack.c.h.b16 %v1240
    %v2435 = vunpack.c.l.b16 %v1241
    %v2436 = vunpack.c.h.b16 %v1241
    %v2437 = vunpack.c.l.b16 %v1242
    %v2438 = vunpack.c.h.b16 %v1242
    %v2439 = vunpack.c.l.b16 %v1243
    %v2440 = vunpack.c.h.b16 %v1243
    %v2441 = vunpack.c.l.b16 %v1244
    %v2442 = vunpack.c.h.b16 %v1244
    %v2443 = vunpack.c.l.b16 %v1245
    %v2444 = vunpack.c.h.b16 %v1245
    %v2445 = vunpack.c.l.b16 %v1246
    %v2446 = vunpack.c.h.b16 %v1246
    %v2447 = vunpack.c.l.b16 %v1247
    %v2448 = vunpack.c.h.b16 %v1247
    %v2449 = vunpack.c.l.b16 %v1248
    %v2450 = vunpack.c.h.b16 %v1248
    %v2451 = vunpack.c.l.b16 %v1249
    %v2452 = vunpack.c.h.b16 %v1249
    %v2453 = vunpack.c.l.b16 %v1250
    %v2454 = vunpack.c.h.b16 %v1250
    %v2455 = vunpack.c.l.b16 %v1251
    %v2456 = vunpack.c.h.b16 %v1251
    %v2457 = vunpack.c.l.b16 %v1252
    %v2458 = vunpack.c.h.b16 %v1252
    %v2459 = vunpack.c.l.b16 %v1253
    %v2460 = vunpack.c.h.b16 %v1253
    %v2461 = vunpack.c.l.b16 %v1254
    %v2462 = vunpack.c.h.b16 %v1254
    %v2463 = vunpack.c.l.b16 %v1255
    %v2464 = vunpack.c.h.b16 %v1255
    %v2465 = vunpack.c.l.b16 %v1256
    %v2466 = vunpack.c.h.b16 %v1256
    %v2467 = vunpack.c.l.b16 %v1257
    %v2468 = vunpack.c.h.b16 %v1257
    %v2469 = vunpack.c.l.b16 %v1258
    %v2470 = vunpack.c.h.b16 %v1258
    %v2471 = vunpack.c.l.b16 %v1259
    %v2472 = vunpack.c.h.b16 %v1259
    %v2473 = vunpack.c.l.b16 %v1260
    %v2474 = vunpack.c.h.b16 %v1260
    %v2475 = vunpack.c.l.b16 %v1261
    %v2476 = vunpack.c.h.b16 %v1261
    %v2477 = vunpack.c.l.b16 %v1262
    %v2478 = vunpack.c.h.b16 %v1262
    %v2479 = vunpack.c.l.b16 %v1263
    %v2480 = vunpack.c.h.b16 %v1263
    %v2481 = vunpack.c.l.b16 %v1264
    %v2482 = vunpack.c.h.b16 %v1264
    %v2483 = vunpack.c.l.b16 %v1265
    %v2484 = vunpack.c.h.b16 %v1265
    %v2485 = vunpack.c.l.b16 %v1266
    %v2486 = vunpack.c.h.b16 %v1266
    %v2487 = vunpack.c.l.b16 %v1267
    %v2488 = vunpack.c.h.b16 %v1267
    %v2489 = vunpack.c.l.b16 %v1268
    %v2490 = vunpack.c.h.b16 %v1268
    %v2491 = vunpack.c.l.b16 %v1269
    %v2492 = vunpack.c.h.b16 %v1269
    %v2493 = vunpack.c.l.b16 %v1270
    %v2494 = vunpack.c.h.b16 %v1270
    %v2495 = vunpack.c.l.b16 %v1271
    %v2496 = vunpack.c.h.b16 %v1271
    %v2497 = vunpack.c.l.b16 %v1272
    %v2498 = vunpack.c.h.b16 %v1272
    %v2499 = vunpack.c.l.b16 %v1273
    %v2500 = vunpack.c.h.b16 %v1273
    %v2501 = vunpack.c.l.b16 %v1274
    %v2502 = vunpack.c.h.b16 %v1274
    %v2503 = vunpack.c.l.b16 %v1275
    %v2504 = vunpack.c.h.b16 %v1275
    %v2505 = vunpack.c.l.b16 %v1276
    %v2506 = vunpack.c.h.b16 %v1276
    %v2507 = vunpack.c.l.b16 %v1277
    %v2508 = vunpack.c.h.b16 %v1277
    %v2509 = vunpack.c.l.b16 %v1278
    %v2510 = vunpack.c.h.b16 %v1278
    %v2511 = vunpack.c.l.b16 %v1279
    %v2512 = vunpack.c.h.b16 %v1279
    %v2513 = vunpack.c.l.b16 %v1280
    %v2514 = vunpack.c.h.b16 %v1280
    %v2515 = vunpack.c.l.b16 %v1281
    %v2516 = vunpack.c.h.b16 %v1281
    %v2517 = vunpack.c.l.b16 %v1282
    %v2518 = vunpack.c.h.b16 %v1282
    %v2519 = vunpack.c.l.b16 %v1283
    %v2520 = vunpack.c.h.b16 %v1283
    %v2521 = vunpack.c.l.b16 %v1284
    %v2522 = vunpack.c.h.b16 %v1284
    %v2523 = vunpack.c.l.b16 %v1285
    %v2524 = vunpack.c.h.b16 %v1285
    %v2525 = vunpack.c.l.b16 %v1286
    %v2526 = vunpack.c.h.b16 %v1286
    %v2527 = vunpack.c.l.b16 %v1287
    %v2528 = vunpack.c.h.b16 %v1287
    %v2529 = vunpack.c.l.b16 %v1288
    %v2530 = vunpack.c.h.b16 %v1288
    %v2531 = vunpack.c.l.b16 %v1289
    %v2532 = vunpack.c.h.b16 %v1289
    %v2533 = vunpack.c.l.b16 %v1290
    %v2534 = vunpack.c.h.b16 %v1290
    %v2535 = vunpack.c.l.b16 %v1291
    %v2536 = vunpack.c.h.b16 %v1291
    %v2537 = vunpack.c.l.b16 %v1292
    %v2538 = vunpack.c.h.b16 %v1292
    %v2539 = vunpack.c.l.b16 %v1293
    %v2540 = vunpack.c.h.b16 %v1293
    %v2541 = vunpack.c.l.b16 %v1294
    %v2542 = vunpack.c.h.b16 %v1294
    %v2543 = vunpack.c.l.b16 %v1295
    %v2544 = vunpack.c.h.b16 %v1295
    %v2545 = vunpack.c.l.b16 %v1296
    %v2546 = vunpack.c.h.b16 %v1296
    %v2547 = vunpack.c.l.b16 %v1297
    %v2548 = vunpack.c.h.b16 %v1297
    %v2549 = vunpack.c.l.b16 %v1298
    %v2550 = vunpack.c.h.b16 %v1298
    %v2551 = vunpack.c.l.b16 %v1299
    %v2552 = vunpack.c.h.b16 %v1299
    %v2553 = vunpack.c.l.b16 %v1300
    %v2554 = vunpack.c.h.b16 %v1300
    %v2555 = vunpack.c.l.b16 %v1301
    %v2556 = vunpack.c.h.b16 %v1301
    %v2557 = vunpack.c.l.b16 %v1302
    %v2558 = vunpack.c.h.b16 %v1302
    %v2559 = vunpack.c.l.b16 %v1303
    %v2560 = vunpack.c.h.b16 %v1303
    %v2561 = vunpack.c.l.b16 %v1304
    %v2562 = vunpack.c.h.b16 %v1304
    %v2563 = vunpack.c.l.b16 %v1305
    %v2564 = vunpack.c.h.b16 %v1305
    %v2565 = vunpack.c.l.b16 %v1306
    %v2566 = vunpack.c.h.b16 %v1306
    %v2567 = vunpack.c.l.b16 %v1307
    %v2568 = vunpack.c.h.b16 %v1307
    %v2569 = vunpack.c.l.b16 %v1308
    %v2570 = vunpack.c.h.b16 %v1308
    %v2571 = vunpack.c.l.b16 %v1309
    %v2572 = vunpack.c.h.b16 %v1309
    %v2573 = vunpack.c.l.b16 %v1310
    %v2574 = vunpack.c.h.b16 %v1310
    %v2575 = vunpack.c.l.b16 %v1311
    %v2576 = vunpack.c.h.b16 %v1311
    %v2577 = vunpack.c.l.b16 %v1312
    %v2578 = vunpack.c.h.b16 %v1312
    %v2579 = vunpack.c.l.b16 %v1313
    %v2580 = vunpack.c.h.b16 %v1313
    %v2581 = vunpack.c.l.b16 %v1314
    %v2582 = vunpack.c.h.b16 %v1314
    %v2583 = vunpack.c.l.b16 %v1315
    %v2584 = vunpack.c.h.b16 %v1315
    %v2585 = vunpack.c.l.b16 %v1316
    %v2586 = vunpack.c.h.b16 %v1316
    %v2587 = vunpack.c.l.b16 %v1317
    %v2588 = vunpack.c.h.b16 %v1317
    %v2589 = vunpack.c.l.b16 %v1318
    %v2590 = vunpack.c.h.b16 %v1318
    %v2591 = vunpack.c.l.b16 %v1319
    %v2592 = vunpack.c.h.b16 %v1319
    %v2593 = vunpack.c.l.b16 %v1320
    %v2594 = vunpack.c.h.b16 %v1320
    %v2595 = vunpack.c.l.b16 %v1321
    %v2596 = vunpack.c.h.b16 %v1321
    %v2597 = vunpack.c.l.b16 %v1322
    %v2598 = vunpack.c.h.b16 %v1322
    %v2599 = vunpack.c.l.b16 %v1323
    %v2600 = vunpack.c.h.b16 %v1323
    %v2601 = vunpack.c.l.b16 %v1324
    %v2602 = vunpack.c.h.b16 %v1324
    %v2603 = vunpack.c.l.b16 %v1325
    %v2604 = vunpack.c.h.b16 %v1325
    %v2605 = vunpack.c.l.b16 %v1326
    %v2606 = vunpack.c.h.b16 %v1326
    %v2607 = vunpack.c.l.b16 %v1327
    %v2608 = vunpack.c.h.b16 %v1327
    %v2609 = vunpack.c.l.b16 %v1328
    %v2610 = vunpack.c.h.b16 %v1328
    %v2611 = vunpack.c.l.b16 %v1329
    %v2612 = vunpack.c.h.b16 %v1329
    %v2613 = vunpack.c.l.b16 %v1330
    %v2614 = vunpack.c.h.b16 %v1330
    %v2615 = vunpack.c.l.b16 %v1331
    %v2616 = vunpack.c.h.b16 %v1331
    %v2617 = vunpack.c.l.b16 %v1332
    %v2618 = vunpack.c.h.b16 %v1332
    %v2619 = vunpack.c.l.b16 %v1333
    %v2620 = vunpack.c.h.b16 %v1333
    %v2621 = vunpack.c.l.b16 %v1334
    %v2622 = vunpack.c.h.b16 %v1334
    %v2623 = vunpack.c.l.b16 %v1335
    %v2624 = vunpack.c.h.b16 %v1335
    %v2625 = vunpack.c.l.b16 %v1336
    %v2626 = vunpack.c.h.b16 %v1336
    %v2627 = vunpack.c.l.b16 %v1337
    %v2628 = vunpack.c.h.b16 %v1337
    %v2629 = vunpack.c.l.b16 %v1338
    %v2630 = vunpack.c.h.b16 %v1338
    %v2631 = vunpack.c.l.b16 %v1339
    %v2632 = vunpack.c.h.b16 %v1339
    %v2633 = vunpack.c.l.b16 %v1340
    %v2634 = vunpack.c.h.b16 %v1340
    %v2635 = vunpack.c.l.b16 %v1341
    %v2636 = vunpack.c.h.b16 %v1341
    %v2637 = vunpack.c.l.b16 %v1342
    %v2638 = vunpack.c.h.b16 %v1342
    %v2639 = vunpack.c.l.b16 %v1343
    %v2640 = vunpack.c.h.b16 %v1343
    %v2641 = vunpack.c.l.b16 %v1344
    %v2642 = vunpack.c.h.b16 %v1344
    %v2643 = vunpack.c.l.b16 %v1345
    %v2644 = vunpack.c.h.b16 %v1345
    %v2645 = vunpack.c.l.b16 %v1346
    %v2646 = vunpack.c.h.b16 %v1346
    %v2647 = vunpack.c.l.b16 %v1347
    %v2648 = vunpack.c.h.b16 %v1347
    %v2649 = vunpack.c.l.b16 %v1348
    %v2650 = vunpack.c.h.b16 %v1348
    %v2651 = vunpack.c.l.b16 %v1349
    %v2652 = vunpack.c.h.b16 %v1349
    %v2653 = vunpack.c.l.b16 %v1350
    %v2654 = vunpack.c.h.b16 %v1350
    %v2655 = vunpack.c.l.b16 %v1351
    %v2656 = vunpack.c.h.b16 %v1351
    %v2657 = vunpack.c.l.b16 %v1352
    %v2658 = vunpack.c.h.b16 %v1352
    %v2659 = vunpack.c.l.b16 %v1353
    %v2660 = vunpack.c.h.b16 %v1353
    %v2661 = vunpack.c.l.b16 %v1354
    %v2662 = vunpack.c.h.b16 %v1354
    %v2663 = vunpack.c.l.b16 %v1355
    %v2664 = vunpack.c.h.b16 %v1355
    %v2665 = vunpack.c.l.b16 %v1356
    %v2666 = vunpack.c.h.b16 %v1356
    %v2667 = vunpack.c.l.b16 %v1357
    %v2668 = vunpack.c.h.b16 %v1357
    %v2669 = vunpack.c.l.b16 %v1358
    %v2670 = vunpack.c.h.b16 %v1358
    %v2671 = vunpack.c.l.b16 %v1359
    %v2672 = vunpack.c.h.b16 %v1359
    %v2673 = vunpack.c.l.b16 %v1360
    %v2674 = vunpack.c.h.b16 %v1360
    %v2675 = vunpack.c.l.b16 %v1361
    %v2676 = vunpack.c.h.b16 %v1361
    %v2677 = vunpack.c.l.b16 %v1362
    %v2678 = vunpack.c.h.b16 %v1362
    %v2679 = vunpack.c.l.b16 %v1363
    %v2680 = vunpack.c.h.b16 %v1363
    %v2681 = vunpack.c.l.b16 %v1364
    %v2682 = vunpack.c.h.b16 %v1364
    %v2683 = vunpack.c.l.b16 %v1365
    %v2684 = vunpack.c.h.b16 %v1365
    %v2685 = vunpack.c.l.b16 %v1366
    %v2686 = vunpack.c.h.b16 %v1366
    %v2687 = vunpack.c.l.b16 %v1367
    %v2688 = vunpack.c.h.b16 %v1367
    %v2689 = vunpack.c.l.b16 %v1368
    %v2690 = vunpack.c.h.b16 %v1368
    %v2691 = vunpack.c.l.b16 %v1369
    %v2692 = vunpack.c.h.b16 %v1369
    %v2693 = vunpack.c.l.b16 %v1370
    %v2694 = vunpack.c.h.b16 %v1370
    %v2695 = vunpack.c.l.b16 %v1371
    %v2696 = vunpack.c.h.b16 %v1371
    %v2697 = vunpack.c.l.b16 %v1372
    %v2698 = vunpack.c.h.b16 %v1372
    %v2699 = vunpack.c.l.b16 %v1373
    %v2700 = vunpack.c.h.b16 %v1373
    %v2701 = vunpack.c.l.b16 %v1374
    %v2702 = vunpack.c.h.b16 %v1374
    %v2703 = vunpack.c.l.b16 %v1375
    %v2704 = vunpack.c.h.b16 %v1375
    %v2705 = vunpack.c.l.b16 %v1376
    %v2706 = vunpack.c.h.b16 %v1376
    %v2707 = vunpack.c.l.b16 %v1377
    %v2708 = vunpack.c.h.b16 %v1377
    %v2709 = vunpack.c.l.b16 %v1378
    %v2710 = vunpack.c.h.b16 %v1378
    %v2711 = vunpack.c.l.b16 %v1379
    %v2712 = vunpack.c.h.b16 %v1379
    %v2713 = vunpack.c.l.b16 %v1380
    %v2714 = vunpack.c.h.b16 %v1380
    %v2715 = vunpack.c.l.b16 %v1381
    %v2716 = vunpack.c.h.b16 %v1381
    %v2717 = vunpack.c.l.b16 %v1382
    %v2718 = vunpack.c.h.b16 %v1382
    %v2719 = vunpack.c.l.b16 %v1383
    %v2720 = vunpack.c.h.b16 %v1383
    %v2721 = vunpack.c.l.b16 %v1384
    %v2722 = vunpack.c.h.b16 %v1384
    %v2723 = vunpack.c.l.b16 %v1385
    %v2724 = vunpack.c.h.b16 %v1385
    %v2725 = vunpack.c.l.b16 %v1386
    %v2726 = vunpack.c.h.b16 %v1386
    %v2727 = vunpack.c.l.b16 %v1387
    %v2728 = vunpack.c.h.b16 %v1387
    %v2729 = vunpack.c.l.b16 %v1388
    %v2730 = vunpack.c.h.b16 %v1388
    %v2731 = vunpack.c.l.b16 %v1389
    %v2732 = vunpack.c.h.b16 %v1389
    %v2733 = vunpack.c.l.b16 %v1390
    %v2734 = vunpack.c.h.b16 %v1390
    %v2735 = vunpack.c.l.b16 %v1391
    %v2736 = vunpack.c.h.b16 %v1391
    %v2737 = vunpack.c.l.b16 %v1392
    %v2738 = vunpack.c.h.b16 %v1392
    %v2739 = vunpack.c.l.b16 %v1393
    %v2740 = vunpack.c.h.b16 %v1393
    %v2741 = vunpack.c.l.b16 %v1394
    %v2742 = vunpack.c.h.b16 %v1394
    %v2743 = vunpack.c.l.b16 %v1395
    %v2744 = vunpack.c.h.b16 %v1395
    %v2745 = vunpack.c.l.b16 %v1396
    %v2746 = vunpack.c.h.b16 %v1396
    %v2747 = vunpack.c.l.b16 %v1397
    %v2748 = vunpack.c.h.b16 %v1397
    %v2749 = vunpack.c.l.b16 %v1398
    %v2750 = vunpack.c.h.b16 %v1398
    %v2751 = vunpack.c.l.b16 %v1399
    %v2752 = vunpack.c.h.b16 %v1399
    %v2753 = vunpack.c.l.b16 %v1400
    %v2754 = vunpack.c.h.b16 %v1400
    %v2755 = vunpack.c.l.b16 %v1401
    %v2756 = vunpack.c.h.b16 %v1401
    %v2757 = vunpack.c.l.b16 %v1402
    %v2758 = vunpack.c.h.b16 %v1402
    %v2759 = vunpack.c.l.b16 %v1403
    %v2760 = vunpack.c.h.b16 %v1403
    %v2761 = vunpack.c.l.b16 %v1404
    %v2762 = vunpack.c.h.b16 %v1404
    %v2763 = vunpack.c.l.b16 %v1405
    %v2764 = vunpack.c.h.b16 %v1405
    %v2765 = vunpack.c.l.b16 %v1406
    %v2766 = vunpack.c.h.b16 %v1406
    %v2767 = vunpack.c.l.b16 %v1407
    %v2768 = vunpack.c.h.b16 %v1407
    %v2769 = vunpack.c.l.b16 %v1408
    %v2770 = vunpack.c.h.b16 %v1408
    %v2771 = vunpack.c.l.b16 %v1409
    %v2772 = vunpack.c.h.b16 %v1409
    %v2773 = vunpack.c.l.b16 %v1410
    %v2774 = vunpack.c.h.b16 %v1410
    %v2775 = vunpack.c.l.b16 %v1411
    %v2776 = vunpack.c.h.b16 %v1411
    %v2777 = vunpack.c.l.b16 %v1412
    %v2778 = vunpack.c.h.b16 %v1412
    %v2779 = vunpack.c.l.b16 %v1413
    %v2780 = vunpack.c.h.b16 %v1413
    %v2781 = vunpack.c.l.b16 %v1414
    %v2782 = vunpack.c.h.b16 %v1414
    %v2783 = vunpack.c.l.b16 %v1415
    %v2784 = vunpack.c.h.b16 %v1415
    %v2785 = vunpack.c.l.b16 %v1416
    %v2786 = vunpack.c.h.b16 %v1416
    %v2787 = vunpack.c.l.b16 %v1417
    %v2788 = vunpack.c.h.b16 %v1417
    %v2789 = vunpack.c.l.b16 %v1418
    %v2790 = vunpack.c.h.b16 %v1418
    %v2791 = vunpack.c.l.b16 %v1419
    %v2792 = vunpack.c.h.b16 %v1419
    %v2793 = vunpack.c.l.b16 %v1420
    %v2794 = vunpack.c.h.b16 %v1420
    %v2795 = vunpack.c.l.b16 %v1421
    %v2796 = vunpack.c.h.b16 %v1421
    %v2797 = vunpack.c.l.b16 %v1422
    %v2798 = vunpack.c.h.b16 %v1422
    %v2799 = vunpack.c.l.b16 %v1423
    %v2800 = vunpack.c.h.b16 %v1423
    %v2801 = vunpack.c.l.b16 %v1424
    %v2802 = vunpack.c.h.b16 %v1424
    %v2803 = vunpack.c.l.b16 %v1425
    %v2804 = vunpack.c.h.b16 %v1425
    %v2805 = vunpack.c.l.b16 %v1426
    %v2806 = vunpack.c.h.b16 %v1426
    %v2807 = vunpack.c.l.b16 %v1427
    %v2808 = vunpack.c.h.b16 %v1427
    %v2809 = vunpack.c.l.b16 %v1428
    %v2810 = vunpack.c.h.b16 %v1428
    %v2811 = vunpack.c.l.b16 %v1429
    %v2812 = vunpack.c.h.b16 %v1429
    %v2813 = vunpack.c.l.b16 %v1430
    %v2814 = vunpack.c.h.b16 %v1430
    %v2815 = vunpack.c.l.b16 %v1431
    %v2816 = vunpack.c.h.b16 %v1431
    %v2817 = vunpack.c.l.b16 %v1432
    %v2818 = vunpack.c.h.b16 %v1432
    %v2819 = vunpack.c.l.b16 %v1433
    %v2820 = vunpack.c.h.b16 %v1433
    %v2821 = vunpack.c.l.b16 %v1434
    %v2822 = vunpack.c.h.b16 %v1434
    %v2823 = vunpack.c.l.b16 %v1435
    %v2824 = vunpack.c.h.b16 %v1435
    %v2825 = vunpack.c.l.b16 %v1436
    %v2826 = vunpack.c.h.b16 %v1436
    %v2827 = vunpack.c.l.b16 %v1437
    %v2828 = vunpack.c.h.b16 %v1437
    %v2829 = vunpack.c.l.b16 %v1438
    %v2830 = vunpack.c.h.b16 %v1438
    %v2831 = vunpack.c.l.b16 %v1439
    %v2832 = vunpack.c.h.b16 %v1439
    %v2833 = vunpack.c.l.b16 %v1440
    %v2834 = vunpack.c.h.b16 %v1440
    %v2835 = vunpack.c.l.b16 %v1441
    %v2836 = vunpack.c.h.b16 %v1441
    %v2837 = vunpack.c.l.b16 %v1442
    %v2838 = vunpack.c.h.b16 %v1442
    %v2839 = vunpack.c.l.b16 %v1443
    %v2840 = vunpack.c.h.b16 %v1443
    %v2841 = vunpack.c.l.b16 %v1444
    %v2842 = vunpack.c.h.b16 %v1444
    %v2843 = vunpack.c.l.b16 %v1445
    %v2844 = vunpack.c.h.b16 %v1445
    %v2845 = vunpack.c.l.b16 %v1446
    %v2846 = vunpack.c.h.b16 %v1446
    %v2847 = vunpack.c.l.b16 %v1447
    %v2848 = vunpack.c.h.b16 %v1447
    %v2849 = vunpack.c.l.b16 %v1448
    %v2850 = vunpack.c.h.b16 %v1448
    %v2851 = vunpack.c.l.b16 %v1449
    %v2852 = vunpack.c.h.b16 %v1449
    %v2853 = vunpack.c.l.b16 %v1450
    %v2854 = vunpack.c.h.b16 %v1450
    %v2855 = vunpack.c.l.b16 %v1451
    %v2856 = vunpack.c.h.b16 %v1451
    %v2857 = vunpack.c.l.b16 %v1452
    %v2858 = vunpack.c.h.b16 %v1452
    %v2859 = vunpack.c.l.b16 %v1453
    %v2860 = vunpack.c.h.b16 %v1453
    %v2861 = vunpack.c.l.b16 %v1454
    %v2862 = vunpack.c.h.b16 %v1454
    %v2863 = vunpack.c.l.b16 %v1455
    %v2864 = vunpack.c.h.b16 %v1455
    %v2865 = vunpack.c.l.b16 %v1456
    %v2866 = vunpack.c.h.b16 %v1456
    %v2867 = vunpack.c.l.b16 %v1457
    %v2868 = vunpack.c.h.b16 %v1457
    %v2869 = vunpack.c.l.b16 %v1458
    %v2870 = vunpack.c.h.b16 %v1458
    %v2871 = vunpack.c.l.b16 %v1459
    %v2872 = vunpack.c.h.b16 %v1459
    %v2873 = vunpack.c.l.b16 %v1460
    %v2874 = vunpack.c.h.b16 %v1460
    %v2875 = vunpack.c.l.b16 %v1461
    %v2876 = vunpack.c.h.b16 %v1461
    %v2877 = vunpack.c.l.b16 %v1462
    %v2878 = vunpack.c.h.b16 %v1462
    %v2879 = vunpack.c.l.b16 %v1463
    %v2880 = vunpack.c.h.b16 %v1463
    %v2881 = vunpack.c.l.b16 %v1464
    %v2882 = vunpack.c.h.b16 %v1464
    %v2883 = vunpack.c.l.b16 %v1465
    %v2884 = vunpack.c.h.b16 %v1465
    %v2885 = vunpack.c.l.b16 %v1466
    %v2886 = vunpack.c.h.b16 %v1466
    %v2887 = vunpack.c.l.b16 %v1467
    %v2888 = vunpack.c.h.b16 %v1467
    %v2889 = vunpack.c.l.b16 %v1468
    %v2890 = vunpack.c.h.b16 %v1468
    %v2891 = vunpack.c.l.b16 %v1469
    %v2892 = vunpack.c.h.b16 %v1469
    %v2893 = vunpack.c.l.b16 %v1470
    %v2894 = vunpack.c.h.b16 %v1470
    %v2895 = vunpack.c.l.b16 %v1471
    %v2896 = vunpack.c.h.b16 %v1471
    %v2897 = vunpack.c.l.b16 %v1472
    %v2898 = vunpack.c.h.b16 %v1472
    %v2899 = vunpack.c.l.b16 %v1473
    %v2900 = vunpack.c.h.b16 %v1473
    %v2901 = vunpack.c.l.b16 %v1474
    %v2902 = vunpack.c.h.b16 %v1474
    %v2903 = vunpack.c.l.b16 %v1475
    %v2904 = vunpack.c.h.b16 %v1475
    %v2905 = vunpack.c.l.b16 %v1476
    %v2906 = vunpack.c.h.b16 %v1476
    %v2907 = vunpack.c.l.b16 %v1477
    %v2908 = vunpack.c.h.b16 %v1477
    %v2909 = vunpack.c.l.b16 %v1478
    %v2910 = vunpack.c.h.b16 %v1478
    %v2911 = vunpack.c.l.b16 %v1479
    %v2912 = vunpack.c.h.b16 %v1479
    %v2913 = vunpack.c.l.b16 %v1480
    %v2914 = vunpack.c.h.b16 %v1480
    %v2915 = vunpack.c.l.b16 %v1481
    %v2916 = vunpack.c.h.b16 %v1481
    %v2917 = vunpack.c.l.b16 %v1482
    %v2918 = vunpack.c.h.b16 %v1482
    %v2919 = vunpack.c.l.b16 %v1483
    %v2920 = vunpack.c.h.b16 %v1483
    %v2921 = vunpack.c.l.b16 %v1484
    %v2922 = vunpack.c.h.b16 %v1484
    %v2923 = vunpack.c.l.b16 %v1485
    %v2924 = vunpack.c.h.b16 %v1485
    %v2925 = vunpack.c.l.b16 %v1486
    %v2926 = vunpack.c.h.b16 %v1486
    %v2927 = vunpack.c.l.b16 %v1487
    %v2928 = vunpack.c.h.b16 %v1487
    %v2929 = vunpack.c.l.b16 %v1488
    %v2930 = vunpack.c.h.b16 %v1488
    %v2931 = vunpack.c.l.b16 %v1489
    %v2932 = vunpack.c.h.b16 %v1489
    %v2933 = vunpack.c.l.b16 %v1490
    %v2934 = vunpack.c.h.b16 %v1490
    %v2935 = vunpack.c.l.b16 %v1491
    %v2936 = vunpack.c.h.b16 %v1491
    %v2937 = vunpack.c.l.b16 %v1492
    %v2938 = vunpack.c.h.b16 %v1492
    %v2939 = vunpack.c.l.b16 %v1493
    %v2940 = vunpack.c.h.b16 %v1493
    %v2941 = vunpack.c.l.b16 %v1494
    %v2942 = vunpack.c.h.b16 %v1494
    %v2943 = vunpack.c.l.b16 %v1495
    %v2944 = vunpack.c.h.b16 %v1495
    %v2945 = vunpack.c.l.b16 %v1496
    %v2946 = vunpack.c.h.b16 %v1496
    %v2947 = vunpack.c.l.b16 %v1497
    %v2948 = vunpack.c.h.b16 %v1497
    %v2949 = vunpack.c.l.b16 %v1498
    %v2950 = vunpack.c.h.b16 %v1498
    %v2951 = vunpack.c.l.b16 %v1499
    %v2952 = vunpack.c.h.b16 %v1499
    %v2953 = vunpack.c.l.b16 %v1500
    %v2954 = vunpack.c.h.b16 %v1500
    %v2955 = vunpack.c.l.b16 %v1501
    %v2956 = vunpack.c.h.b16 %v1501
    %v2957 = vunpack.c.l.b16 %v1502
    %v2958 = vunpack.c.h.b16 %v1502
    %v2959 = vunpack.c.l.b16 %v1503
    %v2960 = vunpack.c.h.b16 %v1503
    %v2961 = vunpack.c.l.b16 %v1504
    %v2962 = vunpack.c.h.b16 %v1504
    %v2963 = vunpack.c.l.b16 %v1505
    %v2964 = vunpack.c.h.b16 %v1505
    %v2965 = vunpack.c.l.b16 %v1506
    %v2966 = vunpack.c.h.b16 %v1506
    %v2967 = vunpack.c.l.b16 %v1507
    %v2968 = vunpack.c.h.b16 %v1507
    %v2969 = vunpack.c.l.b16 %v1508
    %v2970 = vunpack.c.h.b16 %v1508
    %v2971 = vunpack.c.l.b16 %v1509
    %v2972 = vunpack.c.h.b16 %v1509
    %v2973 = vunpack.c.l.b16 %v1510
    %v2974 = vunpack.c.h.b16 %v1510
    %v2975 = vunpack.c.l.b16 %v1511
    %v2976 = vunpack.c.h.b16 %v1511
    %v2977 = vunpack.c.l.b16 %v1512
    %v2978 = vunpack.c.h.b16 %v1512
    %v2979 = vunpack.c.l.b16 %v1513
    %v2980 = vunpack.c.h.b16 %v1513
    %v2981 = vunpack.c.l.b16 %v1514
    %v2982 = vunpack.c.h.b16 %v1514
    %v2983 = vunpack.c.l.b16 %v1515
    %v2984 = vunpack.c.h.b16 %v1515
    %v2985 = vunpack.c.l.b16 %v1516
    %v2986 = vunpack.c.h.b16 %v1516
    %v2987 = vunpack.c.l.b16 %v1517
    %v2988 = vunpack.c.h.b16 %v1517
    %v2989 = vunpack.c.l.b16 %v1518
    %v2990 = vunpack.c.h.b16 %v1518
    %v2991 = vunpack.c.l.b16 %v1519
    %v2992 = vunpack.c.h.b16 %v1519
    %v2993 = vunpack.c.l.b16 %v1520
    %v2994 = vunpack.c.h.b16 %v1520
    %v2995 = vunpack.c.l.b16 %v1521
    %v2996 = vunpack.c.h.b16 %v1521
    %v2997 = vunpack.c.l.b16 %v1522
    %v2998 = vunpack.c.h.b16 %v1522
    %v2999 = vunpack.c.l.b16 %v1523
    %v3000 = vunpack.c.h.b16 %v1523
    %v3001 = vunpack.c.l.b16 %v1524
    %v3002 = vunpack.c.h.b16 %v1524
    %v3003 = vunpack.c.l.b16 %v1525
    %v3004 = vunpack.c.h.b16 %v1525
    %v3005 = vunpack.c.l.b16 %v1526
    %v3006 = vunpack.c.h.b16 %v1526
    %v3007 = vunpack.c.l.b16 %v1527
    %v3008 = vunpack.c.h.b16 %v1527
    %v3009 = vunpack.c.l.b16 %v1528
    %v3010 = vunpack.c.h.b16 %v1528
    %v3011 = vunpack.c.l.b16 %v1529
    %v3012 = vunpack.c.h.b16 %v1529
    %v3013 = vunpack.c.l.b16 %v1530
    %v3014 = vunpack.c.h.b16 %v1530
    %v3015 = vunpack.c.l.b16 %v1531
    %v3016 = vunpack.c.h.b16 %v1531
    %v3017 = vunpack.c.l.b16 %v1532
    %v3018 = vunpack.c.h.b16 %v1532
    %v3019 = vunpack.c.l.b16 %v1533
    %v3020 = vunpack.c.h.b16 %v1533
    %v3021 = vunpack.c.l.b16 %v1534
    %v3022 = vunpack.c.h.b16 %v1534
    %v3023 = vunpack.c.l.b16 %v1535
    %v3024 = vunpack.c.h.b16 %v1535
    %v3025 = vunpack.c.l.b16 %v1536
    %v3026 = vunpack.c.h.b16 %v1536
    %v3027 = vunpack.c.l.b16 %v1537
    %v3028 = vunpack.c.h.b16 %v1537
    %v3029 = vunpack.c.l.b16 %v1538
    %v3030 = vunpack.c.h.b16 %v1538
    %v3031 = vunpack.c.l.b16 %v1539
    %v3032 = vunpack.c.h.b16 %v1539
    %v3033 = vunpack.c.l.b16 %v1540
    %v3034 = vunpack.c.h.b16 %v1540
    %v3035 = vunpack.c.l.b16 %v1541
    %v3036 = vunpack.c.h.b16 %v1541
    %v3037 = vunpack.c.l.b16 %v1542
    %v3038 = vunpack.c.h.b16 %v1542
    %v3039 = vunpack.c.l.b16 %v1543
    %v3040 = vunpack.c.h.b16 %v1543
    %v3041 = vunpack.c.l.b16 %v1544
    %v3042 = vunpack.c.h.b16 %v1544
    %v3043 = vunpack.c.l.b16 %v1545
    %v3044 = vunpack.c.h.b16 %v1545
    %v3045 = vunpack.c.l.b16 %v1546
    %v3046 = vunpack.c.h.b16 %v1546
    %v3047 = vunpack.c.l.b16 %v1547
    %v3048 = vunpack.c.h.b16 %v1547
    %v3049 = vunpack.c.l.b16 %v1548
    %v3050 = vunpack.c.h.b16 %v1548
    %v3051 = vunpack.c.l.b16 %v1549
    %v3052 = vunpack.c.h.b16 %v1549
    %v3053 = vunpack.c.l.b16 %v1550
    %v3054 = vunpack.c.h.b16 %v1550
    %v3055 = vunpack.c.l.b16 %v1551
    %v3056 = vunpack.c.h.b16 %v1551
    %v3057 = vunpack.c.l.b16 %v1552
    %v3058 = vunpack.c.h.b16 %v1552
    %v3059 = vunpack.c.l.b16 %v1553
    %v3060 = vunpack.c.h.b16 %v1553
    %v3061 = vunpack.c.l.b16 %v1554
    %v3062 = vunpack.c.h.b16 %v1554
    %v3063 = vunpack.c.l.b16 %v1555
    %v3064 = vunpack.c.h.b16 %v1555
    %v3065 = vunpack.c.l.b16 %v1556
    %v3066 = vunpack.c.h.b16 %v1556
    %v3067 = vunpack.c.l.b16 %v1557
    %v3068 = vunpack.c.h.b16 %v1557
    %v3069 = vunpack.c.l.b16 %v1558
    %v3070 = vunpack.c.h.b16 %v1558
    %v3071 = vunpack.c.l.b16 %v1559
    %v3072 = vunpack.c.h.b16 %v1559
    %v3073 = vunpack.c.l.b16 %v1560
    %v3074 = vunpack.c.h.b16 %v1560
    %v3075 = vunpack.c.l.b16 %v1561
    %v3076 = vunpack.c.h.b16 %v1561
    %v3077 = vunpack.c.l.b16 %v1562
    %v3078 = vunpack.c.h.b16 %v1562
    %v3079 = vunpack.c.l.b16 %v1563
    %v3080 = vunpack.c.h.b16 %v1563
    %v3081 = vunpack.c.l.b16 %v1564
    %v3082 = vunpack.c.h.b16 %v1564
    %v3083 = vunpack.c.l.b16 %v1565
    %v3084 = vunpack.c.h.b16 %v1565
    %v3085 = vunpack.c.l.b16 %v1566
    %v3086 = vunpack.c.h.b16 %v1566
    %v3087 = vunpack.c.l.b16 %v1567
    %v3088 = vunpack.c.h.b16 %v1567
    %v3089 = vunpack.c.l.b16 %v1568
    %v3090 = vunpack.c.h.b16 %v1568
    %v3091 = vunpack.c.l.b16 %v1569
    %v3092 = vunpack.c.h.b16 %v1569
    %v3093 = vunpack.c.l.b16 %v1570
    %v3094 = vunpack.c.h.b16 %v1570
    %v3095 = vunpack.c.l.b16 %v1571
    %v3096 = vunpack.c.h.b16 %v1571
    %v3097 = vunpack.c.l.b16 %v1572
    %v3098 = vunpack.c.h.b16 %v1572
    %v3099 = vunpack.c.l.b16 %v1573
    %v3100 = vunpack.c.h.b16 %v1573
    %v3101 = vunpack.c.l.b16 %v1574
    %v3102 = vunpack.c.h.b16 %v1574
    %v3103 = vunpack.c.l.b16 %v1575
    %v3104 = vunpack.c.h.b16 %v1575
    %v3105 = vunpack.c.l.b16 %v1576
    %v3106 = vunpack.c.h.b16 %v1576
    %v3107 = vunpack.c.l.b16 %v1577
    %v3108 = vunpack.c.h.b16 %v1577
    %v3109 = vunpack.c.l.b16 %v1578
    %v3110 = vunpack.c.h.b16 %v1578
    %v3111 = vunpack.c.l.b16 %v1579
    %v3112 = vunpack.c.h.b16 %v1579
    %v3113 = vunpack.c.l.b16 %v1580
    %v3114 = vunpack.c.h.b16 %v1580
    %v3115 = vunpack.c.l.b16 %v1581
    %v3116 = vunpack.c.h.b16 %v1581
    %v3117 = vunpack.c.l.b16 %v1582
    %v3118 = vunpack.c.h.b16 %v1582
    %v3119 = vunpack.c.l.b16 %v1583
    %v3120 = vunpack.c.h.b16 %v1583
    %v3121 = vunpack.c.l.b16 %v1584
    %v3122 = vunpack.c.h.b16 %v1584
    %v3123 = vunpack.c.l.b16 %v1585
    %v3124 = vunpack.c.h.b16 %v1585
    %v3125 = vunpack.c.l.b16 %v1586
    %v3126 = vunpack.c.h.b16 %v1586
    %v3127 = vunpack.c.l.b16 %v1587
    %v3128 = vunpack.c.h.b16 %v1587
    %v3129 = vunpack.c.l.b16 %v1588
    %v3130 = vunpack.c.h.b16 %v1588
    %v3131 = vunpack.c.l.b16 %v1589
    %v3132 = vunpack.c.h.b16 %v1589
    %v3133 = vunpack.c.l.b16 %v1590
    %v3134 = vunpack.c.h.b16 %v1590
    %v3135 = vunpack.c.l.b16 %v1591
    %v3136 = vunpack.c.h.b16 %v1591
    %v3137 = vunpack.c.l.b16 %v1592
    %v3138 = vunpack.c.h.b16 %v1592
    %v3139 = vunpack.c.l.b16 %v1593
    %v3140 = vunpack.c.h.b16 %v1593
    %v3141 = vunpack.c.l.b16 %v1594
    %v3142 = vunpack.c.h.b16 %v1594
    %v3143 = vunpack.c.l.b16 %v1595
    %v3144 = vunpack.c.h.b16 %v1595
    %v3145 = vunpack.c.l.b16 %v1596
    %v3146 = vunpack.c.h.b16 %v1596
    %v3147 = vunpack.c.l.b16 %v1597
    %v3148 = vunpack.c.h.b16 %v1597
    %v3149 = vunpack.c.l.b16 %v1598
    %v3150 = vunpack.c.h.b16 %v1598
    %v3151 = vunpack.c.l.b16 %v1599
    %v3152 = vunpack.c.h.b16 %v1599
    %v3153 = vunpack.c.l.b16 %v1600
    %v3154 = vunpack.c.h.b16 %v1600
    %v3155 = vunpack.c.l.b16 %v1601
    %v3156 = vunpack.c.h.b16 %v1601
    %v3157 = vunpack.c.l.b16 %v1602
    %v3158 = vunpack.c.h.b16 %v1602
    %v3159 = vunpack.c.l.b16 %v1603
    %v3160 = vunpack.c.h.b16 %v1603
    %v3161 = vunpack.c.l.b16 %v1604
    %v3162 = vunpack.c.h.b16 %v1604
    %v3163 = vunpack.c.l.b16 %v1605
    %v3164 = vunpack.c.h.b16 %v1605
    %v3165 = vunpack.c.l.b16 %v1606
    %v3166 = vunpack.c.h.b16 %v1606
    %v3167 = vunpack.c.l.b16 %v1607
    %v3168 = vunpack.c.h.b16 %v1607
    %v3169 = vunpack.c.l.b16 %v1608
    %v3170 = vunpack.c.h.b16 %v1608
    %v3171 = vunpack.c.l.b16 %v1609
    %v3172 = vunpack.c.h.b16 %v1609
    %v3173 = vunpack.c.l.b16 %v1610
    %v3174 = vunpack.c.h.b16 %v1610
    %v3175 = vunpack.c.l.b16 %v1611
    %v3176 = vunpack.c.h.b16 %v1611
    %v3177 = vunpack.c.l.b16 %v1612
    %v3178 = vunpack.c.h.b16 %v1612
    %v3179 = vunpack.c.l.b16 %v1613
    %v3180 = vunpack.c.h.b16 %v1613
    %v3181 = vunpack.c.l.b16 %v1614
    %v3182 = vunpack.c.h.b16 %v1614
    %v3183 = vunpack.c.l.b16 %v1615
    %v3184 = vunpack.c.h.b16 %v1615
    %v3185 = vunpack.c.l.b16 %v1616
    %v3186 = vunpack.c.h.b16 %v1616
    %v3187 = vunpack.c.l.b16 %v1617
    %v3188 = vunpack.c.h.b16 %v1617
    %v3189 = vunpack.c.l.b16 %v1618
    %v3190 = vunpack.c.h.b16 %v1618
    %v3191 = vunpack.c.l.b16 %v1619
    %v3192 = vunpack.c.h.b16 %v1619
    %v3193 = vunpack.c.l.b16 %v1620
    %v3194 = vunpack.c.h.b16 %v1620
    %v3195 = vunpack.c.l.b16 %v1621
    %v3196 = vunpack.c.h.b16 %v1621
    %v3197 = vunpack.c.l.b16 %v1622
    %v3198 = vunpack.c.h.b16 %v1622
    %v3199 = vunpack.c.l.b16 %v1623
    %v3200 = vunpack.c.h.b16 %v1623
    %v3201 = vunpack.c.l.b16 %v1624
    %v3202 = vunpack.c.h.b16 %v1624
    %v3203 = vpack.c.b16 %v2187, %v2179
    %v3204 = vpack.c.b16 %v2188, %v2180
    %v3205 = vpack.c.b16 %v2189, %v2181
    %v3206 = vpack.c.b16 %v2190, %v2182
    %v3207 = vpack.c.b16 %v2191, %v2183
    %v3208 = vpack.c.b16 %v2192, %v2184
    %v3209 = vpack.c.b16 %v2193, %v2185
    %v3210 = vpack.c.b16 %v2194, %v2186
    %v3211 = vpack.c.b16 %v2203, %v2195
    %v3212 = vpack.c.b16 %v2204, %v2196
    %v3213 = vpack.c.b16 %v2205, %v2197
    %v3214 = vpack.c.b16 %v2206, %v2198
    %v3215 = vpack.c.b16 %v2207, %v2199
    %v3216 = vpack.c.b16 %v2208, %v2200
    %v3217 = vpack.c.b16 %v2209, %v2201
    %v3218 = vpack.c.b16 %v2210, %v2202
    %v3219 = vpack.c.b16 %v2219, %v2211
    %v3220 = vpack.c.b16 %v2220, %v2212
    %v3221 = vpack.c.b16 %v2221, %v2213
    %v3222 = vpack.c.b16 %v2222, %v2214
    %v3223 = vpack.c.b16 %v2223, %v2215
    %v3224 = vpack.c.b16 %v2224, %v2216
    %v3225 = vpack.c.b16 %v2225, %v2217
    %v3226 = vpack.c.b16 %v2226, %v2218
    %v3227 = vpack.c.b16 %v2235, %v2227
    %v3228 = vpack.c.b16 %v2236, %v2228
    %v3229 = vpack.c.b16 %v2237, %v2229
    %v3230 = vpack.c.b16 %v2238, %v2230
    %v3231 = vpack.c.b16 %v2239, %v2231
    %v3232 = vpack.c.b16 %v2240, %v2232
    %v3233 = vpack.c.b16 %v2241, %v2233
    %v3234 = vpack.c.b16 %v2242, %v2234
    %v3235 = vpack.c.b16 %v2251, %v2243
    %v3236 = vpack.c.b16 %v2252, %v2244
    %v3237 = vpack.c.b16 %v2253, %v2245
    %v3238 = vpack.c.b16 %v2254, %v2246
    %v3239 = vpack.c.b16 %v2255, %v2247
    %v3240 = vpack.c.b16 %v2256, %v2248
    %v3241 = vpack.c.b16 %v2257, %v2249
    %v3242 = vpack.c.b16 %v2258, %v2250
    %v3243 = vpack.c.b16 %v2267, %v2259
    %v3244 = vpack.c.b16 %v2268, %v2260
    %v3245 = vpack.c.b16 %v2269, %v2261
    %v3246 = vpack.c.b16 %v2270, %v2262
    %v3247 = vpack.c.b16 %v2271, %v2263
    %v3248 = vpack.c.b16 %v2272, %v2264
    %v3249 = vpack.c.b16 %v2273, %v2265
    %v3250 = vpack.c.b16 %v2274, %v2266
    %v3251 = vpack.c.b16 %v2283, %v2275
    %v3252 = vpack.c.b16 %v2284, %v2276
    %v3253 = vpack.c.b16 %v2285, %v2277
    %v3254 = vpack.c.b16 %v2286, %v2278
    %v3255 = vpack.c.b16 %v2287, %v2279
    %v3256 = vpack.c.b16 %v2288, %v2280
    %v3257 = vpack.c.b16 %v2289, %v2281
    %v3258 = vpack.c.b16 %v2290, %v2282
    %v3259 = vpack.c.b16 %v2299, %v2291
    %v3260 = vpack.c.b16 %v2300, %v2292
    %v3261 = vpack.c.b16 %v2301, %v2293
    %v3262 = vpack.c.b16 %v2302, %v2294
    %v3263 = vpack.c.b16 %v2303, %v2295
    %v3264 = vpack.c.b16 %v2304, %v2296
    %v3265 = vpack.c.b16 %v2305, %v2297
    %v3266 = vpack.c.b16 %v2306, %v2298
    %v3267 = vpack.c.b16 %v2315, %v2307
    %v3268 = vpack.c.b16 %v2316, %v2308
    %v3269 = vpack.c.b16 %v2317, %v2309
    %v3270 = vpack.c.b16 %v2318, %v2310
    %v3271 = vpack.c.b16 %v2319, %v2311
    %v3272 = vpack.c.b16 %v2320, %v2312
    %v3273 = vpack.c.b16 %v2321, %v2313
    %v3274 = vpack.c.b16 %v2322, %v2314
    %v3275 = vpack.c.b16 %v2331, %v2323
    %v3276 = vpack.c.b16 %v2332, %v2324
    %v3277 = vpack.c.b16 %v2333, %v2325
    %v3278 = vpack.c.b16 %v2334, %v2326
    %v3279 = vpack.c.b16 %v2335, %v2327
    %v3280 = vpack.c.b16 %v2336, %v2328
    %v3281 = vpack.c.b16 %v2337, %v2329
    %v3282 = vpack.c.b16 %v2338, %v2330
    %v3283 = vpack.c.b16 %v2347, %v2339
    %v3284 = vpack.c.b16 %v2348, %v2340
    %v3285 = vpack.c.b16 %v2349, %v2341
    %v3286 = vpack.c.b16 %v2350, %v2342
    %v3287 = vpack.c.b16 %v2351, %v2343
    %v3288 = vpack.c.b16 %v2352, %v2344
    %v3289 = vpack.c.b16 %v2353, %v2345
    %v3290 = vpack.c.b16 %v2354, %v2346
    %v3291 = vpack.c.b16 %v2363, %v2355
    %v3292 = vpack.c.b16 %v2364, %v2356
    %v3293 = vpack.c.b16 %v2365, %v2357
    %v3294 = vpack.c.b16 %v2366, %v2358
    %v3295 = vpack.c.b16 %v2367, %v2359
    %v3296 = vpack.c.b16 %v2368, %v2360
    %v3297 = vpack.c.b16 %v2369, %v2361
    %v3298 = vpack.c.b16 %v2370, %v2362
    %v3299 = vpack.c.b16 %v2379, %v2371
    %v3300 = vpack.c.b16 %v2380, %v2372
    %v3301 = vpack.c.b16 %v2381, %v2373
    %v3302 = vpack.c.b16 %v2382, %v2374
    %v3303 = vpack.c.b16 %v2383, %v2375
    %v3304 = vpack.c.b16 %v2384, %v2376
    %v3305 = vpack.c.b16 %v2385, %v2377
    %v3306 = vpack.c.b16 %v2386, %v2378
    %v3307 = vpack.c.b16 %v2395, %v2387
    %v3308 = vpack.c.b16 %v2396, %v2388
    %v3309 = vpack.c.b16 %v2397, %v2389
    %v3310 = vpack.c.b16 %v2398, %v2390
    %v3311 = vpack.c.b16 %v2399, %v2391
    %v3312 = vpack.c.b16 %v2400, %v2392
    %v3313 = vpack.c.b16 %v2401, %v2393
    %v3314 = vpack.c.b16 %v2402, %v2394
    %v3315 = vpack.c.b16 %v2411, %v2403
    %v3316 = vpack.c.b16 %v2412, %v2404
    %v3317 = vpack.c.b16 %v2413, %v2405
    %v3318 = vpack.c.b16 %v2414, %v2406
    %v3319 = vpack.c.b16 %v2415, %v2407
    %v3320 = vpack.c.b16 %v2416, %v2408
    %v3321 = vpack.c.b16 %v2417, %v2409
    %v3322 = vpack.c.b16 %v2418, %v2410
    %v3323 = vpack.c.b16 %v2427, %v2419
    %v3324 = vpack.c.b16 %v2428, %v2420
    %v3325 = vpack.c.b16 %v2429, %v2421
    %v3326 = vpack.c.b16 %v2430, %v2422
    %v3327 = vpack.c.b16 %v2431, %v2423
    %v3328 = vpack.c.b16 %v2432, %v2424
    %v3329 = vpack.c.b16 %v2433, %v2425
    %v3330 = vpack.c.b16 %v2434, %v2426
    %v3331 = vpack.c.b16 %v2443, %v2435
    %v3332 = vpack.c.b16 %v2444, %v2436
    %v3333 = vpack.c.b16 %v2445, %v2437
    %v3334 = vpack.c.b16 %v2446, %v2438
    %v3335 = vpack.c.b16 %v2447, %v2439
    %v3336 = vpack.c.b16 %v2448, %v2440
    %v3337 = vpack.c.b16 %v2449, %v2441
    %v3338 = vpack.c.b16 %v2450, %v2442
    %v3339 = vpack.c.b16 %v2459, %v2451
    %v3340 = vpack.c.b16 %v2460, %v2452
    %v3341 = vpack.c.b16 %v2461, %v2453
    %v3342 = vpack.c.b16 %v2462, %v2454
    %v3343 = vpack.c.b16 %v2463, %v2455
    %v3344 = vpack.c.b16 %v2464, %v2456
    %v3345 = vpack.c.b16 %v2465, %v2457
    %v3346 = vpack.c.b16 %v2466, %v2458
    %v3347 = vpack.c.b16 %v2475, %v2467
    %v3348 = vpack.c.b16 %v2476, %v2468
    %v3349 = vpack.c.b16 %v2477, %v2469
    %v3350 = vpack.c.b16 %v2478, %v2470
    %v3351 = vpack.c.b16 %v2479, %v2471
    %v3352 = vpack.c.b16 %v2480, %v2472
    %v3353 = vpack.c.b16 %v2481, %v2473
    %v3354 = vpack.c.b16 %v2482, %v2474
    %v3355 = vpack.c.b16 %v2491, %v2483
    %v3356 = vpack.c.b16 %v2492, %v2484
    %v3357 = vpack.c.b16 %v2493, %v2485
    %v3358 = vpack.c.b16 %v2494, %v2486
    %v3359 = vpack.c.b16 %v2495, %v2487
    %v3360 = vpack.c.b16 %v2496, %v2488
    %v3361 = vpack.c.b16 %v2497, %v2489
    %v3362 = vpack.c.b16 %v2498, %v2490
    %v3363 = vpack.c.b16 %v2507, %v2499
    %v3364 = vpack.c.b16 %v2508, %v2500
    %v3365 = vpack.c.b16 %v2509, %v2501
    %v3366 = vpack.c.b16 %v2510, %v2502
    %v3367 = vpack.c.b16 %v2511, %v2503
    %v3368 = vpack.c.b16 %v2512, %v2504
    %v3369 = vpack.c.b16 %v2513, %v2505
    %v3370 = vpack.c.b16 %v2514, %v2506
    %v3371 = vpack.c.b16 %v2523, %v2515
    %v3372 = vpack.c.b16 %v2524, %v2516
    %v3373 = vpack.c.b16 %v2525, %v2517
    %v3374 = vpack.c.b16 %v2526, %v2518
    %v3375 = vpack.c.b16 %v2527, %v2519
    %v3376 = vpack.c.b16 %v2528, %v2520
    %v3377 = vpack.c.b16 %v2529, %v2521
    %v3378 = vpack.c.b16 %v2530, %v2522
    %v3379 = vpack.c.b16 %v2539, %v2531
    %v3380 = vpack.c.b16 %v2540, %v2532
    %v3381 = vpack.c.b16 %v2541, %v2533
    %v3382 = vpack.c.b16 %v2542, %v2534
    %v3383 = vpack.c.b16 %v2543, %v2535
    %v3384 = vpack.c.b16 %v2544, %v2536
    %v3385 = vpack.c.b16 %v2545, %v2537
    %v3386 = vpack.c.b16 %v2546, %v2538
    %v3387 = vpack.c.b16 %v2555, %v2547
    %v3388 = vpack.c.b16 %v2556, %v2548
    %v3389 = vpack.c.b16 %v2557, %v2549
    %v3390 = vpack.c.b16 %v2558, %v2550
    %v3391 = vpack.c.b16 %v2559, %v2551
    %v3392 = vpack.c.b16 %v2560, %v2552
    %v3393 = vpack.c.b16 %v2561, %v2553
    %v3394 = vpack.c.b16 %v2562, %v2554
    %v3395 = vpack.c.b16 %v2571, %v2563
    %v3396 = vpack.c.b16 %v2572, %v2564
    %v3397 = vpack.c.b16 %v2573, %v2565
    %v3398 = vpack.c.b16 %v2574, %v2566
    %v3399 = vpack.c.b16 %v2575, %v2567
    %v3400 = vpack.c.b16 %v2576, %v2568
    %v3401 = vpack.c.b16 %v2577, %v2569
    %v3402 = vpack.c.b16 %v2578, %v2570
    %v3403 = vpack.c.b16 %v2587, %v2579
    %v3404 = vpack.c.b16 %v2588, %v2580
    %v3405 = vpack.c.b16 %v2589, %v2581
    %v3406 = vpack.c.b16 %v2590, %v2582
    %v3407 = vpack.c.b16 %v2591, %v2583
    %v3408 = vpack.c.b16 %v2592, %v2584
    %v3409 = vpack.c.b16 %v2593, %v2585
    %v3410 = vpack.c.b16 %v2594, %v2586
    %v3411 = vpack.c.b16 %v2603, %v2595
    %v3412 = vpack.c.b16 %v2604, %v2596
    %v3413 = vpack.c.b16 %v2605, %v2597
    %v3414 = vpack.c.b16 %v2606, %v2598
    %v3415 = vpack.c.b16 %v2607, %v2599
    %v3416 = vpack.c.b16 %v2608, %v2600
    %v3417 = vpack.c.b16 %v2609, %v2601
    %v3418 = vpack.c.b16 %v2610, %v2602
    %v3419 = vpack.c.b16 %v2619, %v2611
    %v3420 = vpack.c.b16 %v2620, %v2612
    %v3421 = vpack.c.b16 %v2621, %v2613
    %v3422 = vpack.c.b16 %v2622, %v2614
    %v3423 = vpack.c.b16 %v2623, %v2615
    %v3424 = vpack.c.b16 %v2624, %v2616
    %v3425 = vpack.c.b16 %v2625, %v2617
    %v3426 = vpack.c.b16 %v2626, %v2618
    %v3427 = vpack.c.b16 %v2635, %v2627
    %v3428 = vpack.c.b16 %v2636, %v2628
    %v3429 = vpack.c.b16 %v2637, %v2629
    %v3430 = vpack.c.b16 %v2638, %v2630
    %v3431 = vpack.c.b16 %v2639, %v2631
    %v3432 = vpack.c.b16 %v2640, %v2632
    %v3433 = vpack.c.b16 %v2641, %v2633
    %v3434 = vpack.c.b16 %v2642, %v2634
    %v3435 = vpack.c.b16 %v2651, %v2643
    %v3436 = vpack.c.b16 %v2652, %v2644
    %v3437 = vpack.c.b16 %v2653, %v2645
    %v3438 = vpack.c.b16 %v2654, %v2646
    %v3439 = vpack.c.b16 %v2655, %v2647
    %v3440 = vpack.c.b16 %v2656, %v2648
    %v3441 = vpack.c.b16 %v2657, %v2649
    %v3442 = vpack.c.b16 %v2658, %v2650
    %v3443 = vpack.c.b16 %v2667, %v2659
    %v3444 = vpack.c.b16 %v2668, %v2660
    %v3445 = vpack.c.b16 %v2669, %v2661
    %v3446 = vpack.c.b16 %v2670, %v2662
    %v3447 = vpack.c.b16 %v2671, %v2663
    %v3448 = vpack.c.b16 %v2672, %v2664
    %v3449 = vpack.c.b16 %v2673, %v2665
    %v3450 = vpack.c.b16 %v2674, %v2666
    %v3451 = vpack.c.b16 %v2683, %v2675
    %v3452 = vpack.c.b16 %v2684, %v2676
    %v3453 = vpack.c.b16 %v2685, %v2677
    %v3454 = vpack.c.b16 %v2686, %v2678
    %v3455 = vpack.c.b16 %v2687, %v2679
    %v3456 = vpack.c.b16 %v2688, %v2680
    %v3457 = vpack.c.b16 %v2689, %v2681
    %v3458 = vpack.c.b16 %v2690, %v2682
    %v3459 = vpack.c.b16 %v2699, %v2691
    %v3460 = vpack.c.b16 %v2700, %v2692
    %v3461 = vpack.c.b16 %v2701, %v2693
    %v3462 = vpack.c.b16 %v2702, %v2694
    %v3463 = vpack.c.b16 %v2703, %v2695
    %v3464 = vpack.c.b16 %v2704, %v2696
    %v3465 = vpack.c.b16 %v2705, %v2697
    %v3466 = vpack.c.b16 %v2706, %v2698
    %v3467 = vpack.c.b16 %v2715, %v2707
    %v3468 = vpack.c.b16 %v2716, %v2708
    %v3469 = vpack.c.b16 %v2717, %v2709
    %v3470 = vpack.c.b16 %v2718, %v2710
    %v3471 = vpack.c.b16 %v2719, %v2711
    %v3472 = vpack.c.b16 %v2720, %v2712
    %v3473 = vpack.c.b16 %v2721, %v2713
    %v3474 = vpack.c.b16 %v2722, %v2714
    %v3475 = vpack.c.b16 %v2731, %v2723
    %v3476 = vpack.c.b16 %v2732, %v2724
    %v3477 = vpack.c.b16 %v2733, %v2725
    %v3478 = vpack.c.b16 %v2734, %v2726
    %v3479 = vpack.c.b16 %v2735, %v2727
    %v3480 = vpack.c.b16 %v2736, %v2728
    %v3481 = vpack.c.b16 %v2737, %v2729
    %v3482 = vpack.c.b16 %v2738, %v2730
    %v3483 = vpack.c.b16 %v2747, %v2739
    %v3484 = vpack.c.b16 %v2748, %v2740
    %v3485 = vpack.c.b16 %v2749, %v2741
    %v3486 = vpack.c.b16 %v2750, %v2742
    %v3487 = vpack.c.b16 %v2751, %v2743
    %v3488 = vpack.c.b16 %v2752, %v2744
    %v3489 = vpack.c.b16 %v2753, %v2745
    %v3490 = vpack.c.b16 %v2754, %v2746
    %v3491 = vpack.c.b16 %v2763, %v2755
    %v3492 = vpack.c.b16 %v2764, %v2756
    %v3493 = vpack.c.b16 %v2765, %v2757
    %v3494 = vpack.c.b16 %v2766, %v2758
    %v3495 = vpack.c.b16 %v2767, %v2759
    %v3496 = vpack.c.b16 %v2768, %v2760
    %v3497 = vpack.c.b16 %v2769, %v2761
    %v3498 = vpack.c.b16 %v2770, %v2762
    %v3499 = vpack.c.b16 %v2779, %v2771
    %v3500 = vpack.c.b16 %v2780, %v2772
    %v3501 = vpack.c.b16 %v2781, %v2773
    %v3502 = vpack.c.b16 %v2782, %v2774
    %v3503 = vpack.c.b16 %v2783, %v2775
    %v3504 = vpack.c.b16 %v2784, %v2776
    %v3505 = vpack.c.b16 %v2785, %v2777
    %v3506 = vpack.c.b16 %v2786, %v2778
    %v3507 = vpack.c.b16 %v2795, %v2787
    %v3508 = vpack.c.b16 %v2796, %v2788
    %v3509 = vpack.c.b16 %v2797, %v2789
    %v3510 = vpack.c.b16 %v2798, %v2790
    %v3511 = vpack.c.b16 %v2799, %v2791
    %v3512 = vpack.c.b16 %v2800, %v2792
    %v3513 = vpack.c.b16 %v2801, %v2793
    %v3514 = vpack.c.b16 %v2802, %v2794
    %v3515 = vpack.c.b16 %v2811, %v2803
    %v3516 = vpack.c.b16 %v2812, %v2804
    %v3517 = vpack.c.b16 %v2813, %v2805
    %v3518 = vpack.c.b16 %v2814, %v2806
    %v3519 = vpack.c.b16 %v2815, %v2807
    %v3520 = vpack.c.b16 %v2816, %v2808
    %v3521 = vpack.c.b16 %v2817, %v2809
    %v3522 = vpack.c.b16 %v2818, %v2810
    %v3523 = vpack.c.b16 %v2827, %v2819
    %v3524 = vpack.c.b16 %v2828, %v2820
    %v3525 = vpack.c.b16 %v2829, %v2821
    %v3526 = vpack.c.b16 %v2830, %v2822
    %v3527 = vpack.c.b16 %v2831, %v2823
    %v3528 = vpack.c.b16 %v2832, %v2824
    %v3529 = vpack.c.b16 %v2833, %v2825
    %v3530 = vpack.c.b16 %v2834, %v2826
    %v3531 = vpack.c.b16 %v2843, %v2835
    %v3532 = vpack.c.b16 %v2844, %v2836
    %v3533 = vpack.c.b16 %v2845, %v2837
    %v3534 = vpack.c.b16 %v2846, %v2838
    %v3535 = vpack.c.b16 %v2847, %v2839
    %v3536 = vpack.c.b16 %v2848, %v2840
    %v3537 = vpack.c.b16 %v2849, %v2841
    %v3538 = vpack.c.b16 %v2850, %v2842
    %v3539 = vpack.c.b16 %v2859, %v2851
    %v3540 = vpack.c.b16 %v2860, %v2852
    %v3541 = vpack.c.b16 %v2861, %v2853
    %v3542 = vpack.c.b16 %v2862, %v2854
    %v3543 = vpack.c.b16 %v2863, %v2855
    %v3544 = vpack.c.b16 %v2864, %v2856
    %v3545 = vpack.c.b16 %v2865, %v2857
    %v3546 = vpack.c.b16 %v2866, %v2858
    %v3547 = vpack.c.b16 %v2875, %v2867
    %v3548 = vpack.c.b16 %v2876, %v2868
    %v3549 = vpack.c.b16 %v2877, %v2869
    %v3550 = vpack.c.b16 %v2878, %v2870
    %v3551 = vpack.c.b16 %v2879, %v2871
    %v3552 = vpack.c.b16 %v2880, %v2872
    %v3553 = vpack.c.b16 %v2881, %v2873
    %v3554 = vpack.c.b16 %v2882, %v2874
    %v3555 = vpack.c.b16 %v2891, %v2883
    %v3556 = vpack.c.b16 %v2892, %v2884
    %v3557 = vpack.c.b16 %v2893, %v2885
    %v3558 = vpack.c.b16 %v2894, %v2886
    %v3559 = vpack.c.b16 %v2895, %v2887
    %v3560 = vpack.c.b16 %v2896, %v2888
    %v3561 = vpack.c.b16 %v2897, %v2889
    %v3562 = vpack.c.b16 %v2898, %v2890
    %v3563 = vpack.c.b16 %v2907, %v2899
    %v3564 = vpack.c.b16 %v2908, %v2900
    %v3565 = vpack.c.b16 %v2909, %v2901
    %v3566 = vpack.c.b16 %v2910, %v2902
    %v3567 = vpack.c.b16 %v2911, %v2903
    %v3568 = vpack.c.b16 %v2912, %v2904
    %v3569 = vpack.c.b16 %v2913, %v2905
    %v3570 = vpack.c.b16 %v2914, %v2906
    %v3571 = vpack.c.b16 %v2923, %v2915
    %v3572 = vpack.c.b16 %v2924, %v2916
    %v3573 = vpack.c.b16 %v2925, %v2917
    %v3574 = vpack.c.b16 %v2926, %v2918
    %v3575 = vpack.c.b16 %v2927, %v2919
    %v3576 = vpack.c.b16 %v2928, %v2920
    %v3577 = vpack.c.b16 %v2929, %v2921
    %v3578 = vpack.c.b16 %v2930, %v2922
    %v3579 = vpack.c.b16 %v2939, %v2931
    %v3580 = vpack.c.b16 %v2940, %v2932
    %v3581 = vpack.c.b16 %v2941, %v2933
    %v3582 = vpack.c.b16 %v2942, %v2934
    %v3583 = vpack.c.b16 %v2943, %v2935
    %v3584 = vpack.c.b16 %v2944, %v2936
    %v3585 = vpack.c.b16 %v2945, %v2937
    %v3586 = vpack.c.b16 %v2946, %v2938
    %v3587 = vpack.c.b16 %v2955, %v2947
    %v3588 = vpack.c.b16 %v2956, %v2948
    %v3589 = vpack.c.b16 %v2957, %v2949
    %v3590 = vpack.c.b16 %v2958, %v2950
    %v3591 = vpack.c.b16 %v2959, %v2951
    %v3592 = vpack.c.b16 %v2960, %v2952
    %v3593 = vpack.c.b16 %v2961, %v2953
    %v3594 = vpack.c.b16 %v2962, %v2954
    %v3595 = vpack.c.b16 %v2971, %v2963
    %v3596 = vpack.c.b16 %v2972, %v2964
    %v3597 = vpack.c.b16 %v2973, %v2965
    %v3598 = vpack.c.b16 %v2974, %v2966
    %v3599 = vpack.c.b16 %v2975, %v2967
    %v3600 = vpack.c.b16 %v2976, %v2968
    %v3601 = vpack.c.b16 %v2977, %v2969
    %v3602 = vpack.c.b16 %v2978, %v2970
    %v3603 = vpack.c.b16 %v2987, %v2979
    %v3604 = vpack.c.b16 %v2988, %v2980
    %v3605 = vpack.c.b16 %v2989, %v2981
    %v3606 = vpack.c.b16 %v2990, %v2982
    %v3607 = vpack.c.b16 %v2991, %v2983
    %v3608 = vpack.c.b16 %v2992, %v2984
    %v3609 = vpack.c.b16 %v2993, %v2985
    %v3610 = vpack.c.b16 %v2994, %v2986
    %v3611 = vpack.c.b16 %v3003, %v2995
    %v3612 = vpack.c.b16 %v3004, %v2996
    %v3613 = vpack.c.b16 %v3005, %v2997
    %v3614 = vpack.c.b16 %v3006, %v2998
    %v3615 = vpack.c.b16 %v3007, %v2999
    %v3616 = vpack.c.b16 %v3008, %v3000
    %v3617 = vpack.c.b16 %v3009, %v3001
    %v3618 = vpack.c.b16 %v3010, %v3002
    %v3619 = vpack.c.b16 %v3019, %v3011
    %v3620 = vpack.c.b16 %v3020, %v3012
    %v3621 = vpack.c.b16 %v3021, %v3013
    %v3622 = vpack.c.b16 %v3022, %v3014
    %v3623 = vpack.c.b16 %v3023, %v3015
    %v3624 = vpack.c.b16 %v3024, %v3016
    %v3625 = vpack.c.b16 %v3025, %v3017
    %v3626 = vpack.c.b16 %v3026, %v3018
    %v3627 = vpack.c.b16 %v3035, %v3027
    %v3628 = vpack.c.b16 %v3036, %v3028
    %v3629 = vpack.c.b16 %v3037, %v3029
    %v3630 = vpack.c.b16 %v3038, %v3030
    %v3631 = vpack.c.b16 %v3039, %v3031
    %v3632 = vpack.c.b16 %v3040, %v3032
    %v3633 = vpack.c.b16 %v3041, %v3033
    %v3634 = vpack.c.b16 %v3042, %v3034
    %v3635 = vpack.c.b16 %v3051, %v3043
    %v3636 = vpack.c.b16 %v3052, %v3044
    %v3637 = vpack.c.b16 %v3053, %v3045
    %v3638 = vpack.c.b16 %v3054, %v3046
    %v3639 = vpack.c.b16 %v3055, %v3047
    %v3640 = vpack.c.b16 %v3056, %v3048
    %v3641 = vpack.c.b16 %v3057, %v3049
    %v3642 = vpack.c.b16 %v3058, %v3050
    %v3643 = vpack.c.b16 %v3067, %v3059
    %v3644 = vpack.c.b16 %v3068, %v3060
    %v3645 = vpack.c.b16 %v3069, %v3061
    %v3646 = vpack.c.b16 %v3070, %v3062
    %v3647 = vpack.c.b16 %v3071, %v3063
    %v3648 = vpack.c.b16 %v3072, %v3064
    %v3649 = vpack.c.b16 %v3073, %v3065
    %v3650 = vpack.c.b16 %v3074, %v3066
    %v3651 = vpack.c.b16 %v3083, %v3075
    %v3652 = vpack.c.b16 %v3084, %v3076
    %v3653 = vpack.c.b16 %v3085, %v3077
    %v3654 = vpack.c.b16 %v3086, %v3078
    %v3655 = vpack.c.b16 %v3087, %v3079
    %v3656 = vpack.c.b16 %v3088, %v3080
    %v3657 = vpack.c.b16 %v3089, %v3081
    %v3658 = vpack.c.b16 %v3090, %v3082
    %v3659 = vpack.c.b16 %v3099, %v3091
    %v3660 = vpack.c.b16 %v3100, %v3092
    %v3661 = vpack.c.b16 %v3101, %v3093
    %v3662 = vpack.c.b16 %v3102, %v3094
    %v3663 = vpack.c.b16 %v3103, %v3095
    %v3664 = vpack.c.b16 %v3104, %v3096
    %v3665 = vpack.c.b16 %v3105, %v3097
    %v3666 = vpack.c.b16 %v3106, %v3098
    %v3667 = vpack.c.b16 %v3115, %v3107
    %v3668 = vpack.c.b16 %v3116, %v3108
    %v3669 = vpack.c.b16 %v3117, %v3109
    %v3670 = vpack.c.b16 %v3118, %v3110
    %v3671 = vpack.c.b16 %v3119, %v3111
    %v3672 = vpack.c.b16 %v3120, %v3112
    %v3673 = vpack.c.b16 %v3121, %v3113
    %v3674 = vpack.c.b16 %v3122, %v3114
    %v3675 = vpack.c.b16 %v3131, %v3123
    %v3676 = vpack.c.b16 %v3132, %v3124
    %v3677 = vpack.c.b16 %v3133, %v3125
    %v3678 = vpack.c.b16 %v3134, %v3126
    %v3679 = vpack.c.b16 %v3135, %v3127
    %v3680 = vpack.c.b16 %v3136, %v3128
    %v3681 = vpack.c.b16 %v3137, %v3129
    %v3682 = vpack.c.b16 %v3138, %v3130
    %v3683 = vpack.c.b16 %v3147, %v3139
    %v3684 = vpack.c.b16 %v3148, %v3140
    %v3685 = vpack.c.b16 %v3149, %v3141
    %v3686 = vpack.c.b16 %v3150, %v3142
    %v3687 = vpack.c.b16 %v3151, %v3143
    %v3688 = vpack.c.b16 %v3152, %v3144
    %v3689 = vpack.c.b16 %v3153, %v3145
    %v3690 = vpack.c.b16 %v3154, %v3146
    %v3691 = vpack.c.b16 %v3163, %v3155
    %v3692 = vpack.c.b16 %v3164, %v3156
    %v3693 = vpack.c.b16 %v3165, %v3157
    %v3694 = vpack.c.b16 %v3166, %v3158
    %v3695 = vpack.c.b16 %v3167, %v3159
    %v3696 = vpack.c.b16 %v3168, %v3160
    %v3697 = vpack.c.b16 %v3169, %v3161
    %v3698 = vpack.c.b16 %v3170, %v3162
    %v3699 = vpack.c.b16 %v3179, %v3171
    %v3700 = vpack.c.b16 %v3180, %v3172
    %v3701 = vpack.c.b16 %v3181, %v3173
    %v3702 = vpack.c.b16 %v3182, %v3174
    %v3703 = vpack.c.b16 %v3183, %v3175
    %v3704 = vpack.c.b16 %v3184, %v3176
    %v3705 = vpack.c.b16 %v3185, %v3177
    %v3706 = vpack.c.b16 %v3186, %v3178
    %v3707 = vpack.c.b16 %v3195, %v3187
    %v3708 = vpack.c.b16 %v3196, %v3188
    %v3709 = vpack.c.b16 %v3197, %v3189
    %v3710 = vpack.c.b16 %v3198, %v3190
    %v3711 = vpack.c.b16 %v3199, %v3191
    %v3712 = vpack.c.b16 %v3200, %v3192
    %v3713 = vpack.c.b16 %v3201, %v3193
    %v3714 = vpack.c.b16 %v3202, %v3194
    %4227 = vmatprep.subr.bf16.mxu0 %v3204
    %4228 = vmatpush1.bf16.msra.mxu0 %v3203
    %4229 = vmatprep.subr.bf16.mxu0 %v3212
    %4230 = vmatpush1.bf16.msra.mxu0 %v3211
    %4231 = vmatprep.subr.bf16.mxu0 %v3220
    %4232 = vmatpush1.bf16.msra.mxu0 %v3219
    %4233 = vmatprep.subr.bf16.mxu0 %v3228
    %4234 = vmatpush1.bf16.msra.mxu0 %v3227
    %4235 = vmatprep.subr.bf16.mxu0 %v3236
    %4236 = vmatpush1.bf16.msra.mxu0 %v3235
    %4237 = vmatprep.subr.bf16.mxu0 %v3244
    %4238 = vmatpush1.bf16.msra.mxu0 %v3243
    %4239 = vmatprep.subr.bf16.mxu0 %v3252
    %4240 = vmatpush1.bf16.msra.mxu0 %v3251
    %4241 = vmatprep.subr.bf16.mxu0 %v3260
    %4242 = vmatpush1.bf16.msra.mxu0 %v3259
    %4243 = vmatprep.subr.bf16.mxu0 %v3268
    %4244 = vmatpush1.bf16.msra.mxu0 %v3267
    %4245 = vmatprep.subr.bf16.mxu0 %v3276
    %4246 = vmatpush1.bf16.msra.mxu0 %v3275
    %4247 = vmatprep.subr.bf16.mxu0 %v3284
    %4248 = vmatpush1.bf16.msra.mxu0 %v3283
    %4249 = vmatprep.subr.bf16.mxu0 %v3292
    %4250 = vmatpush1.bf16.msra.mxu0 %v3291
    %4251 = vmatprep.subr.bf16.mxu0 %v3300
    %4252 = vmatpush1.bf16.msra.mxu0 %v3299
    %4253 = vmatprep.subr.bf16.mxu0 %v3308
    %4254 = vmatpush1.bf16.msra.mxu0 %v3307
    %4255 = vmatprep.subr.bf16.mxu0 %v3316
    %4256 = vmatpush1.bf16.msra.mxu0 %v3315
    %4257 = vmatprep.subr.bf16.mxu0 %v3324
    %4258 = vmatpush1.bf16.msra.mxu0 %v3323
    %4259 = vmatprep.mubr.bf16.mxu0 %v1106
    %4260 = vmatmul.mubr.bf16.gmra.mrb[0].mxu0 %v1105
    %v4261 = vpop.f32.mrb[0].mxu0
    %v4262 = vadd.f32 %v1630, %v4261
    %v4263 = vpop.f32.mrb[0].mxu0
    %v4264 = vadd.f32 %v1634, %v4263
    %v4265 = vpop.f32.mrb[0].mxu0
    %v4266 = vpop.f32.mrb[0].mxu0
    %4267 = vdwg.mxu0
    %4268 = vmatprep.subr.bf16.mxu0 %v3332
    %4269 = vmatpush1.bf16.msra.mxu0 %v3331
    %4270 = vmatprep.subr.bf16.mxu0 %v3340
    %4271 = vmatpush1.bf16.msra.mxu0 %v3339
    %4272 = vmatprep.subr.bf16.mxu0 %v3348
    %4273 = vmatpush1.bf16.msra.mxu0 %v3347
    %4274 = vmatprep.subr.bf16.mxu0 %v3356
    %4275 = vmatpush1.bf16.msra.mxu0 %v3355
    %4276 = vmatprep.subr.bf16.mxu0 %v3364
    %4277 = vmatpush1.bf16.msra.mxu0 %v3363
    %4278 = vmatprep.subr.bf16.mxu0 %v3372
    %4279 = vmatpush1.bf16.msra.mxu0 %v3371
    %4280 = vmatprep.subr.bf16.mxu0 %v3380
    %4281 = vmatpush1.bf16.msra.mxu0 %v3379
    %4282 = vmatprep.subr.bf16.mxu0 %v3388
    %4283 = vmatpush1.bf16.msra.mxu0 %v3387
    %4284 = vmatprep.subr.bf16.mxu0 %v3396
    %4285 = vmatpush1.bf16.msra.mxu0 %v3395
    %4286 = vmatprep.subr.bf16.mxu0 %v3404
    %4287 = vmatpush1.bf16.msra.mxu0 %v3403
    %4288 = vmatprep.subr.bf16.mxu0 %v3412
    %4289 = vmatpush1.bf16.msra.mxu0 %v3411
    %4290 = vmatprep.subr.bf16.mxu0 %v3420
    %4291 = vmatpush1.bf16.msra.mxu0 %v3419
    %4292 = vmatprep.subr.bf16.mxu0 %v3428
    %4293 = vmatpush1.bf16.msra.mxu0 %v3427
    %4294 = vmatprep.subr.bf16.mxu0 %v3436
    %4295 = vmatpush1.bf16.msra.mxu0 %v3435
    %4296 = vmatprep.subr.bf16.mxu0 %v3444
    %4297 = vmatpush1.bf16.msra.mxu0 %v3443
    %4298 = vmatprep.subr.bf16.mxu0 %v3452
    %4299 = vmatpush1.bf16.msra.mxu0 %v3451
    %4300 = vmatprep.mubr.bf16.mxu0 %v1108
    %4301 = vmatmul.mubr.bf16.gmra.mrb[0].mxu0 %v1107
    %v4302 = vpop.f32.mrb[0].mxu0
    %v4303 = vadd.f32 %v4262, %v4302
    %v4304 = vpop.f32.mrb[0].mxu0
    %v4305 = vadd.f32 %v4264, %v4304
    %v4306 = vpop.f32.mrb[0].mxu0
    %v4307 = vpop.f32.mrb[0].mxu0
    %4308 = vdwg.mxu0
    %4309 = vmatprep.subr.bf16.mxu0 %v3460
    %4310 = vmatpush1.bf16.msra.mxu0 %v3459
    %4311 = vmatprep.subr.bf16.mxu0 %v3468
    %4312 = vmatpush1.bf16.msra.mxu0 %v3467
    %4313 = vmatprep.subr.bf16.mxu0 %v3476
    %4314 = vmatpush1.bf16.msra.mxu0 %v3475
    %4315 = vmatprep.subr.bf16.mxu0 %v3484
    %4316 = vmatpush1.bf16.msra.mxu0 %v3483
    %4317 = vmatprep.subr.bf16.mxu0 %v3492
    %4318 = vmatpush1.bf16.msra.mxu0 %v3491
    %4319 = vmatprep.subr.bf16.mxu0 %v3500
    %4320 = vmatpush1.bf16.msra.mxu0 %v3499
    %4321 = vmatprep.subr.bf16.mxu0 %v3508
    %4322 = vmatpush1.bf16.msra.mxu0 %v3507
    %4323 = vmatprep.subr.bf16.mxu0 %v3516
    %4324 = vmatpush1.bf16.msra.mxu0 %v3515
    %4325 = vmatprep.subr.bf16.mxu0 %v3524
    %4326 = vmatpush1.bf16.msra.mxu0 %v3523
    %4327 = vmatprep.subr.bf16.mxu0 %v3532
    %4328 = vmatpush1.bf16.msra.mxu0 %v3531
    %4329 = vmatprep.subr.bf16.mxu0 %v3540
    %4330 = vmatpush1.bf16.msra.mxu0 %v3539
    %4331 = vmatprep.subr.bf16.mxu0 %v3548
    %4332 = vmatpush1.bf16.msra.mxu0 %v3547
    %4333 = vmatprep.subr.bf16.mxu0 %v3556
    %4334 = vmatpush1.bf16.msra.mxu0 %v3555
    %4335 = vmatprep.subr.bf16.mxu0 %v3564
    %4336 = vmatpush1.bf16.msra.mxu0 %v3563
    %4337 = vmatprep.subr.bf16.mxu0 %v3572
    %4338 = vmatpush1.bf16.msra.mxu0 %v3571
    %4339 = vmatprep.subr.bf16.mxu0 %v3580
    %4340 = vmatpush1.bf16.msra.mxu0 %v3579
    %4341 = vmatprep.mubr.bf16.mxu0 %v1110
    %4342 = vmatmul.mubr.bf16.gmra.mrb[0].mxu0 %v1109
    %v4343 = vpop.f32.mrb[0].mxu0
    %v4344 = vadd.f32 %v4303, %v4343
    %v4345 = vpop.f32.mrb[0].mxu0
    %v4346 = vadd.f32 %v4305, %v4345
    %v4347 = vpop.f32.mrb[0].mxu0
    %v4348 = vpop.f32.mrb[0].mxu0
    %4349 = vdwg.mxu0
    %4350 = vmatprep.subr.bf16.mxu0 %v3588
    %4351 = vmatpush1.bf16.msra.mxu0 %v3587
    %4352 = vmatprep.subr.bf16.mxu0 %v3596
    %4353 = vmatpush1.bf16.msra.mxu0 %v3595
    %4354 = vmatprep.subr.bf16.mxu0 %v3604
    %4355 = vmatpush1.bf16.msra.mxu0 %v3603
    %4356 = vmatprep.subr.bf16.mxu0 %v3612
    %4357 = vmatpush1.bf16.msra.mxu0 %v3611
    %4358 = vmatprep.subr.bf16.mxu0 %v3620
    %4359 = vmatpush1.bf16.msra.mxu0 %v3619
    %4360 = vmatprep.subr.bf16.mxu0 %v3628
    %4361 = vmatpush1.bf16.msra.mxu0 %v3627
    %4362 = vmatprep.subr.bf16.mxu0 %v3636
    %4363 = vmatpush1.bf16.msra.mxu0 %v3635
    %4364 = vmatprep.subr.bf16.mxu0 %v3644
    %4365 = vmatpush1.bf16.msra.mxu0 %v3643
    %4366 = vmatprep.subr.bf16.mxu0 %v3652
    %4367 = vmatpush1.bf16.msra.mxu0 %v3651
    %4368 = vmatprep.subr.bf16.mxu0 %v3660
    %4369 = vmatpush1.bf16.msra.mxu0 %v3659
    %4370 = vmatprep.subr.bf16.mxu0 %v3668
    %4371 = vmatpush1.bf16.msra.mxu0 %v3667
    %4372 = vmatprep.subr.bf16.mxu0 %v3676
    %4373 = vmatpush1.bf16.msra.mxu0 %v3675
    %4374 = vmatprep.subr.bf16.mxu0 %v3684
    %4375 = vmatpush1.bf16.msra.mxu0 %v3683
    %4376 = vmatprep.subr.bf16.mxu0 %v3692
    %4377 = vmatpush1.bf16.msra.mxu0 %v3691
    %4378 = vmatprep.subr.bf16.mxu0 %v3700
    %4379 = vmatpush1.bf16.msra.mxu0 %v3699
    %4380 = vmatprep.subr.bf16.mxu0 %v3708
    %4381 = vmatpush1.bf16.msra.mxu0 %v3707
    %4382 = vmatprep.mubr.bf16.mxu0 %v1112
    %4383 = vmatmul.mubr.bf16.gmra.mrb[0].mxu0 %v1111
    %v4384 = vpop.f32.mrb[0].mxu0
    %v4385 = vadd.f32 %v4344, %v4384
    %v4386 = vpop.f32.mrb[0].mxu0
    %v4387 = vadd.f32 %v4346, %v4386
    %v4388 = vpop.f32.mrb[0].mxu0
    %v4389 = vpop.f32.mrb[0].mxu0
    %4390 = vdwg.mxu0
    %4391 = vmatprep.subr.bf16.mxu0 %v3206
    %4392 = vmatpush1.bf16.msra.mxu0 %v3205
    %4393 = vmatprep.subr.bf16.mxu0 %v3214
    %4394 = vmatpush1.bf16.msra.mxu0 %v3213
    %4395 = vmatprep.subr.bf16.mxu0 %v3222
    %4396 = vmatpush1.bf16.msra.mxu0 %v3221
    %4397 = vmatprep.subr.bf16.mxu0 %v3230
    %4398 = vmatpush1.bf16.msra.mxu0 %v3229
    %4399 = vmatprep.subr.bf16.mxu0 %v3238
    %4400 = vmatpush1.bf16.msra.mxu0 %v3237
    %4401 = vmatprep.subr.bf16.mxu0 %v3246
    %4402 = vmatpush1.bf16.msra.mxu0 %v3245
    %4403 = vmatprep.subr.bf16.mxu0 %v3254
    %4404 = vmatpush1.bf16.msra.mxu0 %v3253
    %4405 = vmatprep.subr.bf16.mxu0 %v3262
    %4406 = vmatpush1.bf16.msra.mxu0 %v3261
    %4407 = vmatprep.subr.bf16.mxu0 %v3270
    %4408 = vmatpush1.bf16.msra.mxu0 %v3269
    %4409 = vmatprep.subr.bf16.mxu0 %v3278
    %4410 = vmatpush1.bf16.msra.mxu0 %v3277
    %4411 = vmatprep.subr.bf16.mxu0 %v3286
    %4412 = vmatpush1.bf16.msra.mxu0 %v3285
    %4413 = vmatprep.subr.bf16.mxu0 %v3294
    %4414 = vmatpush1.bf16.msra.mxu0 %v3293
    %4415 = vmatprep.subr.bf16.mxu0 %v3302
    %4416 = vmatpush1.bf16.msra.mxu0 %v3301
    %4417 = vmatprep.subr.bf16.mxu0 %v3310
    %4418 = vmatpush1.bf16.msra.mxu0 %v3309
    %4419 = vmatprep.subr.bf16.mxu0 %v3318
    %4420 = vmatpush1.bf16.msra.mxu0 %v3317
    %4421 = vmatprep.subr.bf16.mxu0 %v3326
    %4422 = vmatpush1.bf16.msra.mxu0 %v3325
    %4423 = vmatprep.mubr.bf16.mxu0 %v1106
    %4424 = vmatmul.mubr.bf16.gmra.mrb[0].mxu0 %v1105
    %v4425 = vpop.f32.mrb[0].mxu0
    %v4426 = vadd.f32 %v1638, %v4425
    %v4427 = vpop.f32.mrb[0].mxu0
    %v4428 = vadd.f32 %v1642, %v4427
    %v4429 = vpop.f32.mrb[0].mxu0
    %v4430 = vpop.f32.mrb[0].mxu0
    %4431 = vdwg.mxu0
    %4432 = vmatprep.subr.bf16.mxu0 %v3334
    %4433 = vmatpush1.bf16.msra.mxu0 %v3333
    %4434 = vmatprep.subr.bf16.mxu0 %v3342
    %4435 = vmatpush1.bf16.msra.mxu0 %v3341
    %4436 = vmatprep.subr.bf16.mxu0 %v3350
    %4437 = vmatpush1.bf16.msra.mxu0 %v3349
    %4438 = vmatprep.subr.bf16.mxu0 %v3358
    %4439 = vmatpush1.bf16.msra.mxu0 %v3357
    %4440 = vmatprep.subr.bf16.mxu0 %v3366
    %4441 = vmatpush1.bf16.msra.mxu0 %v3365
    %4442 = vmatprep.subr.bf16.mxu0 %v3374
    %4443 = vmatpush1.bf16.msra.mxu0 %v3373
    %4444 = vmatprep.subr.bf16.mxu0 %v3382
    %4445 = vmatpush1.bf16.msra.mxu0 %v3381
    %4446 = vmatprep.subr.bf16.mxu0 %v3390
    %4447 = vmatpush1.bf16.msra.mxu0 %v3389
    %4448 = vmatprep.subr.bf16.mxu0 %v3398
    %4449 = vmatpush1.bf16.msra.mxu0 %v3397
    %4450 = vmatprep.subr.bf16.mxu0 %v3406
    %4451 = vmatpush1.bf16.msra.mxu0 %v3405
    %4452 = vmatprep.subr.bf16.mxu0 %v3414
    %4453 = vmatpush1.bf16.msra.mxu0 %v3413
    %4454 = vmatprep.subr.bf16.mxu0 %v3422
    %4455 = vmatpush1.bf16.msra.mxu0 %v3421
    %4456 = vmatprep.subr.bf16.mxu0 %v3430
    %4457 = vmatpush1.bf16.msra.mxu0 %v3429
    %4458 = vmatprep.subr.bf16.mxu0 %v3438
    %4459 = vmatpush1.bf16.msra.mxu0 %v3437
    %4460 = vmatprep.subr.bf16.mxu0 %v3446
    %4461 = vmatpush1.bf16.msra.mxu0 %v3445
    %4462 = vmatprep.subr.bf16.mxu0 %v3454
    %4463 = vmatpush1.bf16.msra.mxu0 %v3453
    %4464 = vmatprep.mubr.bf16.mxu0 %v1108
    %4465 = vmatmul.mubr.bf16.gmra.mrb[0].mxu0 %v1107
    %v4466 = vpop.f32.mrb[0].mxu0
    %v4467 = vadd.f32 %v4426, %v4466
    %v4468 = vpop.f32.mrb[0].mxu0
    %v4469 = vadd.f32 %v4428, %v4468
    %v4470 = vpop.f32.mrb[0].mxu0
    %v4471 = vpop.f32.mrb[0].mxu0
    %4472 = vdwg.mxu0
    %4473 = vmatprep.subr.bf16.mxu0 %v3462
    %4474 = vmatpush1.bf16.msra.mxu0 %v3461
    %4475 = vmatprep.subr.bf16.mxu0 %v3470
    %4476 = vmatpush1.bf16.msra.mxu0 %v3469
    %4477 = vmatprep.subr.bf16.mxu0 %v3478
    %4478 = vmatpush1.bf16.msra.mxu0 %v3477
    %4479 = vmatprep.subr.bf16.mxu0 %v3486
    %4480 = vmatpush1.bf16.msra.mxu0 %v3485
    %4481 = vmatprep.subr.bf16.mxu0 %v3494
    %4482 = vmatpush1.bf16.msra.mxu0 %v3493
    %4483 = vmatprep.subr.bf16.mxu0 %v3502
    %4484 = vmatpush1.bf16.msra.mxu0 %v3501
    %4485 = vmatprep.subr.bf16.mxu0 %v3510
    %4486 = vmatpush1.bf16.msra.mxu0 %v3509
    %4487 = vmatprep.subr.bf16.mxu0 %v3518
    %4488 = vmatpush1.bf16.msra.mxu0 %v3517
    %4489 = vmatprep.subr.bf16.mxu0 %v3526
    %4490 = vmatpush1.bf16.msra.mxu0 %v3525
    %4491 = vmatprep.subr.bf16.mxu0 %v3534
    %4492 = vmatpush1.bf16.msra.mxu0 %v3533
    %4493 = vmatprep.subr.bf16.mxu0 %v3542
    %4494 = vmatpush1.bf16.msra.mxu0 %v3541
    %4495 = vmatprep.subr.bf16.mxu0 %v3550
    %4496 = vmatpush1.bf16.msra.mxu0 %v3549
    %4497 = vmatprep.subr.bf16.mxu0 %v3558
    %4498 = vmatpush1.bf16.msra.mxu0 %v3557
    %4499 = vmatprep.subr.bf16.mxu0 %v3566
    %4500 = vmatpush1.bf16.msra.mxu0 %v3565
    %4501 = vmatprep.subr.bf16.mxu0 %v3574
    %4502 = vmatpush1.bf16.msra.mxu0 %v3573
    %4503 = vmatprep.subr.bf16.mxu0 %v3582
    %4504 = vmatpush1.bf16.msra.mxu0 %v3581
    %4505 = vmatprep.mubr.bf16.mxu0 %v1110
    %4506 = vmatmul.mubr.bf16.gmra.mrb[0].mxu0 %v1109
    %v4507 = vpop.f32.mrb[0].mxu0
    %v4508 = vadd.f32 %v4467, %v4507
    %v4509 = vpop.f32.mrb[0].mxu0
    %v4510 = vadd.f32 %v4469, %v4509
    %v4511 = vpop.f32.mrb[0].mxu0
    %v4512 = vpop.f32.mrb[0].mxu0
    %4513 = vdwg.mxu0
    %4514 = vmatprep.subr.bf16.mxu0 %v3590
    %4515 = vmatpush1.bf16.msra.mxu0 %v3589
    %4516 = vmatprep.subr.bf16.mxu0 %v3598
    %4517 = vmatpush1.bf16.msra.mxu0 %v3597
    %4518 = vmatprep.subr.bf16.mxu0 %v3606
    %4519 = vmatpush1.bf16.msra.mxu0 %v3605
    %4520 = vmatprep.subr.bf16.mxu0 %v3614
    %4521 = vmatpush1.bf16.msra.mxu0 %v3613
    %4522 = vmatprep.subr.bf16.mxu0 %v3622
    %4523 = vmatpush1.bf16.msra.mxu0 %v3621
    %4524 = vmatprep.subr.bf16.mxu0 %v3630
    %4525 = vmatpush1.bf16.msra.mxu0 %v3629
    %4526 = vmatprep.subr.bf16.mxu0 %v3638
    %4527 = vmatpush1.bf16.msra.mxu0 %v3637
    %4528 = vmatprep.subr.bf16.mxu0 %v3646
    %4529 = vmatpush1.bf16.msra.mxu0 %v3645
    %4530 = vmatprep.subr.bf16.mxu0 %v3654
    %4531 = vmatpush1.bf16.msra.mxu0 %v3653
    %4532 = vmatprep.subr.bf16.mxu0 %v3662
    %4533 = vmatpush1.bf16.msra.mxu0 %v3661
    %4534 = vmatprep.subr.bf16.mxu0 %v3670
    %4535 = vmatpush1.bf16.msra.mxu0 %v3669
    %4536 = vmatprep.subr.bf16.mxu0 %v3678
    %4537 = vmatpush1.bf16.msra.mxu0 %v3677
    %4538 = vmatprep.subr.bf16.mxu0 %v3686
    %4539 = vmatpush1.bf16.msra.mxu0 %v3685
    %4540 = vmatprep.subr.bf16.mxu0 %v3694
    %4541 = vmatpush1.bf16.msra.mxu0 %v3693
    %4542 = vmatprep.subr.bf16.mxu0 %v3702
    %4543 = vmatpush1.bf16.msra.mxu0 %v3701
    %4544 = vmatprep.subr.bf16.mxu0 %v3710
    %4545 = vmatpush1.bf16.msra.mxu0 %v3709
    %4546 = vmatprep.mubr.bf16.mxu0 %v1112
    %4547 = vmatmul.mubr.bf16.gmra.mrb[0].mxu0 %v1111
    %v4548 = vpop.f32.mrb[0].mxu0
    %v4549 = vadd.f32 %v4508, %v4548
    %v4550 = vpop.f32.mrb[0].mxu0
    %v4551 = vadd.f32 %v4510, %v4550
    %v4552 = vpop.f32.mrb[0].mxu0
    %v4553 = vpop.f32.mrb[0].mxu0
    %4554 = vdwg.mxu0
    %4555 = vmatprep.subr.bf16.mxu0 %v3208
    %4556 = vmatpush1.bf16.msra.mxu0 %v3207
    %4557 = vmatprep.subr.bf16.mxu0 %v3216
    %4558 = vmatpush1.bf16.msra.mxu0 %v3215
    %4559 = vmatprep.subr.bf16.mxu0 %v3224
    %4560 = vmatpush1.bf16.msra.mxu0 %v3223
    %4561 = vmatprep.subr.bf16.mxu0 %v3232
    %4562 = vmatpush1.bf16.msra.mxu0 %v3231
    %4563 = vmatprep.subr.bf16.mxu0 %v3240
    %4564 = vmatpush1.bf16.msra.mxu0 %v3239
    %4565 = vmatprep.subr.bf16.mxu0 %v3248
    %4566 = vmatpush1.bf16.msra.mxu0 %v3247
    %4567 = vmatprep.subr.bf16.mxu0 %v3256
    %4568 = vmatpush1.bf16.msra.mxu0 %v3255
    %4569 = vmatprep.subr.bf16.mxu0 %v3264
    %4570 = vmatpush1.bf16.msra.mxu0 %v3263
    %4571 = vmatprep.subr.bf16.mxu0 %v3272
    %4572 = vmatpush1.bf16.msra.mxu0 %v3271
    %4573 = vmatprep.subr.bf16.mxu0 %v3280
    %4574 = vmatpush1.bf16.msra.mxu0 %v3279
    %4575 = vmatprep.subr.bf16.mxu0 %v3288
    %4576 = vmatpush1.bf16.msra.mxu0 %v3287
    %4577 = vmatprep.subr.bf16.mxu0 %v3296
    %4578 = vmatpush1.bf16.msra.mxu0 %v3295
    %4579 = vmatprep.subr.bf16.mxu0 %v3304
    %4580 = vmatpush1.bf16.msra.mxu0 %v3303
    %4581 = vmatprep.subr.bf16.mxu0 %v3312
    %4582 = vmatpush1.bf16.msra.mxu0 %v3311
    %4583 = vmatprep.subr.bf16.mxu0 %v3320
    %4584 = vmatpush1.bf16.msra.mxu0 %v3319
    %4585 = vmatprep.subr.bf16.mxu0 %v3328
    %4586 = vmatpush1.bf16.msra.mxu0 %v3327
    %4587 = vmatprep.mubr.bf16.mxu0 %v1106
    %4588 = vmatmul.mubr.bf16.gmra.mrb[0].mxu0 %v1105
    %v4589 = vpop.f32.mrb[0].mxu0
    %v4590 = vadd.f32 %v1646, %v4589
    %v4591 = vpop.f32.mrb[0].mxu0
    %v4592 = vadd.f32 %v1650, %v4591
    %v4593 = vpop.f32.mrb[0].mxu0
    %v4594 = vpop.f32.mrb[0].mxu0
    %4595 = vdwg.mxu0
    %4596 = vmatprep.subr.bf16.mxu0 %v3336
    %4597 = vmatpush1.bf16.msra.mxu0 %v3335
    %4598 = vmatprep.subr.bf16.mxu0 %v3344
    %4599 = vmatpush1.bf16.msra.mxu0 %v3343
    %4600 = vmatprep.subr.bf16.mxu0 %v3352
    %4601 = vmatpush1.bf16.msra.mxu0 %v3351
    %4602 = vmatprep.subr.bf16.mxu0 %v3360
    %4603 = vmatpush1.bf16.msra.mxu0 %v3359
    %4604 = vmatprep.subr.bf16.mxu0 %v3368
    %4605 = vmatpush1.bf16.msra.mxu0 %v3367
    %4606 = vmatprep.subr.bf16.mxu0 %v3376
    %4607 = vmatpush1.bf16.msra.mxu0 %v3375
    %4608 = vmatprep.subr.bf16.mxu0 %v3384
    %4609 = vmatpush1.bf16.msra.mxu0 %v3383
    %4610 = vmatprep.subr.bf16.mxu0 %v3392
    %4611 = vmatpush1.bf16.msra.mxu0 %v3391
    %4612 = vmatprep.subr.bf16.mxu0 %v3400
    %4613 = vmatpush1.bf16.msra.mxu0 %v3399
    %4614 = vmatprep.subr.bf16.mxu0 %v3408
    %4615 = vmatpush1.bf16.msra.mxu0 %v3407
    %4616 = vmatprep.subr.bf16.mxu0 %v3416
    %4617 = vmatpush1.bf16.msra.mxu0 %v3415
    %4618 = vmatprep.subr.bf16.mxu0 %v3424
    %4619 = vmatpush1.bf16.msra.mxu0 %v3423
    %4620 = vmatprep.subr.bf16.mxu0 %v3432
    %4621 = vmatpush1.bf16.msra.mxu0 %v3431
    %4622 = vmatprep.subr.bf16.mxu0 %v3440
    %4623 = vmatpush1.bf16.msra.mxu0 %v3439
    %4624 = vmatprep.subr.bf16.mxu0 %v3448
    %4625 = vmatpush1.bf16.msra.mxu0 %v3447
    %4626 = vmatprep.subr.bf16.mxu0 %v3456
    %4627 = vmatpush1.bf16.msra.mxu0 %v3455
    %4628 = vmatprep.mubr.bf16.mxu0 %v1108
    %4629 = vmatmul.mubr.bf16.gmra.mrb[0].mxu0 %v1107
    %v4630 = vpop.f32.mrb[0].mxu0
    %v4631 = vadd.f32 %v4590, %v4630
    %v4632 = vpop.f32.mrb[0].mxu0
    %v4633 = vadd.f32 %v4592, %v4632
    %v4634 = vpop.f32.mrb[0].mxu0
    %v4635 = vpop.f32.mrb[0].mxu0
    %4636 = vdwg.mxu0
    %4637 = vmatprep.subr.bf16.mxu0 %v3464
    %4638 = vmatpush1.bf16.msra.mxu0 %v3463
    %4639 = vmatprep.subr.bf16.mxu0 %v3472
    %4640 = vmatpush1.bf16.msra.mxu0 %v3471
    %4641 = vmatprep.subr.bf16.mxu0 %v3480
    %4642 = vmatpush1.bf16.msra.mxu0 %v3479
    %4643 = vmatprep.subr.bf16.mxu0 %v3488
    %4644 = vmatpush1.bf16.msra.mxu0 %v3487
    %4645 = vmatprep.subr.bf16.mxu0 %v3496
    %4646 = vmatpush1.bf16.msra.mxu0 %v3495
    %4647 = vmatprep.subr.bf16.mxu0 %v3504
    %4648 = vmatpush1.bf16.msra.mxu0 %v3503
    %4649 = vmatprep.subr.bf16.mxu0 %v3512
    %4650 = vmatpush1.bf16.msra.mxu0 %v3511
    %4651 = vmatprep.subr.bf16.mxu0 %v3520
    %4652 = vmatpush1.bf16.msra.mxu0 %v3519
    %4653 = vmatprep.subr.bf16.mxu0 %v3528
    %4654 = vmatpush1.bf16.msra.mxu0 %v3527
    %4655 = vmatprep.subr.bf16.mxu0 %v3536
    %4656 = vmatpush1.bf16.msra.mxu0 %v3535
    %4657 = vmatprep.subr.bf16.mxu0 %v3544
    %4658 = vmatpush1.bf16.msra.mxu0 %v3543
    %4659 = vmatprep.subr.bf16.mxu0 %v3552
    %4660 = vmatpush1.bf16.msra.mxu0 %v3551
    %4661 = vmatprep.subr.bf16.mxu0 %v3560
    %4662 = vmatpush1.bf16.msra.mxu0 %v3559
    %4663 = vmatprep.subr.bf16.mxu0 %v3568
    %4664 = vmatpush1.bf16.msra.mxu0 %v3567
    %4665 = vmatprep.subr.bf16.mxu0 %v3576
    %4666 = vmatpush1.bf16.msra.mxu0 %v3575
    %4667 = vmatprep.subr.bf16.mxu0 %v3584
    %4668 = vmatpush1.bf16.msra.mxu0 %v3583
    %4669 = vmatprep.mubr.bf16.mxu0 %v1110
    %4670 = vmatmul.mubr.bf16.gmra.mrb[0].mxu0 %v1109
    %v4671 = vpop.f32.mrb[0].mxu0
    %v4672 = vadd.f32 %v4631, %v4671
    %v4673 = vpop.f32.mrb[0].mxu0
    %v4674 = vadd.f32 %v4633, %v4673
    %v4675 = vpop.f32.mrb[0].mxu0
    %v4676 = vpop.f32.mrb[0].mxu0
    %4677 = vdwg.mxu0
    %4678 = vmatprep.subr.bf16.mxu0 %v3592
    %4679 = vmatpush1.bf16.msra.mxu0 %v3591
    %4680 = vmatprep.subr.bf16.mxu0 %v3600
    %4681 = vmatpush1.bf16.msra.mxu0 %v3599
    %4682 = vmatprep.subr.bf16.mxu0 %v3608
    %4683 = vmatpush1.bf16.msra.mxu0 %v3607
    %4684 = vmatprep.subr.bf16.mxu0 %v3616
    %4685 = vmatpush1.bf16.msra.mxu0 %v3615
    %4686 = vmatprep.subr.bf16.mxu0 %v3624
    %4687 = vmatpush1.bf16.msra.mxu0 %v3623
    %4688 = vmatprep.subr.bf16.mxu0 %v3632
    %4689 = vmatpush1.bf16.msra.mxu0 %v3631
    %4690 = vmatprep.subr.bf16.mxu0 %v3640
    %4691 = vmatpush1.bf16.msra.mxu0 %v3639
    %4692 = vmatprep.subr.bf16.mxu0 %v3648
    %4693 = vmatpush1.bf16.msra.mxu0 %v3647
    %4694 = vmatprep.subr.bf16.mxu0 %v3656
    %4695 = vmatpush1.bf16.msra.mxu0 %v3655
    %4696 = vmatprep.subr.bf16.mxu0 %v3664
    %4697 = vmatpush1.bf16.msra.mxu0 %v3663
    %4698 = vmatprep.subr.bf16.mxu0 %v3672
    %4699 = vmatpush1.bf16.msra.mxu0 %v3671
    %4700 = vmatprep.subr.bf16.mxu0 %v3680
    %4701 = vmatpush1.bf16.msra.mxu0 %v3679
    %4702 = vmatprep.subr.bf16.mxu0 %v3688
    %4703 = vmatpush1.bf16.msra.mxu0 %v3687
    %4704 = vmatprep.subr.bf16.mxu0 %v3696
    %4705 = vmatpush1.bf16.msra.mxu0 %v3695
    %4706 = vmatprep.subr.bf16.mxu0 %v3704
    %4707 = vmatpush1.bf16.msra.mxu0 %v3703
    %4708 = vmatprep.subr.bf16.mxu0 %v3712
    %4709 = vmatpush1.bf16.msra.mxu0 %v3711
    %4710 = vmatprep.mubr.bf16.mxu0 %v1112
    %4711 = vmatmul.mubr.bf16.gmra.mrb[0].mxu0 %v1111
    %v4712 = vpop.f32.mrb[0].mxu0
    %v4713 = vadd.f32 %v4672, %v4712
    %v4714 = vpop.f32.mrb[0].mxu0
    %v4715 = vadd.f32 %v4674, %v4714
    %v4716 = vpop.f32.mrb[0].mxu0
    %v4717 = vpop.f32.mrb[0].mxu0
    %4718 = vdwg.mxu0
    %4719 = vmatprep.subr.bf16.mxu0 %v3210
    %4720 = vmatpush1.bf16.msra.mxu0 %v3209
    %4721 = vmatprep.subr.bf16.mxu0 %v3218
    %4722 = vmatpush1.bf16.msra.mxu0 %v3217
    %4723 = vmatprep.subr.bf16.mxu0 %v3226
    %4724 = vmatpush1.bf16.msra.mxu0 %v3225
    %4725 = vmatprep.subr.bf16.mxu0 %v3234
    %4726 = vmatpush1.bf16.msra.mxu0 %v3233
    %4727 = vmatprep.subr.bf16.mxu0 %v3242
    %4728 = vmatpush1.bf16.msra.mxu0 %v3241
    %4729 = vmatprep.subr.bf16.mxu0 %v3250
    %4730 = vmatpush1.bf16.msra.mxu0 %v3249
    %4731 = vmatprep.subr.bf16.mxu0 %v3258
    %4732 = vmatpush1.bf16.msra.mxu0 %v3257
    %4733 = vmatprep.subr.bf16.mxu0 %v3266
    %4734 = vmatpush1.bf16.msra.mxu0 %v3265
    %4735 = vmatprep.subr.bf16.mxu0 %v3274
    %4736 = vmatpush1.bf16.msra.mxu0 %v3273
    %4737 = vmatprep.subr.bf16.mxu0 %v3282
    %4738 = vmatpush1.bf16.msra.mxu0 %v3281
    %4739 = vmatprep.subr.bf16.mxu0 %v3290
    %4740 = vmatpush1.bf16.msra.mxu0 %v3289
    %4741 = vmatprep.subr.bf16.mxu0 %v3298
    %4742 = vmatpush1.bf16.msra.mxu0 %v3297
    %4743 = vmatprep.subr.bf16.mxu0 %v3306
    %4744 = vmatpush1.bf16.msra.mxu0 %v3305
    %4745 = vmatprep.subr.bf16.mxu0 %v3314
    %4746 = vmatpush1.bf16.msra.mxu0 %v3313
    %4747 = vmatprep.subr.bf16.mxu0 %v3322
    %4748 = vmatpush1.bf16.msra.mxu0 %v3321
    %4749 = vmatprep.subr.bf16.mxu0 %v3330
    %4750 = vmatpush1.bf16.msra.mxu0 %v3329
    %4751 = vmatprep.mubr.bf16.mxu0 %v1106
    %4752 = vmatmul.mubr.bf16.gmra.mrb[0].mxu0 %v1105
    %v4753 = vpop.f32.mrb[0].mxu0
    %v4754 = vadd.f32 %v1654, %v4753
    %v4755 = vpop.f32.mrb[0].mxu0
    %v4756 = vadd.f32 %v1658, %v4755
    %v4757 = vpop.f32.mrb[0].mxu0
    %v4758 = vpop.f32.mrb[0].mxu0
    %4759 = vdwg.mxu0
    %4760 = vmatprep.subr.bf16.mxu0 %v3338
    %4761 = vmatpush1.bf16.msra.mxu0 %v3337
    %4762 = vmatprep.subr.bf16.mxu0 %v3346
    %4763 = vmatpush1.bf16.msra.mxu0 %v3345
    %4764 = vmatprep.subr.bf16.mxu0 %v3354
    %4765 = vmatpush1.bf16.msra.mxu0 %v3353
    %4766 = vmatprep.subr.bf16.mxu0 %v3362
    %4767 = vmatpush1.bf16.msra.mxu0 %v3361
    %4768 = vmatprep.subr.bf16.mxu0 %v3370
    %4769 = vmatpush1.bf16.msra.mxu0 %v3369
    %4770 = vmatprep.subr.bf16.mxu0 %v3378
    %4771 = vmatpush1.bf16.msra.mxu0 %v3377
    %4772 = vmatprep.subr.bf16.mxu0 %v3386
    %4773 = vmatpush1.bf16.msra.mxu0 %v3385
    %4774 = vmatprep.subr.bf16.mxu0 %v3394
    %4775 = vmatpush1.bf16.msra.mxu0 %v3393
    %4776 = vmatprep.subr.bf16.mxu0 %v3402
    %4777 = vmatpush1.bf16.msra.mxu0 %v3401
    %4778 = vmatprep.subr.bf16.mxu0 %v3410
    %4779 = vmatpush1.bf16.msra.mxu0 %v3409
    %4780 = vmatprep.subr.bf16.mxu0 %v3418
    %4781 = vmatpush1.bf16.msra.mxu0 %v3417
    %4782 = vmatprep.subr.bf16.mxu0 %v3426
    %4783 = vmatpush1.bf16.msra.mxu0 %v3425
    %4784 = vmatprep.subr.bf16.mxu0 %v3434
    %4785 = vmatpush1.bf16.msra.mxu0 %v3433
    %4786 = vmatprep.subr.bf16.mxu0 %v3442
    %4787 = vmatpush1.bf16.msra.mxu0 %v3441
    %4788 = vmatprep.subr.bf16.mxu0 %v3450
    %4789 = vmatpush1.bf16.msra.mxu0 %v3449
    %4790 = vmatprep.subr.bf16.mxu0 %v3458
    %4791 = vmatpush1.bf16.msra.mxu0 %v3457
    %4792 = vmatprep.mubr.bf16.mxu0 %v1108
    %4793 = vmatmul.mubr.bf16.gmra.mrb[0].mxu0 %v1107
    %v4794 = vpop.f32.mrb[0].mxu0
    %v4795 = vadd.f32 %v4754, %v4794
    %v4796 = vpop.f32.mrb[0].mxu0
    %v4797 = vadd.f32 %v4756, %v4796
    %v4798 = vpop.f32.mrb[0].mxu0
    %v4799 = vpop.f32.mrb[0].mxu0
    %4800 = vdwg.mxu0
    %4801 = vmatprep.subr.bf16.mxu0 %v3466
    %4802 = vmatpush1.bf16.msra.mxu0 %v3465
    %4803 = vmatprep.subr.bf16.mxu0 %v3474
    %4804 = vmatpush1.bf16.msra.mxu0 %v3473
    %4805 = vmatprep.subr.bf16.mxu0 %v3482
    %4806 = vmatpush1.bf16.msra.mxu0 %v3481
    %4807 = vmatprep.subr.bf16.mxu0 %v3490
    %4808 = vmatpush1.bf16.msra.mxu0 %v3489
    %4809 = vmatprep.subr.bf16.mxu0 %v3498
    %4810 = vmatpush1.bf16.msra.mxu0 %v3497
    %4811 = vmatprep.subr.bf16.mxu0 %v3506
    %4812 = vmatpush1.bf16.msra.mxu0 %v3505
    %4813 = vmatprep.subr.bf16.mxu0 %v3514
    %4814 = vmatpush1.bf16.msra.mxu0 %v3513
    %4815 = vmatprep.subr.bf16.mxu0 %v3522
    %4816 = vmatpush1.bf16.msra.mxu0 %v3521
    %4817 = vmatprep.subr.bf16.mxu0 %v3530
    %4818 = vmatpush1.bf16.msra.mxu0 %v3529
    %4819 = vmatprep.subr.bf16.mxu0 %v3538
    %4820 = vmatpush1.bf16.msra.mxu0 %v3537
    %4821 = vmatprep.subr.bf16.mxu0 %v3546
    %4822 = vmatpush1.bf16.msra.mxu0 %v3545
    %4823 = vmatprep.subr.bf16.mxu0 %v3554
    %4824 = vmatpush1.bf16.msra.mxu0 %v3553
    %4825 = vmatprep.subr.bf16.mxu0 %v3562
    %4826 = vmatpush1.bf16.msra.mxu0 %v3561
    %4827 = vmatprep.subr.bf16.mxu0 %v3570
    %4828 = vmatpush1.bf16.msra.mxu0 %v3569
    %4829 = vmatprep.subr.bf16.mxu0 %v3578
    %4830 = vmatpush1.bf16.msra.mxu0 %v3577
    %4831 = vmatprep.subr.bf16.mxu0 %v3586
    %4832 = vmatpush1.bf16.msra.mxu0 %v3585
    %4833 = vmatprep.mubr.bf16.mxu0 %v1110
    %4834 = vmatmul.mubr.bf16.gmra.mrb[0].mxu0 %v1109
    %v4835 = vpop.f32.mrb[0].mxu0
    %v4836 = vadd.f32 %v4795, %v4835
    %v4837 = vpop.f32.mrb[0].mxu0
    %v4838 = vadd.f32 %v4797, %v4837
    %v4839 = vpop.f32.mrb[0].mxu0
    %v4840 = vpop.f32.mrb[0].mxu0
    %4841 = vdwg.mxu0
    %4842 = vmatprep.subr.bf16.mxu0 %v3594
    %4843 = vmatpush1.bf16.msra.mxu0 %v3593
    %4844 = vmatprep.subr.bf16.mxu0 %v3602
    %4845 = vmatpush1.bf16.msra.mxu0 %v3601
    %4846 = vmatprep.subr.bf16.mxu0 %v3610
    %4847 = vmatpush1.bf16.msra.mxu0 %v3609
    %4848 = vmatprep.subr.bf16.mxu0 %v3618
    %4849 = vmatpush1.bf16.msra.mxu0 %v3617
    %4850 = vmatprep.subr.bf16.mxu0 %v3626
    %4851 = vmatpush1.bf16.msra.mxu0 %v3625
    %4852 = vmatprep.subr.bf16.mxu0 %v3634
    %4853 = vmatpush1.bf16.msra.mxu0 %v3633
    %4854 = vmatprep.subr.bf16.mxu0 %v3642
    %4855 = vmatpush1.bf16.msra.mxu0 %v3641
    %4856 = vmatprep.subr.bf16.mxu0 %v3650
    %4857 = vmatpush1.bf16.msra.mxu0 %v3649
    %4858 = vmatprep.subr.bf16.mxu0 %v3658
    %4859 = vmatpush1.bf16.msra.mxu0 %v3657
    %4860 = vmatprep.subr.bf16.mxu0 %v3666
    %4861 = vmatpush1.bf16.msra.mxu0 %v3665
    %4862 = vmatprep.subr.bf16.mxu0 %v3674
    %4863 = vmatpush1.bf16.msra.mxu0 %v3673
    %4864 = vmatprep.subr.bf16.mxu0 %v3682
    %4865 = vmatpush1.bf16.msra.mxu0 %v3681
    %4866 = vmatprep.subr.bf16.mxu0 %v3690
    %4867 = vmatpush1.bf16.msra.mxu0 %v3689
    %4868 = vmatprep.subr.bf16.mxu0 %v3698
    %4869 = vmatpush1.bf16.msra.mxu0 %v3697
    %4870 = vmatprep.subr.bf16.mxu0 %v3706
    %4871 = vmatpush1.bf16.msra.mxu0 %v3705
    %4872 = vmatprep.subr.bf16.mxu0 %v3714
    %4873 = vmatpush1.bf16.msra.mxu0 %v3713
    %4874 = vmatprep.mubr.bf16.mxu0 %v1112
    %4875 = vmatmul.mubr.bf16.gmra.mrb[0].mxu0 %v1111
    %v4876 = vpop.f32.mrb[0].mxu0
    %v4877 = vadd.f32 %v4836, %v4876
    %v4878 = vpop.f32.mrb[0].mxu0
    %v4879 = vadd.f32 %v4838, %v4878
    %v4880 = vpop.f32.mrb[0].mxu0
    %v4881 = vpop.f32.mrb[0].mxu0
    %4882 = vdwg.mxu0
    %v4883 = vmax.f32 %v4385, 0.0
    %v4884 = vmax.f32 %v4387, 0.0
    %v4885 = vmax.f32 %v4549, 0.0
    %v4886 = vmax.f32 %v4551, 0.0
    %v4887 = vmax.f32 %v4713, 0.0
    %v4888 = vmax.f32 %v4715, 0.0
    %v4889 = vmax.f32 %v4877, 0.0
    %v4890 = vmax.f32 %v4879, 0.0
    %v4891 = vpack.c.bf16 %v4883, %v4883
    %v4892 = vpack.c.bf16 %v4884, %v4884
    %v4893 = vpack.c.bf16 %v4885, %v4885
    %v4894 = vpack.c.bf16 %v4886, %v4886
    %v4895 = vpack.c.bf16 %v4887, %v4887
    %v4896 = vpack.c.bf16 %v4888, %v4888
    %v4897 = vpack.c.bf16 %v4889, %v4889
    %v4898 = vpack.c.bf16 %v4890, %v4890
    %v4899 = vld [vmem:[#allocation11] sm:$0xf]
    %v4900 = vld [vmem:[#allocation11 + $0x4] sm:$0xf]
    %v4901 = vld [vmem:[#allocation11 + $0x8] sm:$0xf]
    %v4902 = vld [vmem:[#allocation11 + $0xc] sm:$0xf]
    %v4903 = vld [vmem:[#allocation11 + $0x10] sm:$0xf]
    %v4904 = vld [vmem:[#allocation11 + $0x14] sm:$0xf]
    %v4905 = vld [vmem:[#allocation11 + $0x18] sm:$0xf]
    %v4906 = vld [vmem:[#allocation11 + $0x1c] sm:$0xf]
    %v4907 = vld [vmem:[#allocation11 + $0x20] sm:$0xf]
    %v4908 = vld [vmem:[#allocation11 + $0x24] sm:$0xf]
    %v4909 = vld [vmem:[#allocation11 + $0x28] sm:$0xf]
    %v4910 = vld [vmem:[#allocation11 + $0x2c] sm:$0xf]
    %v4911 = vld [vmem:[#allocation11 + $0x30] sm:$0xf]
    %v4912 = vld [vmem:[#allocation11 + $0x34] sm:$0xf]
    %v4913 = vld [vmem:[#allocation11 + $0x38] sm:$0xf]
    %v4914 = vld [vmem:[#allocation11 + $0x3c] sm:$0xf]
    %v4915 = vld [vmem:[#allocation11 + $0x40] sm:$0xf]
    %v4916 = vld [vmem:[#allocation11 + $0x44] sm:$0xf]
    %v4917 = vld [vmem:[#allocation11 + $0x48] sm:$0xf]
    %v4918 = vld [vmem:[#allocation11 + $0x4c] sm:$0xf]
    %v4919 = vld [vmem:[#allocation11 + $0x50] sm:$0xf]
    %v4920 = vld [vmem:[#allocation11 + $0x54] sm:$0xf]
    %v4921 = vld [vmem:[#allocation11 + $0x58] sm:$0xf]
    %v4922 = vld [vmem:[#allocation11 + $0x5c] sm:$0xf]
    %v4923 = vld [vmem:[#allocation11 + $0x60] sm:$0xf]
    %v4924 = vld [vmem:[#allocation11 + $0x64] sm:$0xf]
    %v4925 = vld [vmem:[#allocation11 + $0x68] sm:$0xf]
    %v4926 = vld [vmem:[#allocation11 + $0x6c] sm:$0xf]
    %v4927 = vld [vmem:[#allocation11 + $0x70] sm:$0xf]
    %v4928 = vld [vmem:[#allocation11 + $0x74] sm:$0xf]
    %v4929 = vld [vmem:[#allocation11 + $0x78] sm:$0xf]
    %v4930 = vld [vmem:[#allocation11 + $0x7c] sm:$0xf]
    %v4931 = vld [vmem:[#allocation11 + $0x80] sm:$0xf]
    %v4932 = vld [vmem:[#allocation11 + $0x84] sm:$0xf]
    %v4933 = vld [vmem:[#allocation11 + $0x88] sm:$0xf]
    %v4934 = vld [vmem:[#allocation11 + $0x8c] sm:$0xf]
    %v4935 = vld [vmem:[#allocation11 + $0x90] sm:$0xf]
    %v4936 = vld [vmem:[#allocation11 + $0x94] sm:$0xf]
    %v4937 = vld [vmem:[#allocation11 + $0x98] sm:$0xf]
    %v4938 = vld [vmem:[#allocation11 + $0x9c] sm:$0xf]
    %v4939 = vld [vmem:[#allocation11 + $0xa0] sm:$0xf]
    %v4940 = vld [vmem:[#allocation11 + $0xa4] sm:$0xf]
    %v4941 = vld [vmem:[#allocation11 + $0xa8] sm:$0xf]
    %v4942 = vld [vmem:[#allocation11 + $0xac] sm:$0xf]
    %v4943 = vld [vmem:[#allocation11 + $0xb0] sm:$0xf]
    %v4944 = vld [vmem:[#allocation11 + $0xb4] sm:$0xf]
    %v4945 = vld [vmem:[#allocation11 + $0xb8] sm:$0xf]
    %v4946 = vld [vmem:[#allocation11 + $0xbc] sm:$0xf]
    %v4947 = vld [vmem:[#allocation11 + $0xc0] sm:$0xf]
    %v4948 = vld [vmem:[#allocation11 + $0xc4] sm:$0xf]
    %v4949 = vld [vmem:[#allocation11 + $0xc8] sm:$0xf]
    %v4950 = vld [vmem:[#allocation11 + $0xcc] sm:$0xf]
    %v4951 = vld [vmem:[#allocation11 + $0xd0] sm:$0xf]
    %v4952 = vld [vmem:[#allocation11 + $0xd4] sm:$0xf]
    %v4953 = vld [vmem:[#allocation11 + $0xd8] sm:$0xf]
    %v4954 = vld [vmem:[#allocation11 + $0xdc] sm:$0xf]
    %v4955 = vld [vmem:[#allocation11 + $0xe0] sm:$0xf]
    %v4956 = vld [vmem:[#allocation11 + $0xe4] sm:$0xf]
    %v4957 = vld [vmem:[#allocation11 + $0xe8] sm:$0xf]
    %v4958 = vld [vmem:[#allocation11 + $0xec] sm:$0xf]
    %v4959 = vld [vmem:[#allocation11 + $0xf0] sm:$0xf]
    %v4960 = vld [vmem:[#allocation11 + $0xf4] sm:$0xf]
    %v4961 = vld [vmem:[#allocation11 + $0xf8] sm:$0xf]
    %v4962 = vld [vmem:[#allocation11 + $0xfc] sm:$0xf]
    %v4963 = vld [vmem:[#allocation11 + $0x100] sm:$0xf]
    %v4964 = vld [vmem:[#allocation11 + $0x104] sm:$0xf]
    %v4965 = vld [vmem:[#allocation11 + $0x108] sm:$0xf]
    %v4966 = vld [vmem:[#allocation11 + $0x10c] sm:$0xf]
    %v4967 = vld [vmem:[#allocation11 + $0x110] sm:$0xf]
    %v4968 = vld [vmem:[#allocation11 + $0x114] sm:$0xf]
    %v4969 = vld [vmem:[#allocation11 + $0x118] sm:$0xf]
    %v4970 = vld [vmem:[#allocation11 + $0x11c] sm:$0xf]
    %v4971 = vld [vmem:[#allocation11 + $0x120] sm:$0xf]
    %v4972 = vld [vmem:[#allocation11 + $0x124] sm:$0xf]
    %v4973 = vld [vmem:[#allocation11 + $0x128] sm:$0xf]
    %v4974 = vld [vmem:[#allocation11 + $0x12c] sm:$0xf]
    %v4975 = vld [vmem:[#allocation11 + $0x130] sm:$0xf]
    %v4976 = vld [vmem:[#allocation11 + $0x134] sm:$0xf]
    %v4977 = vld [vmem:[#allocation11 + $0x138] sm:$0xf]
    %v4978 = vld [vmem:[#allocation11 + $0x13c] sm:$0xf]
    %v4979 = vld [vmem:[#allocation11 + $0x140] sm:$0xf]
    %v4980 = vld [vmem:[#allocation11 + $0x144] sm:$0xf]
    %v4981 = vld [vmem:[#allocation11 + $0x148] sm:$0xf]
    %v4982 = vld [vmem:[#allocation11 + $0x14c] sm:$0xf]
    %v4983 = vld [vmem:[#allocation11 + $0x150] sm:$0xf]
    %v4984 = vld [vmem:[#allocation11 + $0x154] sm:$0xf]
    %v4985 = vld [vmem:[#allocation11 + $0x158] sm:$0xf]
    %v4986 = vld [vmem:[#allocation11 + $0x15c] sm:$0xf]
    %v4987 = vld [vmem:[#allocation11 + $0x160] sm:$0xf]
    %v4988 = vld [vmem:[#allocation11 + $0x164] sm:$0xf]
    %v4989 = vld [vmem:[#allocation11 + $0x168] sm:$0xf]
    %v4990 = vld [vmem:[#allocation11 + $0x16c] sm:$0xf]
    %v4991 = vld [vmem:[#allocation11 + $0x170] sm:$0xf]
    %v4992 = vld [vmem:[#allocation11 + $0x174] sm:$0xf]
    %v4993 = vld [vmem:[#allocation11 + $0x178] sm:$0xf]
    %v4994 = vld [vmem:[#allocation11 + $0x17c] sm:$0xf]
    %v4995 = vld [vmem:[#allocation11 + $0x180] sm:$0xf]
    %v4996 = vld [vmem:[#allocation11 + $0x184] sm:$0xf]
    %v4997 = vld [vmem:[#allocation11 + $0x188] sm:$0xf]
    %v4998 = vld [vmem:[#allocation11 + $0x18c] sm:$0xf]
    %v4999 = vld [vmem:[#allocation11 + $0x190] sm:$0xf]
    %v5000 = vld [vmem:[#allocation11 + $0x194] sm:$0xf]
    %v5001 = vld [vmem:[#allocation11 + $0x198] sm:$0xf]
    %v5002 = vld [vmem:[#allocation11 + $0x19c] sm:$0xf]
    %v5003 = vld [vmem:[#allocation11 + $0x1a0] sm:$0xf]
    %v5004 = vld [vmem:[#allocation11 + $0x1a4] sm:$0xf]
    %v5005 = vld [vmem:[#allocation11 + $0x1a8] sm:$0xf]
    %v5006 = vld [vmem:[#allocation11 + $0x1ac] sm:$0xf]
    %v5007 = vld [vmem:[#allocation11 + $0x1b0] sm:$0xf]
    %v5008 = vld [vmem:[#allocation11 + $0x1b4] sm:$0xf]
    %v5009 = vld [vmem:[#allocation11 + $0x1b8] sm:$0xf]
    %v5010 = vld [vmem:[#allocation11 + $0x1bc] sm:$0xf]
    %v5011 = vld [vmem:[#allocation11 + $0x1c0] sm:$0xf]
    %v5012 = vld [vmem:[#allocation11 + $0x1c4] sm:$0xf]
    %v5013 = vld [vmem:[#allocation11 + $0x1c8] sm:$0xf]
    %v5014 = vld [vmem:[#allocation11 + $0x1cc] sm:$0xf]
    %v5015 = vld [vmem:[#allocation11 + $0x1d0] sm:$0xf]
    %v5016 = vld [vmem:[#allocation11 + $0x1d4] sm:$0xf]
    %v5017 = vld [vmem:[#allocation11 + $0x1d8] sm:$0xf]
    %v5018 = vld [vmem:[#allocation11 + $0x1dc] sm:$0xf]
    %v5019 = vld [vmem:[#allocation11 + $0x1e0] sm:$0xf]
    %v5020 = vld [vmem:[#allocation11 + $0x1e4] sm:$0xf]
    %v5021 = vld [vmem:[#allocation11 + $0x1e8] sm:$0xf]
    %v5022 = vld [vmem:[#allocation11 + $0x1ec] sm:$0xf]
    %v5023 = vld [vmem:[#allocation11 + $0x1f0] sm:$0xf]
    %v5024 = vld [vmem:[#allocation11 + $0x1f4] sm:$0xf]
    %v5025 = vld [vmem:[#allocation11 + $0x1f8] sm:$0xf]
    %v5026 = vld [vmem:[#allocation11 + $0x1fc] sm:$0xf]
    %v5027 = vld [vmem:[#allocation13] sm:$0x1]
    %v5029 = vlaneseq
    %v5030 = vshrl.u32 %v5029, 7
    %v5031 = vsub.s32 0, %v5030
    %v5032 = vrot.slane %v5027, %v5031
    %v5162 = vunpack.c.l.b16 %v4899
    %v5163 = vunpack.c.l.b16 %v4900
    %v5164 = vunpack.c.l.b16 %v4901
    %v5165 = vunpack.c.l.b16 %v4902
    %v5166 = vunpack.c.l.b16 %v4903
    %v5167 = vunpack.c.l.b16 %v4904
    %v5168 = vunpack.c.l.b16 %v4905
    %v5169 = vunpack.c.l.b16 %v4906
    %v5170 = vunpack.c.l.b16 %v4907
    %v5171 = vunpack.c.l.b16 %v4908
    %v5172 = vunpack.c.l.b16 %v4909
    %v5173 = vunpack.c.l.b16 %v4910
    %v5174 = vunpack.c.l.b16 %v4911
    %v5175 = vunpack.c.l.b16 %v4912
    %v5176 = vunpack.c.l.b16 %v4913
    %v5177 = vunpack.c.l.b16 %v4914
    %v5178 = vunpack.c.l.b16 %v4915
    %v5179 = vunpack.c.l.b16 %v4916
    %v5180 = vunpack.c.l.b16 %v4917
    %v5181 = vunpack.c.l.b16 %v4918
    %v5182 = vunpack.c.l.b16 %v4919
    %v5183 = vunpack.c.l.b16 %v4920
    %v5184 = vunpack.c.l.b16 %v4921
    %v5185 = vunpack.c.l.b16 %v4922
    %v5186 = vunpack.c.l.b16 %v4923
    %v5187 = vunpack.c.l.b16 %v4924
    %v5188 = vunpack.c.l.b16 %v4925
    %v5189 = vunpack.c.l.b16 %v4926
    %v5190 = vunpack.c.l.b16 %v4927
    %v5191 = vunpack.c.l.b16 %v4928
    %v5192 = vunpack.c.l.b16 %v4929
    %v5193 = vunpack.c.l.b16 %v4930
    %v5194 = vunpack.c.l.b16 %v4931
    %v5195 = vunpack.c.l.b16 %v4932
    %v5196 = vunpack.c.l.b16 %v4933
    %v5197 = vunpack.c.l.b16 %v4934
    %v5198 = vunpack.c.l.b16 %v4935
    %v5199 = vunpack.c.l.b16 %v4936
    %v5200 = vunpack.c.l.b16 %v4937
    %v5201 = vunpack.c.l.b16 %v4938
    %v5202 = vunpack.c.l.b16 %v4939
    %v5203 = vunpack.c.l.b16 %v4940
    %v5204 = vunpack.c.l.b16 %v4941
    %v5205 = vunpack.c.l.b16 %v4942
    %v5206 = vunpack.c.l.b16 %v4943
    %v5207 = vunpack.c.l.b16 %v4944
    %v5208 = vunpack.c.l.b16 %v4945
    %v5209 = vunpack.c.l.b16 %v4946
    %v5210 = vunpack.c.l.b16 %v4947
    %v5211 = vunpack.c.l.b16 %v4948
    %v5212 = vunpack.c.l.b16 %v4949
    %v5213 = vunpack.c.l.b16 %v4950
    %v5214 = vunpack.c.l.b16 %v4951
    %v5215 = vunpack.c.l.b16 %v4952
    %v5216 = vunpack.c.l.b16 %v4953
    %v5217 = vunpack.c.l.b16 %v4954
    %v5218 = vunpack.c.l.b16 %v4955
    %v5219 = vunpack.c.l.b16 %v4956
    %v5220 = vunpack.c.l.b16 %v4957
    %v5221 = vunpack.c.l.b16 %v4958
    %v5222 = vunpack.c.l.b16 %v4959
    %v5223 = vunpack.c.l.b16 %v4960
    %v5224 = vunpack.c.l.b16 %v4961
    %v5225 = vunpack.c.l.b16 %v4962
    %v5226 = vunpack.c.l.b16 %v4963
    %v5227 = vunpack.c.l.b16 %v4964
    %v5228 = vunpack.c.l.b16 %v4965
    %v5229 = vunpack.c.l.b16 %v4966
    %v5230 = vunpack.c.l.b16 %v4967
    %v5231 = vunpack.c.l.b16 %v4968
    %v5232 = vunpack.c.l.b16 %v4969
    %v5233 = vunpack.c.l.b16 %v4970
    %v5234 = vunpack.c.l.b16 %v4971
    %v5235 = vunpack.c.l.b16 %v4972
    %v5236 = vunpack.c.l.b16 %v4973
    %v5237 = vunpack.c.l.b16 %v4974
    %v5238 = vunpack.c.l.b16 %v4975
    %v5239 = vunpack.c.l.b16 %v4976
    %v5240 = vunpack.c.l.b16 %v4977
    %v5241 = vunpack.c.l.b16 %v4978
    %v5242 = vunpack.c.l.b16 %v4979
    %v5243 = vunpack.c.l.b16 %v4980
    %v5244 = vunpack.c.l.b16 %v4981
    %v5245 = vunpack.c.l.b16 %v4982
    %v5246 = vunpack.c.l.b16 %v4983
    %v5247 = vunpack.c.l.b16 %v4984
    %v5248 = vunpack.c.l.b16 %v4985
    %v5249 = vunpack.c.l.b16 %v4986
    %v5250 = vunpack.c.l.b16 %v4987
    %v5251 = vunpack.c.l.b16 %v4988
    %v5252 = vunpack.c.l.b16 %v4989
    %v5253 = vunpack.c.l.b16 %v4990
    %v5254 = vunpack.c.l.b16 %v4991
    %v5255 = vunpack.c.l.b16 %v4992
    %v5256 = vunpack.c.l.b16 %v4993
    %v5257 = vunpack.c.l.b16 %v4994
    %v5258 = vunpack.c.l.b16 %v4995
    %v5259 = vunpack.c.l.b16 %v4996
    %v5260 = vunpack.c.l.b16 %v4997
    %v5261 = vunpack.c.l.b16 %v4998
    %v5262 = vunpack.c.l.b16 %v4999
    %v5263 = vunpack.c.l.b16 %v5000
    %v5264 = vunpack.c.l.b16 %v5001
    %v5265 = vunpack.c.l.b16 %v5002
    %v5266 = vunpack.c.l.b16 %v5003
    %v5267 = vunpack.c.l.b16 %v5004
    %v5268 = vunpack.c.l.b16 %v5005
    %v5269 = vunpack.c.l.b16 %v5006
    %v5270 = vunpack.c.l.b16 %v5007
    %v5271 = vunpack.c.l.b16 %v5008
    %v5272 = vunpack.c.l.b16 %v5009
    %v5273 = vunpack.c.l.b16 %v5010
    %v5274 = vunpack.c.l.b16 %v5011
    %v5275 = vunpack.c.l.b16 %v5012
    %v5276 = vunpack.c.l.b16 %v5013
    %v5277 = vunpack.c.l.b16 %v5014
    %v5278 = vunpack.c.l.b16 %v5015
    %v5279 = vunpack.c.l.b16 %v5016
    %v5280 = vunpack.c.l.b16 %v5017
    %v5281 = vunpack.c.l.b16 %v5018
    %v5282 = vunpack.c.l.b16 %v5019
    %v5283 = vunpack.c.l.b16 %v5020
    %v5284 = vunpack.c.l.b16 %v5021
    %v5285 = vunpack.c.l.b16 %v5022
    %v5286 = vunpack.c.l.b16 %v5023
    %v5287 = vunpack.c.l.b16 %v5024
    %v5288 = vunpack.c.l.b16 %v5025
    %v5289 = vunpack.c.l.b16 %v5026
    %v5290 = vpack.c.b16 %v5163, %v5162
    %v5291 = vpack.c.b16 %v5165, %v5164
    %v5292 = vpack.c.b16 %v5167, %v5166
    %v5293 = vpack.c.b16 %v5169, %v5168
    %v5294 = vpack.c.b16 %v5171, %v5170
    %v5295 = vpack.c.b16 %v5173, %v5172
    %v5296 = vpack.c.b16 %v5175, %v5174
    %v5297 = vpack.c.b16 %v5177, %v5176
    %v5298 = vpack.c.b16 %v5179, %v5178
    %v5299 = vpack.c.b16 %v5181, %v5180
    %v5300 = vpack.c.b16 %v5183, %v5182
    %v5301 = vpack.c.b16 %v5185, %v5184
    %v5302 = vpack.c.b16 %v5187, %v5186
    %v5303 = vpack.c.b16 %v5189, %v5188
    %v5304 = vpack.c.b16 %v5191, %v5190
    %v5305 = vpack.c.b16 %v5193, %v5192
    %v5306 = vpack.c.b16 %v5195, %v5194
    %v5307 = vpack.c.b16 %v5197, %v5196
    %v5308 = vpack.c.b16 %v5199, %v5198
    %v5309 = vpack.c.b16 %v5201, %v5200
    %v5310 = vpack.c.b16 %v5203, %v5202
    %v5311 = vpack.c.b16 %v5205, %v5204
    %v5312 = vpack.c.b16 %v5207, %v5206
    %v5313 = vpack.c.b16 %v5209, %v5208
    %v5314 = vpack.c.b16 %v5211, %v5210
    %v5315 = vpack.c.b16 %v5213, %v5212
    %v5316 = vpack.c.b16 %v5215, %v5214
    %v5317 = vpack.c.b16 %v5217, %v5216
    %v5318 = vpack.c.b16 %v5219, %v5218
    %v5319 = vpack.c.b16 %v5221, %v5220
    %v5320 = vpack.c.b16 %v5223, %v5222
    %v5321 = vpack.c.b16 %v5225, %v5224
    %v5322 = vpack.c.b16 %v5227, %v5226
    %v5323 = vpack.c.b16 %v5229, %v5228
    %v5324 = vpack.c.b16 %v5231, %v5230
    %v5325 = vpack.c.b16 %v5233, %v5232
    %v5326 = vpack.c.b16 %v5235, %v5234
    %v5327 = vpack.c.b16 %v5237, %v5236
    %v5328 = vpack.c.b16 %v5239, %v5238
    %v5329 = vpack.c.b16 %v5241, %v5240
    %v5330 = vpack.c.b16 %v5243, %v5242
    %v5331 = vpack.c.b16 %v5245, %v5244
    %v5332 = vpack.c.b16 %v5247, %v5246
    %v5333 = vpack.c.b16 %v5249, %v5248
    %v5334 = vpack.c.b16 %v5251, %v5250
    %v5335 = vpack.c.b16 %v5253, %v5252
    %v5336 = vpack.c.b16 %v5255, %v5254
    %v5337 = vpack.c.b16 %v5257, %v5256
    %v5338 = vpack.c.b16 %v5259, %v5258
    %v5339 = vpack.c.b16 %v5261, %v5260
    %v5340 = vpack.c.b16 %v5263, %v5262
    %v5341 = vpack.c.b16 %v5265, %v5264
    %v5342 = vpack.c.b16 %v5267, %v5266
    %v5343 = vpack.c.b16 %v5269, %v5268
    %v5344 = vpack.c.b16 %v5271, %v5270
    %v5345 = vpack.c.b16 %v5273, %v5272
    %v5346 = vpack.c.b16 %v5275, %v5274
    %v5347 = vpack.c.b16 %v5277, %v5276
    %v5348 = vpack.c.b16 %v5279, %v5278
    %v5349 = vpack.c.b16 %v5281, %v5280
    %v5350 = vpack.c.b16 %v5283, %v5282
    %v5351 = vpack.c.b16 %v5285, %v5284
    %v5352 = vpack.c.b16 %v5287, %v5286
    %v5353 = vpack.c.b16 %v5289, %v5288
    %5418 = vmatprep.subr.bf16.mxu0 0
    %5419 = vmatpush1.bf16.msra.mxu0 %v5290
    %5420 = vmatprep.subr.bf16.mxu0 0
    %5421 = vmatpush1.bf16.msra.mxu0 %v5291
    %5422 = vmatprep.subr.bf16.mxu0 0
    %5423 = vmatpush1.bf16.msra.mxu0 %v5292
    %5424 = vmatprep.subr.bf16.mxu0 0
    %5425 = vmatpush1.bf16.msra.mxu0 %v5293
    %5426 = vmatprep.subr.bf16.mxu0 0
    %5427 = vmatpush1.bf16.msra.mxu0 %v5294
    %5428 = vmatprep.subr.bf16.mxu0 0
    %5429 = vmatpush1.bf16.msra.mxu0 %v5295
    %5430 = vmatprep.subr.bf16.mxu0 0
    %5431 = vmatpush1.bf16.msra.mxu0 %v5296
    %5432 = vmatprep.subr.bf16.mxu0 0
    %5433 = vmatpush1.bf16.msra.mxu0 %v5297
    %5434 = vmatprep.subr.bf16.mxu0 0
    %5435 = vmatpush1.bf16.msra.mxu0 %v5298
    %5436 = vmatprep.subr.bf16.mxu0 0
    %5437 = vmatpush1.bf16.msra.mxu0 %v5299
    %5438 = vmatprep.subr.bf16.mxu0 0
    %5439 = vmatpush1.bf16.msra.mxu0 %v5300
    %5440 = vmatprep.subr.bf16.mxu0 0
    %5441 = vmatpush1.bf16.msra.mxu0 %v5301
    %5442 = vmatprep.subr.bf16.mxu0 0
    %5443 = vmatpush1.bf16.msra.mxu0 %v5302
    %5444 = vmatprep.subr.bf16.mxu0 0
    %5445 = vmatpush1.bf16.msra.mxu0 %v5303
    %5446 = vmatprep.subr.bf16.mxu0 0
    %5447 = vmatpush1.bf16.msra.mxu0 %v5304
    %5448 = vmatprep.subr.bf16.mxu0 0
    %5449 = vmatpush1.bf16.msra.mxu0 %v5305
    %5450 = vmatprep.mubr.bf16.mxu0 %v4892
    %5451 = vmatmul.mubr.bf16.gmra.mrb[0].mxu0 %v4891
    %v5452 = vpop.f32.mrb[0].mxu0
    %v5453 = vadd.f32 %v5032, %v5452
    %v5454 = vpop.f32.mrb[0].mxu0
    %v5455 = vpop.f32.mrb[0].mxu0
    %v5456 = vpop.f32.mrb[0].mxu0
    %5457 = vdwg.mxu0
    %5458 = vmatprep.subr.bf16.mxu0 0
    %5459 = vmatpush1.bf16.msra.mxu0 %v5306
    %5460 = vmatprep.subr.bf16.mxu0 0
    %5461 = vmatpush1.bf16.msra.mxu0 %v5307
    %5462 = vmatprep.subr.bf16.mxu0 0
    %5463 = vmatpush1.bf16.msra.mxu0 %v5308
    %5464 = vmatprep.subr.bf16.mxu0 0
    %5465 = vmatpush1.bf16.msra.mxu0 %v5309
    %5466 = vmatprep.subr.bf16.mxu0 0
    %5467 = vmatpush1.bf16.msra.mxu0 %v5310
    %5468 = vmatprep.subr.bf16.mxu0 0
    %5469 = vmatpush1.bf16.msra.mxu0 %v5311
    %5470 = vmatprep.subr.bf16.mxu0 0
    %5471 = vmatpush1.bf16.msra.mxu0 %v5312
    %5472 = vmatprep.subr.bf16.mxu0 0
    %5473 = vmatpush1.bf16.msra.mxu0 %v5313
    %5474 = vmatprep.subr.bf16.mxu0 0
    %5475 = vmatpush1.bf16.msra.mxu0 %v5314
    %5476 = vmatprep.subr.bf16.mxu0 0
    %5477 = vmatpush1.bf16.msra.mxu0 %v5315
    %5478 = vmatprep.subr.bf16.mxu0 0
    %5479 = vmatpush1.bf16.msra.mxu0 %v5316
    %5480 = vmatprep.subr.bf16.mxu0 0
    %5481 = vmatpush1.bf16.msra.mxu0 %v5317
    %5482 = vmatprep.subr.bf16.mxu0 0
    %5483 = vmatpush1.bf16.msra.mxu0 %v5318
    %5484 = vmatprep.subr.bf16.mxu0 0
    %5485 = vmatpush1.bf16.msra.mxu0 %v5319
    %5486 = vmatprep.subr.bf16.mxu0 0
    %5487 = vmatpush1.bf16.msra.mxu0 %v5320
    %5488 = vmatprep.subr.bf16.mxu0 0
    %5489 = vmatpush1.bf16.msra.mxu0 %v5321
    %5490 = vmatprep.mubr.bf16.mxu0 %v4894
    %5491 = vmatmul.mubr.bf16.gmra.mrb[0].mxu0 %v4893
    %v5492 = vpop.f32.mrb[0].mxu0
    %v5493 = vadd.f32 %v5453, %v5492
    %v5494 = vpop.f32.mrb[0].mxu0
    %v5495 = vpop.f32.mrb[0].mxu0
    %v5496 = vpop.f32.mrb[0].mxu0
    %5497 = vdwg.mxu0
    %5498 = vmatprep.subr.bf16.mxu0 0
    %5499 = vmatpush1.bf16.msra.mxu0 %v5322
    %5500 = vmatprep.subr.bf16.mxu0 0
    %5501 = vmatpush1.bf16.msra.mxu0 %v5323
    %5502 = vmatprep.subr.bf16.mxu0 0
    %5503 = vmatpush1.bf16.msra.mxu0 %v5324
    %5504 = vmatprep.subr.bf16.mxu0 0
    %5505 = vmatpush1.bf16.msra.mxu0 %v5325
    %5506 = vmatprep.subr.bf16.mxu0 0
    %5507 = vmatpush1.bf16.msra.mxu0 %v5326
    %5508 = vmatprep.subr.bf16.mxu0 0
    %5509 = vmatpush1.bf16.msra.mxu0 %v5327
    %5510 = vmatprep.subr.bf16.mxu0 0
    %5511 = vmatpush1.bf16.msra.mxu0 %v5328
    %5512 = vmatprep.subr.bf16.mxu0 0
    %5513 = vmatpush1.bf16.msra.mxu0 %v5329
    %5514 = vmatprep.subr.bf16.mxu0 0
    %5515 = vmatpush1.bf16.msra.mxu0 %v5330
    %5516 = vmatprep.subr.bf16.mxu0 0
    %5517 = vmatpush1.bf16.msra.mxu0 %v5331
    %5518 = vmatprep.subr.bf16.mxu0 0
    %5519 = vmatpush1.bf16.msra.mxu0 %v5332
    %5520 = vmatprep.subr.bf16.mxu0 0
    %5521 = vmatpush1.bf16.msra.mxu0 %v5333
    %5522 = vmatprep.subr.bf16.mxu0 0
    %5523 = vmatpush1.bf16.msra.mxu0 %v5334
    %5524 = vmatprep.subr.bf16.mxu0 0
    %5525 = vmatpush1.bf16.msra.mxu0 %v5335
    %5526 = vmatprep.subr.bf16.mxu0 0
    %5527 = vmatpush1.bf16.msra.mxu0 %v5336
    %5528 = vmatprep.subr.bf16.mxu0 0
    %5529 = vmatpush1.bf16.msra.mxu0 %v5337
    %5530 = vmatprep.mubr.bf16.mxu0 %v4896
    %5531 = vmatmul.mubr.bf16.gmra.mrb[0].mxu0 %v4895
    %v5532 = vpop.f32.mrb[0].mxu0
    %v5533 = vadd.f32 %v5493, %v5532
    %v5534 = vpop.f32.mrb[0].mxu0
    %v5535 = vpop.f32.mrb[0].mxu0
    %v5536 = vpop.f32.mrb[0].mxu0
    %5537 = vdwg.mxu0
    %5538 = vmatprep.subr.bf16.mxu0 0
    %5539 = vmatpush1.bf16.msra.mxu0 %v5338
    %5540 = vmatprep.subr.bf16.mxu0 0
    %5541 = vmatpush1.bf16.msra.mxu0 %v5339
    %5542 = vmatprep.subr.bf16.mxu0 0
    %5543 = vmatpush1.bf16.msra.mxu0 %v5340
    %5544 = vmatprep.subr.bf16.mxu0 0
    %5545 = vmatpush1.bf16.msra.mxu0 %v5341
    %5546 = vmatprep.subr.bf16.mxu0 0
    %5547 = vmatpush1.bf16.msra.mxu0 %v5342
    %5548 = vmatprep.subr.bf16.mxu0 0
    %5549 = vmatpush1.bf16.msra.mxu0 %v5343
    %5550 = vmatprep.subr.bf16.mxu0 0
    %5551 = vmatpush1.bf16.msra.mxu0 %v5344
    %5552 = vmatprep.subr.bf16.mxu0 0
    %5553 = vmatpush1.bf16.msra.mxu0 %v5345
    %5554 = vmatprep.subr.bf16.mxu0 0
    %5555 = vmatpush1.bf16.msra.mxu0 %v5346
    %5556 = vmatprep.subr.bf16.mxu0 0
    %5557 = vmatpush1.bf16.msra.mxu0 %v5347
    %5558 = vmatprep.subr.bf16.mxu0 0
    %5559 = vmatpush1.bf16.msra.mxu0 %v5348
    %5560 = vmatprep.subr.bf16.mxu0 0
    %5561 = vmatpush1.bf16.msra.mxu0 %v5349
    %5562 = vmatprep.subr.bf16.mxu0 0
    %5563 = vmatpush1.bf16.msra.mxu0 %v5350
    %5564 = vmatprep.subr.bf16.mxu0 0
    %5565 = vmatpush1.bf16.msra.mxu0 %v5351
    %5566 = vmatprep.subr.bf16.mxu0 0
    %5567 = vmatpush1.bf16.msra.mxu0 %v5352
    %5568 = vmatprep.subr.bf16.mxu0 0
    %5569 = vmatpush1.bf16.msra.mxu0 %v5353
    %5570 = vmatprep.mubr.bf16.mxu0 %v4898
    %5571 = vmatmul.mubr.bf16.gmra.mrb[0].mxu0 %v4897
    %v5572 = vpop.f32.mrb[0].mxu0
    %v5573 = vadd.f32 %v5533, %v5572
    %v5574 = vpop.f32.mrb[0].mxu0
    %v5575 = vpop.f32.mrb[0].mxu0
    %v5576 = vpop.f32.mrb[0].mxu0
    %5577 = vdwg.mxu0
    %v5578 = vlaneseq
    %v5579 = vand.u32 %v5578, 127
    %vm5580 = vcmp.lt.s32.totalorder %v5579, 2
    %v5581 = vsel %vm5580, %v5573, -1e+30
    %5582 = vmax.xlane.f32.xlu0 %v5581
    %v5583 = vpop.xlane.xlu0 %5582
    %v5584 = vsub.f32 %v5581, %v5583
    %v5585 = vmul.f32 %v5584, 1.442695
    %v5586 = vpow.pop %v5585
    %5587 = vadd.xlane.f32.xlu0 %v5586
    %v5588 = vpop.xlane.xlu0 %5587
    %v5589 = vlog2.pop %v5588
    %v5590 = vmul.f32 %v5589, 0.6931472
    %v5591 = vadd.f32 %v5583, %v5590
    %v5592 = vsub.f32 %v5573, %v5591
    %5593 = vst [vmem:[#allocation14] sm:$0xff] %v5592
    // Predicated region
    $region58: #{tpu_custom_call.1} parent=1 // pred_check
      _
    $region59: #{tpu_custom_call.1} parent=1 // pred_check_branch
      %5595 = sbr.rel (0) target = $region61
    $region60: #{tpu_custom_call.1} parent=1 // pred_region
      %s5597 = ssub.s32 128, 128
      %5598 = vsyncadd [#allocation4], %s5597
      %s5600 = sshll.u32 [#allocation14], 4
      %s5601 = int_to_ptr.vmem [resolvable:$true] %s5600
      %5603 = dma.vmem_to_hbm [thread:$0]  %s5601, 128, %s7, [#allocation4]
    $region61: #{tpu_custom_call.1} parent=1 // pred_fallthru
      _
    // Predicated region
    $region62: #{tpu_custom_call.1} parent=1 // pred_check
      _
    $region63: #{tpu_custom_call.1} parent=1 // pred_check_branch
      %5605 = sbr.rel (0) target = $region65
    $region64: #{tpu_custom_call.1} parent=1 // pred_region
      %5606 = dma.done [#allocation4], 128
    $region65: #{tpu_custom_call.1} parent=1 // pred_fallthru
      _
    %5607 = vsyncpa [#allocation3], 1
    %5608 = vsyncpa [#allocation6], 1
    %5609 = vsyncpa [#allocation9], 1
    %5610 = vsyncpa [#allocation12], 1
    %5611 = vsyncpa [#allocation4], 1

</llo_original>
